<compile_context>
chip_gen: v6e
topology: v6e:2x2x1
jax: 0.10.0
libtpu: 0.0.40
codegen_flags: <defaults>
</compile_context>

<pallas_src>
import functools

import jax
import jax.numpy as jnp
from jax import lax
from jax.experimental import pallas as pl
from jax.experimental.pallas import tpu as pltpu


def lstm_predictor_kernel(x_ref,                 # (T*B, Din)      time-major, flattened
                          wih1_ref, whh1_ref,    # (Din, 4H), (H, 4H)
                          b1_ref,                # (1, 4H)
                          wih2_ref, whh2_ref,    # (H, 4H), (H, 4H)
                          b2_ref,                # (1, 4H)
                          wh_ref, bh_ref,        # (H, 128), (1, 128)  lane-padded heads
                          out_ref,               # (T*B, 128)
                          hs_ref,                # scratch: (T*B, H)
                          *, T, B):
    H = whh1_ref.shape[0]

    # ---- Hoisted, off-critical-path work -------------------------------------
    # Layer-1 input projection for ALL timesteps in one MXU matmul, bias folded.
    gates_x = (jnp.dot(x_ref[...], wih1_ref[...],
                       preferred_element_type=jnp.float32)
               + b1_ref[...])                                        # (T*B, 4H)

    # Hoist weight loads and the layer-2 bias broadcast (JAX does not CSE
    # broadcast_in_dim inside the unrolled loop).
    whh1 = whh1_ref[...]
    wih2 = wih2_ref[...]
    whh2 = whh2_ref[...]
    b2 = jnp.broadcast_to(b2_ref[...], (B, 4 * H))

    def activate(gates, c):
        # Activations over the whole (B, 4H) vreg (4H == 128 lanes) -> 2 EUP passes.
        sg = jax.nn.sigmoid(gates)
        tg = jnp.tanh(gates)
        i = sg[:, 0 * H:1 * H]          # PyTorch gate order: i, f, g, o
        f = sg[:, 1 * H:2 * H]
        o = sg[:, 3 * H:4 * H]
        g = tg[:, 2 * H:3 * H]
        c_new = f * c + i * g
        h_new = o * jnp.tanh(c_new)
        return h_new, c_new

    zeros = jnp.zeros((B, H), jnp.float32)
    h1, c1, h2, c2 = zeros, zeros, zeros, zeros

    # ---- Serial recurrence (T static & small -> fully unrolled) --------------
    for t in range(T):
        # Layer 1: only the recurrent matmul sits on the dependency chain;
        # the precomputed x-contribution is a static (off-chain) row slice.
        g1 = gates_x[t * B:(t + 1) * B, :] + jnp.dot(
            h1, whh1, preferred_element_type=jnp.float32)
        h1, c1 = activate(g1, c1)

        # Layer 2: two independent dots (no lane concat) + hoisted bias.
        g2 = (jnp.dot(h1, wih2, preferred_element_type=jnp.float32)
              + jnp.dot(h2, whh2, preferred_element_type=jnp.float32)
              + b2)
        h2, c2 = activate(g2, c2)

        # Park h2 in VMEM scratch instead of keeping T values live in vregs.
        hs_ref[t * B:(t + 1) * B, :] = h2

    # ---- Batched output heads: one MXU matmul, one lane-dense store ----------
    out_ref[...] = (jnp.dot(hs_ref[...], wh_ref[...],
                            preferred_element_type=jnp.float32)
                    + bh_ref[...])


OUT_LANES = 128  # lane-dense output width (E + 1 real columns, rest zero-padded)


def event_time_predictor(x, params):
    """x: (B, T, Din) float32. Returns (event_out (B,T,E), time_out (B,T,1))."""
    wih1, whh1, b1, wih2, whh2, b2, w_head, b_head = params
    B, T, Din = x.shape
    H = whh1.shape[0]
    E = Din - 1

    # Time-major, flattened to one contiguous (T*B, Din) slab.
    x_flat = jnp.transpose(x, (1, 0, 2)).reshape(T * B, Din)

    kernel = functools.partial(lstm_predictor_kernel, T=T, B=B)

    grid_spec = pltpu.PrefetchScalarGridSpec(
        num_scalar_prefetch=0,
        grid=(1,),
        in_specs=[
            pl.BlockSpec((T * B, Din), lambda i: (0, 0)),
            pl.BlockSpec((Din, 4 * H), lambda i: (0, 0)),
            pl.BlockSpec((H, 4 * H), lambda i: (0, 0)),
            pl.BlockSpec((1, 4 * H), lambda i: (0, 0)),
            pl.BlockSpec((H, 4 * H), lambda i: (0, 0)),
            pl.BlockSpec((H, 4 * H), lambda i: (0, 0)),
            pl.BlockSpec((1, 4 * H), lambda i: (0, 0)),
            pl.BlockSpec((H, OUT_LANES), lambda i: (0, 0)),
            pl.BlockSpec((1, OUT_LANES), lambda i: (0, 0)),
        ],
        out_specs=pl.BlockSpec((T * B, OUT_LANES), lambda i: (0, 0)),
        scratch_shapes=[pltpu.VMEM((T * B, H), jnp.float32)],
    )

    out = pl.pallas_call(
        kernel,
        out_shape=jax.ShapeDtypeStruct((T * B, OUT_LANES), jnp.float32),
        grid_spec=grid_spec,
        compiler_params=pltpu.CompilerParams(
            dimension_semantics=("arbitrary",)),
    )(x_flat, wih1, whh1, b1, wih2, whh2, b2, w_head, b_head)

    out = out.reshape(T, B, OUT_LANES)
    event_out = jnp.transpose(out[..., :E], (1, 0, 2))        # (B, T, E)
    time_out = jnp.transpose(out[..., E:E + 1], (1, 0, 2))    # (B, T, 1)
    return event_out, time_out


def prepare_params(raw):
    """Convert PyTorch-layout weights into the kernel layout."""
    wih1 = raw["w_ih1"].T                                       # (Din, 4H)
    whh1 = raw["w_hh1"].T                                       # (H, 4H)
    b1 = (raw["b_ih1"] + raw["b_hh1"])[None, :]                 # (1, 4H)
    wih2 = raw["w_ih2"].T                                       # (H, 4H)
    whh2 = raw["w_hh2"].T                                       # (H, 4H)
    b2 = (raw["b_ih2"] + raw["b_hh2"])[None, :]                 # (1, 4H)

    # Fused event/time head, zero-padded to 128 lanes for an unmasked store.
    E = raw["w_e"].shape[0]
    w_head = jnp.concatenate([raw["w_e"].T, raw["w_t"].T], axis=1)   # (H, E+1)
    b_head = jnp.concatenate([raw["b_e"], raw["b_t"]])[None, :]      # (1, E+1)
    pad = OUT_LANES - (E + 1)
    w_head = jnp.pad(w_head, ((0, 0), (0, pad)))                     # (H, 128)
    b_head = jnp.pad(b_head, ((0, 0), (0, pad)))                     # (1, 128)
    return (wih1, whh1, b1, wih2, whh2, b2, w_head, b_head)


def ref_forward(x, raw):
    """Pure-JAX reference with PyTorch nn.LSTM semantics (correctness check)."""
    H = raw["w_hh1"].shape[1]
    hp = lax.Precision.HIGHEST

    def cell(h, c, inp, w_ih, w_hh, b_ih, b_hh):
        gates = (jnp.dot(inp, w_ih.T, precision=hp)
                 + jnp.dot(h, w_hh.T, precision=hp) + b_ih + b_hh)
        i = jax.nn.sigmoid(gates[:, 0 * H:1 * H])
        f = jax.nn.sigmoid(gates[:, 1 * H:2 * H])
        g = jnp.tanh(gates[:, 2 * H:3 * H])
        o = jax.nn.sigmoid(gates[:, 3 * H:4 * H])
        c = f * c + i * g
        h = o * jnp.tanh(c)
        return h, c

    def step(carry, xt):
        h1, c1, h2, c2 = carry
        h1, c1 = cell(h1, c1, xt, raw["w_ih1"], raw["w_hh1"], raw["b_ih1"], raw["b_hh1"])
        h2, c2 = cell(h2, c2, h1, raw["w_ih2"], raw["w_hh2"], raw["b_ih2"], raw["b_hh2"])
        return (h1, c1, h2, c2), h2

    B = x.shape[0]
    z = jnp.zeros((B, H), jnp.float32)
    _, hs = lax.scan(step, (z, z, z, z), jnp.transpose(x, (1, 0, 2)))
    out = jnp.transpose(hs, (1, 0, 2))                          # (B, T, H)
    event_out = jnp.dot(out, raw["w_e"].T, precision=hp) + raw["b_e"]
    time_out = jnp.dot(out, raw["w_t"].T, precision=hp) + raw["b_t"]
    return event_out, time_out


if __name__ == "__main__":
    # Small shapes consistent with the module: event_dim=8 -> input = event_dim+1 = 9
    B, T, E, H = 2, 8, 8, 32
    Din = E + 1

    key = jax.random.PRNGKey(0)
    ks = jax.random.split(key, 13)
    bound = float(H) ** -0.5

    def U(k, shape):
        return jax.random.uniform(k, shape, jnp.float32, -bound, bound)

    # PyTorch-layout parameters (weight_ih_l{l}: (4H, in); weight_hh_l{l}: (4H, H)).
    raw = dict(
        w_ih1=U(ks[0], (4 * H, Din)), w_hh1=U(ks[1], (4 * H, H)),
        b_ih1=U(ks[2], (4 * H,)), b_hh1=U(ks[3], (4 * H,)),
        w_ih2=U(ks[4], (4 * H, H)), w_hh2=U(ks[5], (4 * H, H)),
        b_ih2=U(ks[6], (4 * H,)), b_hh2=U(ks[7], (4 * H,)),
        w_e=U(ks[8], (E, H)), b_e=U(ks[9], (E,)),
        w_t=U(ks[10], (1, H)), b_t=U(ks[11], (1,)),
    )
    x = jax.random.normal(ks[12], (B, T, Din), jnp.float32)

    params = prepare_params(raw)
    ev, tm = event_time_predictor(x, params)
    jax.block_until_ready((ev, tm))

    ev_ref, tm_ref = ref_forward(x, raw)
    assert ev.shape == (B, T, E) and tm.shape == (B, T, 1)
    assert jnp.allclose(ev, ev_ref, rtol=1e-4, atol=1e-4)
    assert jnp.allclose(tm, tm_ref, rtol=1e-4, atol=1e-4)

    print("KERNEL_OK")
</pallas_src>

<mosaic_0001>
module attributes {stable_mosaic.version = 11 : i64} {
  func.func @lstm_predictor_kernel(%arg0: i32, %arg1: memref<16x9xf32, #tpu.memory_space<vmem>>, %arg2: memref<9x128xf32, #tpu.memory_space<vmem>>, %arg3: memref<32x128xf32, #tpu.memory_space<vmem>>, %arg4: memref<1x128xf32, #tpu.memory_space<vmem>>, %arg5: memref<32x128xf32, #tpu.memory_space<vmem>>, %arg6: memref<32x128xf32, #tpu.memory_space<vmem>>, %arg7: memref<1x128xf32, #tpu.memory_space<vmem>>, %arg8: memref<32x128xf32, #tpu.memory_space<vmem>>, %arg9: memref<1x128xf32, #tpu.memory_space<vmem>>, %arg10: memref<16x128xf32, #tpu.memory_space<vmem>>, %arg11: memref<16x32xf32, #tpu.memory_space<vmem>>) attributes {dimension_semantics = [#tpu.dimension_semantics<arbitrary>], iteration_bounds = array<i64: 1>, scalar_prefetch = 0 : i64, scratch_operands = 1 : i64, tpu.core_type = #tpu.core_type<tc>, window_params = [{pipeline_mode = #tpu.pipeline_mode<synchronous>, transform_indices = @transform_0, window_bounds = array<i64: 16, 9>}, {pipeline_mode = #tpu.pipeline_mode<synchronous>, transform_indices = @transform_1, window_bounds = array<i64: 9, 128>}, {pipeline_mode = #tpu.pipeline_mode<synchronous>, transform_indices = @transform_2, window_bounds = array<i64: 32, 128>}, {pipeline_mode = #tpu.pipeline_mode<synchronous>, transform_indices = @transform_3, window_bounds = array<i64: 1, 128>}, {pipeline_mode = #tpu.pipeline_mode<synchronous>, transform_indices = @transform_4, window_bounds = array<i64: 32, 128>}, {pipeline_mode = #tpu.pipeline_mode<synchronous>, transform_indices = @transform_5, window_bounds = array<i64: 32, 128>}, {pipeline_mode = #tpu.pipeline_mode<synchronous>, transform_indices = @transform_6, window_bounds = array<i64: 1, 128>}, {pipeline_mode = #tpu.pipeline_mode<synchronous>, transform_indices = @transform_7, window_bounds = array<i64: 32, 128>}, {pipeline_mode = #tpu.pipeline_mode<synchronous>, transform_indices = @transform_8, window_bounds = array<i64: 1, 128>}, {pipeline_mode = #tpu.pipeline_mode<synchronous>, transform_indices = @transform_9, window_bounds = array<i64: 16, 128>}]} {
    %c0 = arith.constant 0 : index
    %c0_0 = arith.constant 0 : index
    %0 = vector.load %arg1[%c0, %c0_0] : memref<16x9xf32, #tpu.memory_space<vmem>>, vector<16x9xf32>
    %c0_1 = arith.constant 0 : index
    %c0_2 = arith.constant 0 : index
    %1 = vector.load %arg2[%c0_1, %c0_2] : memref<9x128xf32, #tpu.memory_space<vmem>>, vector<9x128xf32>
    %cst = arith.constant dense<0.000000e+00> : vector<16x128xf32>
    %2 = tpu.matmul %0, %1, %cst {dimension_numbers = #tpu.dot_dimension_numbers<[1], [0], [0], [1], [0, 0, 1, 1], [], []>} : vector<16x9xf32>, vector<9x128xf32>, vector<16x128xf32> -> vector<16x128xf32>
    %c0_3 = arith.constant 0 : index
    %c0_4 = arith.constant 0 : index
    %3 = vector.load %arg4[%c0_3, %c0_4] : memref<1x128xf32, #tpu.memory_space<vmem>>, vector<1x128xf32>
    %4 = vector.broadcast %3 : vector<1x128xf32> to vector<16x128xf32>
    %5 = arith.addf %2, %4 : vector<16x128xf32>
    %c0_5 = arith.constant 0 : index
    %c0_6 = arith.constant 0 : index
    %6 = vector.load %arg3[%c0_5, %c0_6] : memref<32x128xf32, #tpu.memory_space<vmem>>, vector<32x128xf32>
    %c0_7 = arith.constant 0 : index
    %c0_8 = arith.constant 0 : index
    %7 = vector.load %arg5[%c0_7, %c0_8] : memref<32x128xf32, #tpu.memory_space<vmem>>, vector<32x128xf32>
    %c0_9 = arith.constant 0 : index
    %c0_10 = arith.constant 0 : index
    %8 = vector.load %arg6[%c0_9, %c0_10] : memref<32x128xf32, #tpu.memory_space<vmem>>, vector<32x128xf32>
    %c0_11 = arith.constant 0 : index
    %c0_12 = arith.constant 0 : index
    %9 = vector.load %arg7[%c0_11, %c0_12] : memref<1x128xf32, #tpu.memory_space<vmem>>, vector<1x128xf32>
    %10 = vector.shape_cast %9 : vector<1x128xf32> to vector<1x128xf32>
    %11 = vector.broadcast %10 : vector<1x128xf32> to vector<2x128xf32>
    %cst_13 = arith.constant 0.000000e+00 : f32
    %12 = vector.broadcast %cst_13 : f32 to vector<2x32xf32>
    %13 = vector.extract_strided_slice %5 {offsets = [0, 0], sizes = [2, 128], strides = [1, 1]} : vector<16x128xf32> to vector<2x128xf32>
    %cst_14 = arith.constant dense<0.000000e+00> : vector<2x128xf32>
    %14 = tpu.matmul %12, %6, %cst_14 {dimension_numbers = #tpu.dot_dimension_numbers<[1], [0], [0], [1], [0, 0, 1, 1], [], []>} : vector<2x32xf32>, vector<32x128xf32>, vector<2x128xf32> -> vector<2x128xf32>
    %15 = arith.addf %13, %14 : vector<2x128xf32>
    %16 = arith.negf %15 : vector<2x128xf32>
    %17 = math.exp %16 : vector<2x128xf32>
    %cst_15 = arith.constant 1.000000e+00 : f32
    %18 = vector.broadcast %cst_15 : f32 to vector<2x128xf32>
    %19 = arith.addf %18, %17 : vector<2x128xf32>
    %20 = arith.divf %18, %19 : vector<2x128xf32>
    %21 = math.tanh %15 : vector<2x128xf32>
    %22 = vector.extract_strided_slice %20 {offsets = [0, 0], sizes = [2, 32], strides = [1, 1]} : vector<2x128xf32> to vector<2x32xf32>
    %23 = vector.extract_strided_slice %20 {offsets = [0, 32], sizes = [2, 32], strides = [1, 1]} : vector<2x128xf32> to vector<2x32xf32>
    %24 = vector.extract_strided_slice %20 {offsets = [0, 96], sizes = [2, 32], strides = [1, 1]} : vector<2x128xf32> to vector<2x32xf32>
    %25 = vector.extract_strided_slice %21 {offsets = [0, 64], sizes = [2, 32], strides = [1, 1]} : vector<2x128xf32> to vector<2x32xf32>
    %26 = arith.mulf %23, %12 : vector<2x32xf32>
    %27 = arith.mulf %22, %25 : vector<2x32xf32>
    %28 = arith.addf %26, %27 : vector<2x32xf32>
    %29 = math.tanh %28 : vector<2x32xf32>
    %30 = arith.mulf %24, %29 : vector<2x32xf32>
    %cst_16 = arith.constant dense<0.000000e+00> : vector<2x128xf32>
    %31 = tpu.matmul %30, %7, %cst_16 {dimension_numbers = #tpu.dot_dimension_numbers<[1], [0], [0], [1], [0, 0, 1, 1], [], []>} : vector<2x32xf32>, vector<32x128xf32>, vector<2x128xf32> -> vector<2x128xf32>
    %cst_17 = arith.constant dense<0.000000e+00> : vector<2x128xf32>
    %32 = tpu.matmul %12, %8, %cst_17 {dimension_numbers = #tpu.dot_dimension_numbers<[1], [0], [0], [1], [0, 0, 1, 1], [], []>} : vector<2x32xf32>, vector<32x128xf32>, vector<2x128xf32> -> vector<2x128xf32>
    %33 = arith.addf %31, %32 : vector<2x128xf32>
    %34 = arith.addf %33, %11 : vector<2x128xf32>
    %35 = arith.negf %34 : vector<2x128xf32>
    %36 = math.exp %35 : vector<2x128xf32>
    %cst_18 = arith.constant 1.000000e+00 : f32
    %37 = vector.broadcast %cst_18 : f32 to vector<2x128xf32>
    %38 = arith.addf %37, %36 : vector<2x128xf32>
    %39 = arith.divf %37, %38 : vector<2x128xf32>
    %40 = math.tanh %34 : vector<2x128xf32>
    %41 = vector.extract_strided_slice %39 {offsets = [0, 0], sizes = [2, 32], strides = [1, 1]} : vector<2x128xf32> to vector<2x32xf32>
    %42 = vector.extract_strided_slice %39 {offsets = [0, 32], sizes = [2, 32], strides = [1, 1]} : vector<2x128xf32> to vector<2x32xf32>
    %43 = vector.extract_strided_slice %39 {offsets = [0, 96], sizes = [2, 32], strides = [1, 1]} : vector<2x128xf32> to vector<2x32xf32>
    %44 = vector.extract_strided_slice %40 {offsets = [0, 64], sizes = [2, 32], strides = [1, 1]} : vector<2x128xf32> to vector<2x32xf32>
    %45 = arith.mulf %42, %12 : vector<2x32xf32>
    %46 = arith.mulf %41, %44 : vector<2x32xf32>
    %47 = arith.addf %45, %46 : vector<2x32xf32>
    %48 = math.tanh %47 : vector<2x32xf32>
    %49 = arith.mulf %43, %48 : vector<2x32xf32>
    %c0_19 = arith.constant 0 : index
    %c0_20 = arith.constant 0 : index
    %50 = vector.load %arg11[%c0_19, %c0_20] : memref<16x32xf32, #tpu.memory_space<vmem>>, vector<2x32xf32>
    tpu.vector_store %arg11[%c0_19, %c0_20], %49 {strides = array<i32>} : memref<16x32xf32, #tpu.memory_space<vmem>>, vector<2x32xf32>,
    %51 = vector.extract_strided_slice %5 {offsets = [2, 0], sizes = [2, 128], strides = [1, 1]} : vector<16x128xf32> to vector<2x128xf32>
    %cst_21 = arith.constant dense<0.000000e+00> : vector<2x128xf32>
    %52 = tpu.matmul %30, %6, %cst_21 {dimension_numbers = #tpu.dot_dimension_numbers<[1], [0], [0], [1], [0, 0, 1, 1], [], []>} : vector<2x32xf32>, vector<32x128xf32>, vector<2x128xf32> -> vector<2x128xf32>
    %53 = arith.addf %51, %52 : vector<2x128xf32>
    %54 = arith.negf %53 : vector<2x128xf32>
    %55 = math.exp %54 : vector<2x128xf32>
    %cst_22 = arith.constant 1.000000e+00 : f32
    %56 = vector.broadcast %cst_22 : f32 to vector<2x128xf32>
    %57 = arith.addf %56, %55 : vector<2x128xf32>
    %58 = arith.divf %56, %57 : vector<2x128xf32>
    %59 = math.tanh %53 : vector<2x128xf32>
    %60 = vector.extract_strided_slice %58 {offsets = [0, 0], sizes = [2, 32], strides = [1, 1]} : vector<2x128xf32> to vector<2x32xf32>
    %61 = vector.extract_strided_slice %58 {offsets = [0, 32], sizes = [2, 32], strides = [1, 1]} : vector<2x128xf32> to vector<2x32xf32>
    %62 = vector.extract_strided_slice %58 {offsets = [0, 96], sizes = [2, 32], strides = [1, 1]} : vector<2x128xf32> to vector<2x32xf32>
    %63 = vector.extract_strided_slice %59 {offsets = [0, 64], sizes = [2, 32], strides = [1, 1]} : vector<2x128xf32> to vector<2x32xf32>
    %64 = arith.mulf %61, %28 : vector<2x32xf32>
    %65 = arith.mulf %60, %63 : vector<2x32xf32>
    %66 = arith.addf %64, %65 : vector<2x32xf32>
    %67 = math.tanh %66 : vector<2x32xf32>
    %68 = arith.mulf %62, %67 : vector<2x32xf32>
    %cst_23 = arith.constant dense<0.000000e+00> : vector<2x128xf32>
    %69 = tpu.matmul %68, %7, %cst_23 {dimension_numbers = #tpu.dot_dimension_numbers<[1], [0], [0], [1], [0, 0, 1, 1], [], []>} : vector<2x32xf32>, vector<32x128xf32>, vector<2x128xf32> -> vector<2x128xf32>
    %cst_24 = arith.constant dense<0.000000e+00> : vector<2x128xf32>
    %70 = tpu.matmul %49, %8, %cst_24 {dimension_numbers = #tpu.dot_dimension_numbers<[1], [0], [0], [1], [0, 0, 1, 1], [], []>} : vector<2x32xf32>, vector<32x128xf32>, vector<2x128xf32> -> vector<2x128xf32>
    %71 = arith.addf %69, %70 : vector<2x128xf32>
    %72 = arith.addf %71, %11 : vector<2x128xf32>
    %73 = arith.negf %72 : vector<2x128xf32>
    %74 = math.exp %73 : vector<2x128xf32>
    %cst_25 = arith.constant 1.000000e+00 : f32
    %75 = vector.broadcast %cst_25 : f32 to vector<2x128xf32>
    %76 = arith.addf %75, %74 : vector<2x128xf32>
    %77 = arith.divf %75, %76 : vector<2x128xf32>
    %78 = math.tanh %72 : vector<2x128xf32>
    %79 = vector.extract_strided_slice %77 {offsets = [0, 0], sizes = [2, 32], strides = [1, 1]} : vector<2x128xf32> to vector<2x32xf32>
    %80 = vector.extract_strided_slice %77 {offsets = [0, 32], sizes = [2, 32], strides = [1, 1]} : vector<2x128xf32> to vector<2x32xf32>
    %81 = vector.extract_strided_slice %77 {offsets = [0, 96], sizes = [2, 32], strides = [1, 1]} : vector<2x128xf32> to vector<2x32xf32>
    %82 = vector.extract_strided_slice %78 {offsets = [0, 64], sizes = [2, 32], strides = [1, 1]} : vector<2x128xf32> to vector<2x32xf32>
    %83 = arith.mulf %80, %47 : vector<2x32xf32>
    %84 = arith.mulf %79, %82 : vector<2x32xf32>
    %85 = arith.addf %83, %84 : vector<2x32xf32>
    %86 = math.tanh %85 : vector<2x32xf32>
    %87 = arith.mulf %81, %86 : vector<2x32xf32>
    %c2 = arith.constant 2 : index
    %c0_26 = arith.constant 0 : index
    %88 = vector.load %arg11[%c2, %c0_26] : memref<16x32xf32, #tpu.memory_space<vmem>>, vector<2x32xf32>
    tpu.vector_store %arg11[%c2, %c0_26], %87 {strides = array<i32>} : memref<16x32xf32, #tpu.memory_space<vmem>>, vector<2x32xf32>,
    %89 = vector.extract_strided_slice %5 {offsets = [4, 0], sizes = [2, 128], strides = [1, 1]} : vector<16x128xf32> to vector<2x128xf32>
    %cst_27 = arith.constant dense<0.000000e+00> : vector<2x128xf32>
    %90 = tpu.matmul %68, %6, %cst_27 {dimension_numbers = #tpu.dot_dimension_numbers<[1], [0], [0], [1], [0, 0, 1, 1], [], []>} : vector<2x32xf32>, vector<32x128xf32>, vector<2x128xf32> -> vector<2x128xf32>
    %91 = arith.addf %89, %90 : vector<2x128xf32>
    %92 = arith.negf %91 : vector<2x128xf32>
    %93 = math.exp %92 : vector<2x128xf32>
    %cst_28 = arith.constant 1.000000e+00 : f32
    %94 = vector.broadcast %cst_28 : f32 to vector<2x128xf32>
    %95 = arith.addf %94, %93 : vector<2x128xf32>
    %96 = arith.divf %94, %95 : vector<2x128xf32>
    %97 = math.tanh %91 : vector<2x128xf32>
    %98 = vector.extract_strided_slice %96 {offsets = [0, 0], sizes = [2, 32], strides = [1, 1]} : vector<2x128xf32> to vector<2x32xf32>
    %99 = vector.extract_strided_slice %96 {offsets = [0, 32], sizes = [2, 32], strides = [1, 1]} : vector<2x128xf32> to vector<2x32xf32>
    %100 = vector.extract_strided_slice %96 {offsets = [0, 96], sizes = [2, 32], strides = [1, 1]} : vector<2x128xf32> to vector<2x32xf32>
    %101 = vector.extract_strided_slice %97 {offsets = [0, 64], sizes = [2, 32], strides = [1, 1]} : vector<2x128xf32> to vector<2x32xf32>
    %102 = arith.mulf %99, %66 : vector<2x32xf32>
    %103 = arith.mulf %98, %101 : vector<2x32xf32>
    %104 = arith.addf %102, %103 : vector<2x32xf32>
    %105 = math.tanh %104 : vector<2x32xf32>
    %106 = arith.mulf %100, %105 : vector<2x32xf32>
    %cst_29 = arith.constant dense<0.000000e+00> : vector<2x128xf32>
    %107 = tpu.matmul %106, %7, %cst_29 {dimension_numbers = #tpu.dot_dimension_numbers<[1], [0], [0], [1], [0, 0, 1, 1], [], []>} : vector<2x32xf32>, vector<32x128xf32>, vector<2x128xf32> -> vector<2x128xf32>
    %cst_30 = arith.constant dense<0.000000e+00> : vector<2x128xf32>
    %108 = tpu.matmul %87, %8, %cst_30 {dimension_numbers = #tpu.dot_dimension_numbers<[1], [0], [0], [1], [0, 0, 1, 1], [], []>} : vector<2x32xf32>, vector<32x128xf32>, vector<2x128xf32> -> vector<2x128xf32>
    %109 = arith.addf %107, %108 : vector<2x128xf32>
    %110 = arith.addf %109, %11 : vector<2x128xf32>
    %111 = arith.negf %110 : vector<2x128xf32>
    %112 = math.exp %111 : vector<2x128xf32>
    %cst_31 = arith.constant 1.000000e+00 : f32
    %113 = vector.broadcast %cst_31 : f32 to vector<2x128xf32>
    %114 = arith.addf %113, %112 : vector<2x128xf32>
    %115 = arith.divf %113, %114 : vector<2x128xf32>
    %116 = math.tanh %110 : vector<2x128xf32>
    %117 = vector.extract_strided_slice %115 {offsets = [0, 0], sizes = [2, 32], strides = [1, 1]} : vector<2x128xf32> to vector<2x32xf32>
    %118 = vector.extract_strided_slice %115 {offsets = [0, 32], sizes = [2, 32], strides = [1, 1]} : vector<2x128xf32> to vector<2x32xf32>
    %119 = vector.extract_strided_slice %115 {offsets = [0, 96], sizes = [2, 32], strides = [1, 1]} : vector<2x128xf32> to vector<2x32xf32>
    %120 = vector.extract_strided_slice %116 {offsets = [0, 64], sizes = [2, 32], strides = [1, 1]} : vector<2x128xf32> to vector<2x32xf32>
    %121 = arith.mulf %118, %85 : vector<2x32xf32>
    %122 = arith.mulf %117, %120 : vector<2x32xf32>
    %123 = arith.addf %121, %122 : vector<2x32xf32>
    %124 = math.tanh %123 : vector<2x32xf32>
    %125 = arith.mulf %119, %124 : vector<2x32xf32>
    %c4 = arith.constant 4 : index
    %c0_32 = arith.constant 0 : index
    %126 = vector.load %arg11[%c4, %c0_32] : memref<16x32xf32, #tpu.memory_space<vmem>>, vector<2x32xf32>
    tpu.vector_store %arg11[%c4, %c0_32], %125 {strides = array<i32>} : memref<16x32xf32, #tpu.memory_space<vmem>>, vector<2x32xf32>,
    %127 = vector.extract_strided_slice %5 {offsets = [6, 0], sizes = [2, 128], strides = [1, 1]} : vector<16x128xf32> to vector<2x128xf32>
    %cst_33 = arith.constant dense<0.000000e+00> : vector<2x128xf32>
    %128 = tpu.matmul %106, %6, %cst_33 {dimension_numbers = #tpu.dot_dimension_numbers<[1], [0], [0], [1], [0, 0, 1, 1], [], []>} : vector<2x32xf32>, vector<32x128xf32>, vector<2x128xf32> -> vector<2x128xf32>
    %129 = arith.addf %127, %128 : vector<2x128xf32>
    %130 = arith.negf %129 : vector<2x128xf32>
    %131 = math.exp %130 : vector<2x128xf32>
    %cst_34 = arith.constant 1.000000e+00 : f32
    %132 = vector.broadcast %cst_34 : f32 to vector<2x128xf32>
    %133 = arith.addf %132, %131 : vector<2x128xf32>
    %134 = arith.divf %132, %133 : vector<2x128xf32>
    %135 = math.tanh %129 : vector<2x128xf32>
    %136 = vector.extract_strided_slice %134 {offsets = [0, 0], sizes = [2, 32], strides = [1, 1]} : vector<2x128xf32> to vector<2x32xf32>
    %137 = vector.extract_strided_slice %134 {offsets = [0, 32], sizes = [2, 32], strides = [1, 1]} : vector<2x128xf32> to vector<2x32xf32>
    %138 = vector.extract_strided_slice %134 {offsets = [0, 96], sizes = [2, 32], strides = [1, 1]} : vector<2x128xf32> to vector<2x32xf32>
    %139 = vector.extract_strided_slice %135 {offsets = [0, 64], sizes = [2, 32], strides = [1, 1]} : vector<2x128xf32> to vector<2x32xf32>
    %140 = arith.mulf %137, %104 : vector<2x32xf32>
    %141 = arith.mulf %136, %139 : vector<2x32xf32>
    %142 = arith.addf %140, %141 : vector<2x32xf32>
    %143 = math.tanh %142 : vector<2x32xf32>
    %144 = arith.mulf %138, %143 : vector<2x32xf32>
    %cst_35 = arith.constant dense<0.000000e+00> : vector<2x128xf32>
    %145 = tpu.matmul %144, %7, %cst_35 {dimension_numbers = #tpu.dot_dimension_numbers<[1], [0], [0], [1], [0, 0, 1, 1], [], []>} : vector<2x32xf32>, vector<32x128xf32>, vector<2x128xf32> -> vector<2x128xf32>
    %cst_36 = arith.constant dense<0.000000e+00> : vector<2x128xf32>
    %146 = tpu.matmul %125, %8, %cst_36 {dimension_numbers = #tpu.dot_dimension_numbers<[1], [0], [0], [1], [0, 0, 1, 1], [], []>} : vector<2x32xf32>, vector<32x128xf32>, vector<2x128xf32> -> vector<2x128xf32>
    %147 = arith.addf %145, %146 : vector<2x128xf32>
    %148 = arith.addf %147, %11 : vector<2x128xf32>
    %149 = arith.negf %148 : vector<2x128xf32>
    %150 = math.exp %149 : vector<2x128xf32>
    %cst_37 = arith.constant 1.000000e+00 : f32
    %151 = vector.broadcast %cst_37 : f32 to vector<2x128xf32>
    %152 = arith.addf %151, %150 : vector<2x128xf32>
    %153 = arith.divf %151, %152 : vector<2x128xf32>
    %154 = math.tanh %148 : vector<2x128xf32>
    %155 = vector.extract_strided_slice %153 {offsets = [0, 0], sizes = [2, 32], strides = [1, 1]} : vector<2x128xf32> to vector<2x32xf32>
    %156 = vector.extract_strided_slice %153 {offsets = [0, 32], sizes = [2, 32], strides = [1, 1]} : vector<2x128xf32> to vector<2x32xf32>
    %157 = vector.extract_strided_slice %153 {offsets = [0, 96], sizes = [2, 32], strides = [1, 1]} : vector<2x128xf32> to vector<2x32xf32>
    %158 = vector.extract_strided_slice %154 {offsets = [0, 64], sizes = [2, 32], strides = [1, 1]} : vector<2x128xf32> to vector<2x32xf32>
    %159 = arith.mulf %156, %123 : vector<2x32xf32>
    %160 = arith.mulf %155, %158 : vector<2x32xf32>
    %161 = arith.addf %159, %160 : vector<2x32xf32>
    %162 = math.tanh %161 : vector<2x32xf32>
    %163 = arith.mulf %157, %162 : vector<2x32xf32>
    %c6 = arith.constant 6 : index
    %c0_38 = arith.constant 0 : index
    %164 = vector.load %arg11[%c6, %c0_38] : memref<16x32xf32, #tpu.memory_space<vmem>>, vector<2x32xf32>
    tpu.vector_store %arg11[%c6, %c0_38], %163 {strides = array<i32>} : memref<16x32xf32, #tpu.memory_space<vmem>>, vector<2x32xf32>,
    %165 = vector.extract_strided_slice %5 {offsets = [8, 0], sizes = [2, 128], strides = [1, 1]} : vector<16x128xf32> to vector<2x128xf32>
    %cst_39 = arith.constant dense<0.000000e+00> : vector<2x128xf32>
    %166 = tpu.matmul %144, %6, %cst_39 {dimension_numbers = #tpu.dot_dimension_numbers<[1], [0], [0], [1], [0, 0, 1, 1], [], []>} : vector<2x32xf32>, vector<32x128xf32>, vector<2x128xf32> -> vector<2x128xf32>
    %167 = arith.addf %165, %166 : vector<2x128xf32>
    %168 = arith.negf %167 : vector<2x128xf32>
    %169 = math.exp %168 : vector<2x128xf32>
    %cst_40 = arith.constant 1.000000e+00 : f32
    %170 = vector.broadcast %cst_40 : f32 to vector<2x128xf32>
    %171 = arith.addf %170, %169 : vector<2x128xf32>
    %172 = arith.divf %170, %171 : vector<2x128xf32>
    %173 = math.tanh %167 : vector<2x128xf32>
    %174 = vector.extract_strided_slice %172 {offsets = [0, 0], sizes = [2, 32], strides = [1, 1]} : vector<2x128xf32> to vector<2x32xf32>
    %175 = vector.extract_strided_slice %172 {offsets = [0, 32], sizes = [2, 32], strides = [1, 1]} : vector<2x128xf32> to vector<2x32xf32>
    %176 = vector.extract_strided_slice %172 {offsets = [0, 96], sizes = [2, 32], strides = [1, 1]} : vector<2x128xf32> to vector<2x32xf32>
    %177 = vector.extract_strided_slice %173 {offsets = [0, 64], sizes = [2, 32], strides = [1, 1]} : vector<2x128xf32> to vector<2x32xf32>
    %178 = arith.mulf %175, %142 : vector<2x32xf32>
    %179 = arith.mulf %174, %177 : vector<2x32xf32>
    %180 = arith.addf %178, %179 : vector<2x32xf32>
    %181 = math.tanh %180 : vector<2x32xf32>
    %182 = arith.mulf %176, %181 : vector<2x32xf32>
    %cst_41 = arith.constant dense<0.000000e+00> : vector<2x128xf32>
    %183 = tpu.matmul %182, %7, %cst_41 {dimension_numbers = #tpu.dot_dimension_numbers<[1], [0], [0], [1], [0, 0, 1, 1], [], []>} : vector<2x32xf32>, vector<32x128xf32>, vector<2x128xf32> -> vector<2x128xf32>
    %cst_42 = arith.constant dense<0.000000e+00> : vector<2x128xf32>
    %184 = tpu.matmul %163, %8, %cst_42 {dimension_numbers = #tpu.dot_dimension_numbers<[1], [0], [0], [1], [0, 0, 1, 1], [], []>} : vector<2x32xf32>, vector<32x128xf32>, vector<2x128xf32> -> vector<2x128xf32>
    %185 = arith.addf %183, %184 : vector<2x128xf32>
    %186 = arith.addf %185, %11 : vector<2x128xf32>
    %187 = arith.negf %186 : vector<2x128xf32>
    %188 = math.exp %187 : vector<2x128xf32>
    %cst_43 = arith.constant 1.000000e+00 : f32
    %189 = vector.broadcast %cst_43 : f32 to vector<2x128xf32>
    %190 = arith.addf %189, %188 : vector<2x128xf32>
    %191 = arith.divf %189, %190 : vector<2x128xf32>
    %192 = math.tanh %186 : vector<2x128xf32>
    %193 = vector.extract_strided_slice %191 {offsets = [0, 0], sizes = [2, 32], strides = [1, 1]} : vector<2x128xf32> to vector<2x32xf32>
    %194 = vector.extract_strided_slice %191 {offsets = [0, 32], sizes = [2, 32], strides = [1, 1]} : vector<2x128xf32> to vector<2x32xf32>
    %195 = vector.extract_strided_slice %191 {offsets = [0, 96], sizes = [2, 32], strides = [1, 1]} : vector<2x128xf32> to vector<2x32xf32>
    %196 = vector.extract_strided_slice %192 {offsets = [0, 64], sizes = [2, 32], strides = [1, 1]} : vector<2x128xf32> to vector<2x32xf32>
    %197 = arith.mulf %194, %161 : vector<2x32xf32>
    %198 = arith.mulf %193, %196 : vector<2x32xf32>
    %199 = arith.addf %197, %198 : vector<2x32xf32>
    %200 = math.tanh %199 : vector<2x32xf32>
    %201 = arith.mulf %195, %200 : vector<2x32xf32>
    %c8 = arith.constant 8 : index
    %c0_44 = arith.constant 0 : index
    %202 = vector.load %arg11[%c8, %c0_44] : memref<16x32xf32, #tpu.memory_space<vmem>>, vector<2x32xf32>
    tpu.vector_store %arg11[%c8, %c0_44], %201 {strides = array<i32>} : memref<16x32xf32, #tpu.memory_space<vmem>>, vector<2x32xf32>,
    %203 = vector.extract_strided_slice %5 {offsets = [10, 0], sizes = [2, 128], strides = [1, 1]} : vector<16x128xf32> to vector<2x128xf32>
    %cst_45 = arith.constant dense<0.000000e+00> : vector<2x128xf32>
    %204 = tpu.matmul %182, %6, %cst_45 {dimension_numbers = #tpu.dot_dimension_numbers<[1], [0], [0], [1], [0, 0, 1, 1], [], []>} : vector<2x32xf32>, vector<32x128xf32>, vector<2x128xf32> -> vector<2x128xf32>
    %205 = arith.addf %203, %204 : vector<2x128xf32>
    %206 = arith.negf %205 : vector<2x128xf32>
    %207 = math.exp %206 : vector<2x128xf32>
    %cst_46 = arith.constant 1.000000e+00 : f32
    %208 = vector.broadcast %cst_46 : f32 to vector<2x128xf32>
    %209 = arith.addf %208, %207 : vector<2x128xf32>
    %210 = arith.divf %208, %209 : vector<2x128xf32>
    %211 = math.tanh %205 : vector<2x128xf32>
    %212 = vector.extract_strided_slice %210 {offsets = [0, 0], sizes = [2, 32], strides = [1, 1]} : vector<2x128xf32> to vector<2x32xf32>
    %213 = vector.extract_strided_slice %210 {offsets = [0, 32], sizes = [2, 32], strides = [1, 1]} : vector<2x128xf32> to vector<2x32xf32>
    %214 = vector.extract_strided_slice %210 {offsets = [0, 96], sizes = [2, 32], strides = [1, 1]} : vector<2x128xf32> to vector<2x32xf32>
    %215 = vector.extract_strided_slice %211 {offsets = [0, 64], sizes = [2, 32], strides = [1, 1]} : vector<2x128xf32> to vector<2x32xf32>
    %216 = arith.mulf %213, %180 : vector<2x32xf32>
    %217 = arith.mulf %212, %215 : vector<2x32xf32>
    %218 = arith.addf %216, %217 : vector<2x32xf32>
    %219 = math.tanh %218 : vector<2x32xf32>
    %220 = arith.mulf %214, %219 : vector<2x32xf32>
    %cst_47 = arith.constant dense<0.000000e+00> : vector<2x128xf32>
    %221 = tpu.matmul %220, %7, %cst_47 {dimension_numbers = #tpu.dot_dimension_numbers<[1], [0], [0], [1], [0, 0, 1, 1], [], []>} : vector<2x32xf32>, vector<32x128xf32>, vector<2x128xf32> -> vector<2x128xf32>
    %cst_48 = arith.constant dense<0.000000e+00> : vector<2x128xf32>
    %222 = tpu.matmul %201, %8, %cst_48 {dimension_numbers = #tpu.dot_dimension_numbers<[1], [0], [0], [1], [0, 0, 1, 1], [], []>} : vector<2x32xf32>, vector<32x128xf32>, vector<2x128xf32> -> vector<2x128xf32>
    %223 = arith.addf %221, %222 : vector<2x128xf32>
    %224 = arith.addf %223, %11 : vector<2x128xf32>
    %225 = arith.negf %224 : vector<2x128xf32>
    %226 = math.exp %225 : vector<2x128xf32>
    %cst_49 = arith.constant 1.000000e+00 : f32
    %227 = vector.broadcast %cst_49 : f32 to vector<2x128xf32>
    %228 = arith.addf %227, %226 : vector<2x128xf32>
    %229 = arith.divf %227, %228 : vector<2x128xf32>
    %230 = math.tanh %224 : vector<2x128xf32>
    %231 = vector.extract_strided_slice %229 {offsets = [0, 0], sizes = [2, 32], strides = [1, 1]} : vector<2x128xf32> to vector<2x32xf32>
    %232 = vector.extract_strided_slice %229 {offsets = [0, 32], sizes = [2, 32], strides = [1, 1]} : vector<2x128xf32> to vector<2x32xf32>
    %233 = vector.extract_strided_slice %229 {offsets = [0, 96], sizes = [2, 32], strides = [1, 1]} : vector<2x128xf32> to vector<2x32xf32>
    %234 = vector.extract_strided_slice %230 {offsets = [0, 64], sizes = [2, 32], strides = [1, 1]} : vector<2x128xf32> to vector<2x32xf32>
    %235 = arith.mulf %232, %199 : vector<2x32xf32>
    %236 = arith.mulf %231, %234 : vector<2x32xf32>
    %237 = arith.addf %235, %236 : vector<2x32xf32>
    %238 = math.tanh %237 : vector<2x32xf32>
    %239 = arith.mulf %233, %238 : vector<2x32xf32>
    %c10 = arith.constant 10 : index
    %c0_50 = arith.constant 0 : index
    %240 = vector.load %arg11[%c10, %c0_50] : memref<16x32xf32, #tpu.memory_space<vmem>>, vector<2x32xf32>
    tpu.vector_store %arg11[%c10, %c0_50], %239 {strides = array<i32>} : memref<16x32xf32, #tpu.memory_space<vmem>>, vector<2x32xf32>,
    %241 = vector.extract_strided_slice %5 {offsets = [12, 0], sizes = [2, 128], strides = [1, 1]} : vector<16x128xf32> to vector<2x128xf32>
    %cst_51 = arith.constant dense<0.000000e+00> : vector<2x128xf32>
    %242 = tpu.matmul %220, %6, %cst_51 {dimension_numbers = #tpu.dot_dimension_numbers<[1], [0], [0], [1], [0, 0, 1, 1], [], []>} : vector<2x32xf32>, vector<32x128xf32>, vector<2x128xf32> -> vector<2x128xf32>
    %243 = arith.addf %241, %242 : vector<2x128xf32>
    %244 = arith.negf %243 : vector<2x128xf32>
    %245 = math.exp %244 : vector<2x128xf32>
    %cst_52 = arith.constant 1.000000e+00 : f32
    %246 = vector.broadcast %cst_52 : f32 to vector<2x128xf32>
    %247 = arith.addf %246, %245 : vector<2x128xf32>
    %248 = arith.divf %246, %247 : vector<2x128xf32>
    %249 = math.tanh %243 : vector<2x128xf32>
    %250 = vector.extract_strided_slice %248 {offsets = [0, 0], sizes = [2, 32], strides = [1, 1]} : vector<2x128xf32> to vector<2x32xf32>
    %251 = vector.extract_strided_slice %248 {offsets = [0, 32], sizes = [2, 32], strides = [1, 1]} : vector<2x128xf32> to vector<2x32xf32>
    %252 = vector.extract_strided_slice %248 {offsets = [0, 96], sizes = [2, 32], strides = [1, 1]} : vector<2x128xf32> to vector<2x32xf32>
    %253 = vector.extract_strided_slice %249 {offsets = [0, 64], sizes = [2, 32], strides = [1, 1]} : vector<2x128xf32> to vector<2x32xf32>
    %254 = arith.mulf %251, %218 : vector<2x32xf32>
    %255 = arith.mulf %250, %253 : vector<2x32xf32>
    %256 = arith.addf %254, %255 : vector<2x32xf32>
    %257 = math.tanh %256 : vector<2x32xf32>
    %258 = arith.mulf %252, %257 : vector<2x32xf32>
    %cst_53 = arith.constant dense<0.000000e+00> : vector<2x128xf32>
    %259 = tpu.matmul %258, %7, %cst_53 {dimension_numbers = #tpu.dot_dimension_numbers<[1], [0], [0], [1], [0, 0, 1, 1], [], []>} : vector<2x32xf32>, vector<32x128xf32>, vector<2x128xf32> -> vector<2x128xf32>
    %cst_54 = arith.constant dense<0.000000e+00> : vector<2x128xf32>
    %260 = tpu.matmul %239, %8, %cst_54 {dimension_numbers = #tpu.dot_dimension_numbers<[1], [0], [0], [1], [0, 0, 1, 1], [], []>} : vector<2x32xf32>, vector<32x128xf32>, vector<2x128xf32> -> vector<2x128xf32>
    %261 = arith.addf %259, %260 : vector<2x128xf32>
    %262 = arith.addf %261, %11 : vector<2x128xf32>
    %263 = arith.negf %262 : vector<2x128xf32>
    %264 = math.exp %263 : vector<2x128xf32>
    %cst_55 = arith.constant 1.000000e+00 : f32
    %265 = vector.broadcast %cst_55 : f32 to vector<2x128xf32>
    %266 = arith.addf %265, %264 : vector<2x128xf32>
    %267 = arith.divf %265, %266 : vector<2x128xf32>
    %268 = math.tanh %262 : vector<2x128xf32>
    %269 = vector.extract_strided_slice %267 {offsets = [0, 0], sizes = [2, 32], strides = [1, 1]} : vector<2x128xf32> to vector<2x32xf32>
    %270 = vector.extract_strided_slice %267 {offsets = [0, 32], sizes = [2, 32], strides = [1, 1]} : vector<2x128xf32> to vector<2x32xf32>
    %271 = vector.extract_strided_slice %267 {offsets = [0, 96], sizes = [2, 32], strides = [1, 1]} : vector<2x128xf32> to vector<2x32xf32>
    %272 = vector.extract_strided_slice %268 {offsets = [0, 64], sizes = [2, 32], strides = [1, 1]} : vector<2x128xf32> to vector<2x32xf32>
    %273 = arith.mulf %270, %237 : vector<2x32xf32>
    %274 = arith.mulf %269, %272 : vector<2x32xf32>
    %275 = arith.addf %273, %274 : vector<2x32xf32>
    %276 = math.tanh %275 : vector<2x32xf32>
    %277 = arith.mulf %271, %276 : vector<2x32xf32>
    %c12 = arith.constant 12 : index
    %c0_56 = arith.constant 0 : index
    %278 = vector.load %arg11[%c12, %c0_56] : memref<16x32xf32, #tpu.memory_space<vmem>>, vector<2x32xf32>
    tpu.vector_store %arg11[%c12, %c0_56], %277 {strides = array<i32>} : memref<16x32xf32, #tpu.memory_space<vmem>>, vector<2x32xf32>,
    %279 = vector.extract_strided_slice %5 {offsets = [14, 0], sizes = [2, 128], strides = [1, 1]} : vector<16x128xf32> to vector<2x128xf32>
    %cst_57 = arith.constant dense<0.000000e+00> : vector<2x128xf32>
    %280 = tpu.matmul %258, %6, %cst_57 {dimension_numbers = #tpu.dot_dimension_numbers<[1], [0], [0], [1], [0, 0, 1, 1], [], []>} : vector<2x32xf32>, vector<32x128xf32>, vector<2x128xf32> -> vector<2x128xf32>
    %281 = arith.addf %279, %280 : vector<2x128xf32>
    %282 = arith.negf %281 : vector<2x128xf32>
    %283 = math.exp %282 : vector<2x128xf32>
    %cst_58 = arith.constant 1.000000e+00 : f32
    %284 = vector.broadcast %cst_58 : f32 to vector<2x128xf32>
    %285 = arith.addf %284, %283 : vector<2x128xf32>
    %286 = arith.divf %284, %285 : vector<2x128xf32>
    %287 = math.tanh %281 : vector<2x128xf32>
    %288 = vector.extract_strided_slice %286 {offsets = [0, 0], sizes = [2, 32], strides = [1, 1]} : vector<2x128xf32> to vector<2x32xf32>
    %289 = vector.extract_strided_slice %286 {offsets = [0, 32], sizes = [2, 32], strides = [1, 1]} : vector<2x128xf32> to vector<2x32xf32>
    %290 = vector.extract_strided_slice %286 {offsets = [0, 96], sizes = [2, 32], strides = [1, 1]} : vector<2x128xf32> to vector<2x32xf32>
    %291 = vector.extract_strided_slice %287 {offsets = [0, 64], sizes = [2, 32], strides = [1, 1]} : vector<2x128xf32> to vector<2x32xf32>
    %292 = arith.mulf %289, %256 : vector<2x32xf32>
    %293 = arith.mulf %288, %291 : vector<2x32xf32>
    %294 = arith.addf %292, %293 : vector<2x32xf32>
    %295 = math.tanh %294 : vector<2x32xf32>
    %296 = arith.mulf %290, %295 : vector<2x32xf32>
    %cst_59 = arith.constant dense<0.000000e+00> : vector<2x128xf32>
    %297 = tpu.matmul %296, %7, %cst_59 {dimension_numbers = #tpu.dot_dimension_numbers<[1], [0], [0], [1], [0, 0, 1, 1], [], []>} : vector<2x32xf32>, vector<32x128xf32>, vector<2x128xf32> -> vector<2x128xf32>
    %cst_60 = arith.constant dense<0.000000e+00> : vector<2x128xf32>
    %298 = tpu.matmul %277, %8, %cst_60 {dimension_numbers = #tpu.dot_dimension_numbers<[1], [0], [0], [1], [0, 0, 1, 1], [], []>} : vector<2x32xf32>, vector<32x128xf32>, vector<2x128xf32> -> vector<2x128xf32>
    %299 = arith.addf %297, %298 : vector<2x128xf32>
    %300 = arith.addf %299, %11 : vector<2x128xf32>
    %301 = arith.negf %300 : vector<2x128xf32>
    %302 = math.exp %301 : vector<2x128xf32>
    %cst_61 = arith.constant 1.000000e+00 : f32
    %303 = vector.broadcast %cst_61 : f32 to vector<2x128xf32>
    %304 = arith.addf %303, %302 : vector<2x128xf32>
    %305 = arith.divf %303, %304 : vector<2x128xf32>
    %306 = math.tanh %300 : vector<2x128xf32>
    %307 = vector.extract_strided_slice %305 {offsets = [0, 0], sizes = [2, 32], strides = [1, 1]} : vector<2x128xf32> to vector<2x32xf32>
    %308 = vector.extract_strided_slice %305 {offsets = [0, 32], sizes = [2, 32], strides = [1, 1]} : vector<2x128xf32> to vector<2x32xf32>
    %309 = vector.extract_strided_slice %305 {offsets = [0, 96], sizes = [2, 32], strides = [1, 1]} : vector<2x128xf32> to vector<2x32xf32>
    %310 = vector.extract_strided_slice %306 {offsets = [0, 64], sizes = [2, 32], strides = [1, 1]} : vector<2x128xf32> to vector<2x32xf32>
    %311 = arith.mulf %308, %275 : vector<2x32xf32>
    %312 = arith.mulf %307, %310 : vector<2x32xf32>
    %313 = arith.addf %311, %312 : vector<2x32xf32>
    %314 = math.tanh %313 : vector<2x32xf32>
    %315 = arith.mulf %309, %314 : vector<2x32xf32>
    %c14 = arith.constant 14 : index
    %c0_62 = arith.constant 0 : index
    %316 = vector.load %arg11[%c14, %c0_62] : memref<16x32xf32, #tpu.memory_space<vmem>>, vector<2x32xf32>
    tpu.vector_store %arg11[%c14, %c0_62], %315 {strides = array<i32>} : memref<16x32xf32, #tpu.memory_space<vmem>>, vector<2x32xf32>,
    %c0_63 = arith.constant 0 : index
    %c0_64 = arith.constant 0 : index
    %317 = vector.load %arg11[%c0_63, %c0_64] : memref<16x32xf32, #tpu.memory_space<vmem>>, vector<16x32xf32>
    %c0_65 = arith.constant 0 : index
    %c0_66 = arith.constant 0 : index
    %318 = vector.load %arg8[%c0_65, %c0_66] : memref<32x128xf32, #tpu.memory_space<vmem>>, vector<32x128xf32>
    %cst_67 = arith.constant dense<0.000000e+00> : vector<16x128xf32>
    %319 = tpu.matmul %317, %318, %cst_67 {dimension_numbers = #tpu.dot_dimension_numbers<[1], [0], [0], [1], [0, 0, 1, 1], [], []>} : vector<16x32xf32>, vector<32x128xf32>, vector<16x128xf32> -> vector<16x128xf32>
    %c0_68 = arith.constant 0 : index
    %c0_69 = arith.constant 0 : index
    %320 = vector.load %arg9[%c0_68, %c0_69] : memref<1x128xf32, #tpu.memory_space<vmem>>, vector<1x128xf32>
    %321 = vector.broadcast %320 : vector<1x128xf32> to vector<16x128xf32>
    %322 = arith.addf %319, %321 : vector<16x128xf32>
    %c0_70 = arith.constant 0 : index
    %c0_71 = arith.constant 0 : index
    %323 = vector.load %arg10[%c0_70, %c0_71] : memref<16x128xf32, #tpu.memory_space<vmem>>, vector<16x128xf32>
    tpu.vector_store %arg10[%c0_70, %c0_71], %322 {strides = array<i32>} : memref<16x128xf32, #tpu.memory_space<vmem>>, vector<16x128xf32>,
    return
  }
  func.func @transform_0(%arg0: i32) -> (i32, i32) {
    %c0_i32 = arith.constant 0 : i32
    %c0_i32_0 = arith.constant 0 : i32
    %c0_i32_1 = arith.constant 0 : i32
    return %c0_i32, %c0_i32_0 : i32, i32
  }
  func.func @transform_1(%arg0: i32) -> (i32, i32) {
    %c0_i32 = arith.constant 0 : i32
    %c0_i32_0 = arith.constant 0 : i32
    %c0_i32_1 = arith.constant 0 : i32
    return %c0_i32, %c0_i32_0 : i32, i32
  }
  func.func @transform_2(%arg0: i32) -> (i32, i32) {
    %c0_i32 = arith.constant 0 : i32
    %c0_i32_0 = arith.constant 0 : i32
    %c0_i32_1 = arith.constant 0 : i32
    return %c0_i32, %c0_i32_0 : i32, i32
  }
  func.func @transform_3(%arg0: i32) -> (i32, i32) {
    %c0_i32 = arith.constant 0 : i32
    %c0_i32_0 = arith.constant 0 : i32
    %c0_i32_1 = arith.constant 0 : i32
    return %c0_i32, %c0_i32_0 : i32, i32
  }
  func.func @transform_4(%arg0: i32) -> (i32, i32) {
    %c0_i32 = arith.constant 0 : i32
    %c0_i32_0 = arith.constant 0 : i32
    %c0_i32_1 = arith.constant 0 : i32
    return %c0_i32, %c0_i32_0 : i32, i32
  }
  func.func @transform_5(%arg0: i32) -> (i32, i32) {
    %c0_i32 = arith.constant 0 : i32
    %c0_i32_0 = arith.constant 0 : i32
    %c0_i32_1 = arith.constant 0 : i32
    return %c0_i32, %c0_i32_0 : i32, i32
  }
  func.func @transform_6(%arg0: i32) -> (i32, i32) {
    %c0_i32 = arith.constant 0 : i32
    %c0_i32_0 = arith.constant 0 : i32
    %c0_i32_1 = arith.constant 0 : i32
    return %c0_i32, %c0_i32_0 : i32, i32
  }
  func.func @transform_7(%arg0: i32) -> (i32, i32) {
    %c0_i32 = arith.constant 0 : i32
    %c0_i32_0 = arith.constant 0 : i32
    %c0_i32_1 = arith.constant 0 : i32
    return %c0_i32, %c0_i32_0 : i32, i32
  }
  func.func @transform_8(%arg0: i32) -> (i32, i32) {
    %c0_i32 = arith.constant 0 : i32
    %c0_i32_0 = arith.constant 0 : i32
    %c0_i32_1 = arith.constant 0 : i32
    return %c0_i32, %c0_i32_0 : i32, i32
  }
  func.func @transform_9(%arg0: i32) -> (i32, i32) {
    %c0_i32 = arith.constant 0 : i32
    %c0_i32_0 = arith.constant 0 : i32
    %c0_i32_1 = arith.constant 0 : i32
    return %c0_i32, %c0_i32_0 : i32, i32
  }
}

</mosaic_0001>

<llo_original>
// kernel: tpu_custom_call.1
$region0: #{tpu_custom_call.1}
  #allocation0 [shape = 'u32[]', space=smem, size = 0x4, offset = 0x4, fixed_abs, tag = 'smem constant byte address 0x4 - core index']
  #allocation1 [shape = 'u32[144,128]{1,0:T(1,128)}', space=vmem, size = 0x12000, scoped, tag = 'internal scratch']
  #allocation2 [shape = 'f32[16,32]{1,0:T(8,128)}', space=vmem, size = 0x2000, scoped, tag = 'scratch operand']
  %s0 = inlined_call_operand.hbm [shape: f32[16,9], index: 0, kind: input, shape index: {}]
  %s1 = inlined_call_operand.hbm [shape: f32[9,128], index: 1, kind: input, shape index: {}]
  %s2 = inlined_call_operand.hbm [shape: f32[32,128], index: 2, kind: input, shape index: {}]
  %s3 = inlined_call_operand.vmem [shape: f32[1,128], index: 3, kind: input, shape index: {}]
  %s4 = inlined_call_operand.hbm [shape: f32[32,128], index: 4, kind: input, shape index: {}]
  %s5 = inlined_call_operand.hbm [shape: f32[32,128], index: 5, kind: input, shape index: {}]
  %s6 = inlined_call_operand.vmem [shape: f32[1,128], index: 6, kind: input, shape index: {}]
  %s7 = inlined_call_operand.hbm [shape: f32[32,128], index: 7, kind: input, shape index: {}]
  %s8 = inlined_call_operand.vmem [shape: f32[1,128], index: 8, kind: input, shape index: {}]
  %s9 = inlined_call_operand.hbm [shape: f32[16,128], index: 9, kind: output, shape index: {}]
  %s10 = sld [smem:[#allocation0]]
  $region70: #{tpu_custom_call.1} parent=0
    _
  %s12 = ssub.s32 1, %s10
  %s13 = scalar_select 0, %s12, %s10
  $region1: #{tpu_custom_call.1} parent=0
    #allocation3 [shape = 'u8[8192]{0}', space=vmem, size = 0x2000, scoped, tag = 'input window, operand 0, single buffered']
    #allocation4 [shape = 's32[1]{0}', space=sflag, size = 0x4, scoped, tag = 'scoped memory for tpu_custom_call.1']
    #allocation5 [shape = 's32[1]{0}', space=sflag, size = 0x4, scoped, tag = 'scoped memory for tpu_custom_call.1']
    #allocation6 [shape = 'u8[8192]{0}', space=vmem, size = 0x2000, scoped, tag = 'input window, operand 1, single buffered']
    #allocation7 [shape = 's32[1]{0}', space=sflag, size = 0x4, scoped, tag = 'scoped memory for tpu_custom_call.1']
    #allocation8 [shape = 'u8[16384]{0}', space=vmem, size = 0x4000, scoped, tag = 'input window, operand 2, single buffered']
    #allocation9 [shape = 'u8[16384]{0}', space=vmem, size = 0x4000, scoped, tag = 'input window, operand 4, single buffered']
    #allocation10 [shape = 's32[1]{0}', space=sflag, size = 0x4, scoped, tag = 'scoped memory for tpu_custom_call.1']
    #allocation11 [shape = 'u8[16384]{0}', space=vmem, size = 0x4000, scoped, tag = 'input window, operand 5, single buffered']
    #allocation12 [shape = 'u8[16384]{0}', space=vmem, size = 0x4000, scoped, tag = 'input window, operand 7, single buffered']
    #allocation13 [shape = 's32[1]{0}', space=sflag, size = 0x4, scoped, tag = 'scoped memory for tpu_custom_call.1']
    #allocation14 [shape = 'u8[8192]{0}', space=vmem, size = 0x2000, scoped, tag = 'output window, operand 0, single buffered']
    %14 = vsyncpa [#allocation4], 0
    %15 = vsyncpa [#allocation7], 0
    %16 = vsyncpa [#allocation10], 0
    %17 = vsyncpa [#allocation13], 0
    %18 = vsyncpa [#allocation5], 0
    // Predicated region
    $region2: #{tpu_custom_call.1} parent=1 // pred_check
      _
    $region3: #{tpu_custom_call.1} parent=1 // pred_check_branch
      %20 = sbr.rel (0) target = $region5
    $region4: #{tpu_custom_call.1} parent=1 // pred_region
      %s22 = ssub.s32 256, 256
      %23 = vsyncadd [#allocation4], %s22
      %s24 = sshll.u32 [#allocation3], 4
      %s25 = int_to_ptr.vmem [resolvable:$true] %s24
      %30 = dma.hbm_to_vmem [thread:$0]  %s0, 256, %s25, [#allocation4], 128, 128, 8
    $region5: #{tpu_custom_call.1} parent=1 // pred_fallthru
      _
    // Predicated region
    $region6: #{tpu_custom_call.1} parent=1 // pred_check
      _
    $region7: #{tpu_custom_call.1} parent=1 // pred_check_branch
      %32 = sbr.rel (0) target = $region9
    $region8: #{tpu_custom_call.1} parent=1 // pred_region
      %s34 = ssub.s32 256, 256
      %35 = vsyncadd [#allocation7], %s34
      %s36 = sshll.u32 [#allocation6], 4
      %s37 = int_to_ptr.vmem [resolvable:$true] %s36
      %42 = dma.hbm_to_vmem [thread:$0]  %s1, 256, %s37, [#allocation7], 128, 128, 8
    $region9: #{tpu_custom_call.1} parent=1 // pred_fallthru
      _
    // Predicated region
    $region10: #{tpu_custom_call.1} parent=1 // pred_check
      _
    $region11: #{tpu_custom_call.1} parent=1 // pred_check_branch
      %44 = sbr.rel (0) target = $region13
    $region12: #{tpu_custom_call.1} parent=1 // pred_region
      %s46 = ssub.s32 512, 512
      %47 = vsyncadd [#allocation7], %s46
      %s48 = sshll.u32 [#allocation8], 4
      %s49 = int_to_ptr.vmem [resolvable:$true] %s48
      %54 = dma.hbm_to_vmem [thread:$0]  %s2, 512, %s49, [#allocation7], 128, 128, 8
    $region13: #{tpu_custom_call.1} parent=1 // pred_fallthru
      _
    // Predicated region
    $region14: #{tpu_custom_call.1} parent=1 // pred_check
      _
    $region15: #{tpu_custom_call.1} parent=1 // pred_check_branch
      %56 = sbr.rel (0) target = $region17
    $region16: #{tpu_custom_call.1} parent=1 // pred_region
      _
    $region17: #{tpu_custom_call.1} parent=1 // pred_fallthru
      _
    // Predicated region
    $region18: #{tpu_custom_call.1} parent=1 // pred_check
      _
    $region19: #{tpu_custom_call.1} parent=1 // pred_check_branch
      %58 = sbr.rel (0) target = $region21
    $region20: #{tpu_custom_call.1} parent=1 // pred_region
      %s60 = ssub.s32 512, 512
      %61 = vsyncadd [#allocation10], %s60
      %s62 = sshll.u32 [#allocation9], 4
      %s63 = int_to_ptr.vmem [resolvable:$true] %s62
      %68 = dma.hbm_to_vmem [thread:$0]  %s4, 512, %s63, [#allocation10], 128, 128, 8
    $region21: #{tpu_custom_call.1} parent=1 // pred_fallthru
      _
    // Predicated region
    $region22: #{tpu_custom_call.1} parent=1 // pred_check
      _
    $region23: #{tpu_custom_call.1} parent=1 // pred_check_branch
      %70 = sbr.rel (0) target = $region25
    $region24: #{tpu_custom_call.1} parent=1 // pred_region
      %s72 = ssub.s32 512, 512
      %73 = vsyncadd [#allocation10], %s72
      %s74 = sshll.u32 [#allocation11], 4
      %s75 = int_to_ptr.vmem [resolvable:$true] %s74
      %80 = dma.hbm_to_vmem [thread:$0]  %s5, 512, %s75, [#allocation10], 128, 128, 8
    $region25: #{tpu_custom_call.1} parent=1 // pred_fallthru
      _
    // Predicated region
    $region26: #{tpu_custom_call.1} parent=1 // pred_check
      _
    $region27: #{tpu_custom_call.1} parent=1 // pred_check_branch
      %82 = sbr.rel (0) target = $region29
    $region28: #{tpu_custom_call.1} parent=1 // pred_region
      _
    $region29: #{tpu_custom_call.1} parent=1 // pred_fallthru
      _
    // Predicated region
    $region30: #{tpu_custom_call.1} parent=1 // pred_check
      _
    $region31: #{tpu_custom_call.1} parent=1 // pred_check_branch
      %84 = sbr.rel (0) target = $region33
    $region32: #{tpu_custom_call.1} parent=1 // pred_region
      %s86 = ssub.s32 512, 512
      %87 = vsyncadd [#allocation13], %s86
      %s88 = sshll.u32 [#allocation12], 4
      %s89 = int_to_ptr.vmem [resolvable:$true] %s88
      %94 = dma.hbm_to_vmem [thread:$0]  %s7, 512, %s89, [#allocation13], 128, 128, 8
    $region33: #{tpu_custom_call.1} parent=1 // pred_fallthru
      _
    // Predicated region
    $region34: #{tpu_custom_call.1} parent=1 // pred_check
      _
    $region35: #{tpu_custom_call.1} parent=1 // pred_check_branch
      %96 = sbr.rel (0) target = $region37
    $region36: #{tpu_custom_call.1} parent=1 // pred_region
      _
    $region37: #{tpu_custom_call.1} parent=1 // pred_fallthru
      _
    // Predicated region
    $region38: #{tpu_custom_call.1} parent=1 // pred_check
      _
    $region39: #{tpu_custom_call.1} parent=1 // pred_check_branch
      %98 = sbr.rel (0) target = $region41
    $region40: #{tpu_custom_call.1} parent=1 // pred_region
      %99 = dma.done [#allocation4], 256
    $region41: #{tpu_custom_call.1} parent=1 // pred_fallthru
      _
    // Predicated region
    $region42: #{tpu_custom_call.1} parent=1 // pred_check
      _
    $region43: #{tpu_custom_call.1} parent=1 // pred_check_branch
      %101 = sbr.rel (0) target = $region45
    $region44: #{tpu_custom_call.1} parent=1 // pred_region
      %102 = dma.done [#allocation7], 256
    $region45: #{tpu_custom_call.1} parent=1 // pred_fallthru
      _
    // Predicated region
    $region46: #{tpu_custom_call.1} parent=1 // pred_check
      _
    $region47: #{tpu_custom_call.1} parent=1 // pred_check_branch
      %104 = sbr.rel (0) target = $region49
    $region48: #{tpu_custom_call.1} parent=1 // pred_region
      %105 = dma.done [#allocation7], 512
    $region49: #{tpu_custom_call.1} parent=1 // pred_fallthru
      _
    // Predicated region
    $region50: #{tpu_custom_call.1} parent=1 // pred_check
      _
    $region51: #{tpu_custom_call.1} parent=1 // pred_check_branch
      %107 = sbr.rel (0) target = $region53
    $region52: #{tpu_custom_call.1} parent=1 // pred_region
      %108 = dma.done [#allocation10], 512
    $region53: #{tpu_custom_call.1} parent=1 // pred_fallthru
      _
    // Predicated region
    $region54: #{tpu_custom_call.1} parent=1 // pred_check
      _
    $region55: #{tpu_custom_call.1} parent=1 // pred_check_branch
      %110 = sbr.rel (0) target = $region57
    $region56: #{tpu_custom_call.1} parent=1 // pred_region
      %111 = dma.done [#allocation10], 512
    $region57: #{tpu_custom_call.1} parent=1 // pred_fallthru
      _
    // Predicated region
    $region58: #{tpu_custom_call.1} parent=1 // pred_check
      _
    $region59: #{tpu_custom_call.1} parent=1 // pred_check_branch
      %113 = sbr.rel (0) target = $region61
    $region60: #{tpu_custom_call.1} parent=1 // pred_region
      %114 = dma.done [#allocation13], 512
    $region61: #{tpu_custom_call.1} parent=1 // pred_fallthru
      _
    %v115 = vld [vmem:[#allocation3] sm:$0xff]
    %v116 = vld [vmem:[#allocation3 + $0x8] sm:$0xff]
    %v117 = vld [vmem:[#allocation6] sm:$0xff]
    %v118 = vld [vmem:[#allocation6 + $0x8] sm:$0x1]
    %v119 = vld [vmem:[%s3] sm:$0x1]
    %v121 = vlaneseq
    %v122 = vshrl.u32 %v121, 7
    %v123 = vsub.s32 0, %v122
    %v124 = vrot.slane %v119, %v123
    %vm126 = vcmask 72704
    %v128 = vsel %vm126, %v115, 0
    %v131 = vsel %vm126, %v116, 0
    %vm133 = vcmask 1040384
    %v135 = vsel %vm133, %v118, 0
    %137 = vmatprep.subr.mxu0 0.0
    %138 = vmatpush1.msra.mxu0 0.0
    %139 = vmatprep.subr.mxu0 0.0
    %140 = vmatpush1.msra.mxu0 0.0
    %141 = vmatprep.subr.mxu0 0.0
    %142 = vmatpush1.msra.mxu0 0.0
    %143 = vmatprep.subr.mxu0 0.0
    %144 = vmatpush1.msra.mxu0 0.0
    %145 = vmatprep.subr.mxu0 0.0
    %146 = vmatpush1.msra.mxu0 0.0
    %147 = vmatprep.subr.mxu0 0.0
    %148 = vmatpush1.msra.mxu0 0.0
    %149 = vmatprep.subr.mxu0 0.0
    %150 = vmatpush1.msra.mxu0 0.0
    %151 = vmatprep.subr.mxu0 0.0
    %152 = vmatpush1.msra.mxu0 0.0
    %153 = vmatprep.subr.mxu0 0.0
    %154 = vmatpush1.msra.mxu0 0.0
    %155 = vmatprep.subr.mxu0 0.0
    %156 = vmatpush1.msra.mxu0 0.0
    %157 = vmatprep.subr.mxu0 0.0
    %158 = vmatpush1.msra.mxu0 0.0
    %159 = vmatprep.subr.mxu0 0.0
    %160 = vmatpush1.msra.mxu0 0.0
    %161 = vmatprep.subr.mxu0 0.0
    %162 = vmatpush1.msra.mxu0 0.0
    %163 = vmatprep.subr.mxu0 0.0
    %164 = vmatpush1.msra.mxu0 0.0
    %165 = vmatprep.subr.mxu0 0.0
    %166 = vmatpush1.msra.mxu0 %v135
    %167 = vmatprep.subr.mxu0 0.0
    %168 = vmatpush1.msra.mxu0 %v117
    %169 = vmatprep.subr.mxu0 0.0
    %170 = vmatpush2.msra.mxu0 0.0
    %171 = vmatprep.subr.mxu0 0.0
    %172 = vmatpush2.msra.mxu0 0.0
    %173 = vmatprep.subr.mxu0 0.0
    %174 = vmatpush2.msra.mxu0 0.0
    %175 = vmatprep.subr.mxu0 0.0
    %176 = vmatpush2.msra.mxu0 0.0
    %177 = vmatprep.subr.mxu0 0.0
    %178 = vmatpush2.msra.mxu0 0.0
    %179 = vmatprep.subr.mxu0 0.0
    %180 = vmatpush2.msra.mxu0 0.0
    %181 = vmatprep.subr.mxu0 0.0
    %182 = vmatpush2.msra.mxu0 0.0
    %183 = vmatprep.subr.mxu0 0.0
    %184 = vmatpush2.msra.mxu0 0.0
    %185 = vmatprep.subr.mxu0 0.0
    %186 = vmatpush2.msra.mxu0 0.0
    %187 = vmatprep.subr.mxu0 0.0
    %188 = vmatpush2.msra.mxu0 0.0
    %189 = vmatprep.subr.mxu0 0.0
    %190 = vmatpush2.msra.mxu0 0.0
    %191 = vmatprep.subr.mxu0 0.0
    %192 = vmatpush2.msra.mxu0 0.0
    %193 = vmatprep.subr.mxu0 0.0
    %194 = vmatpush2.msra.mxu0 0.0
    %195 = vmatprep.subr.mxu0 0.0
    %196 = vmatpush2.msra.mxu0 0.0
    %197 = vmatprep.subr.mxu0 0.0
    %198 = vmatpush2.msra.mxu0 0.0
    %199 = vmatprep.subr.mxu0 0.0
    %200 = vmatpush2.msra.mxu0 0.0
    %201 = vmatprep.mubr.f32.mxu0 0.0
    %202 = vmatmul.mubr.f32.gmra.mxu0 %v128
    %v203 = vpop.f32.mrf.mxu0
    %v204 = vadd.f32 %v124, %v203
    %v205 = vpop.f32.mrf.mxu0
    %206 = vmatprep.mubr.f32.mxu0 0.0
    %207 = vmatmul.mubr.f32.gmra.mxu0 %v131
    %v208 = vpop.f32.mrf.mxu0
    %v209 = vadd.f32 %v124, %v208
    %v210 = vpop.f32.mrf.mxu0
    %211 = vdwg.mxu0
    %v212 = vld [vmem:[#allocation8] sm:$0xff]
    %v213 = vld [vmem:[#allocation8 + $0x8] sm:$0xff]
    %v214 = vld [vmem:[#allocation8 + $0x10] sm:$0xff]
    %v215 = vld [vmem:[#allocation8 + $0x18] sm:$0xff]
    %v216 = vld [vmem:[#allocation9] sm:$0xff]
    %v217 = vld [vmem:[#allocation9 + $0x8] sm:$0xff]
    %v218 = vld [vmem:[#allocation9 + $0x10] sm:$0xff]
    %v219 = vld [vmem:[#allocation9 + $0x18] sm:$0xff]
    %v220 = vld [vmem:[#allocation11] sm:$0xff]
    %v221 = vld [vmem:[#allocation11 + $0x8] sm:$0xff]
    %v222 = vld [vmem:[#allocation11 + $0x10] sm:$0xff]
    %v223 = vld [vmem:[#allocation11 + $0x18] sm:$0xff]
    %v224 = vld [vmem:[%s6] sm:$0x1]
    %v226 = vlaneseq
    %v227 = vshrl.u32 %v226, 7
    %v228 = vsub.s32 0, %v227
    %v229 = vrot.slane %v224, %v228
    %vm231 = vcmask 261120
    %v233 = vsel %vm231, 0.0, 0
    %235 = vmatprep.subr.mxu0 0.0
    %236 = vmatpush1.msra.mxu0 0.0
    %237 = vmatprep.subr.mxu0 0.0
    %238 = vmatpush1.msra.mxu0 0.0
    %239 = vmatprep.subr.mxu0 0.0
    %240 = vmatpush1.msra.mxu0 0.0
    %241 = vmatprep.subr.mxu0 0.0
    %242 = vmatpush1.msra.mxu0 0.0
    %243 = vmatprep.subr.mxu0 0.0
    %244 = vmatpush1.msra.mxu0 0.0
    %245 = vmatprep.subr.mxu0 0.0
    %246 = vmatpush1.msra.mxu0 0.0
    %247 = vmatprep.subr.mxu0 0.0
    %248 = vmatpush1.msra.mxu0 0.0
    %249 = vmatprep.subr.mxu0 0.0
    %250 = vmatpush1.msra.mxu0 0.0
    %251 = vmatprep.subr.mxu0 0.0
    %252 = vmatpush1.msra.mxu0 0.0
    %253 = vmatprep.subr.mxu0 0.0
    %254 = vmatpush1.msra.mxu0 0.0
    %255 = vmatprep.subr.mxu0 0.0
    %256 = vmatpush1.msra.mxu0 0.0
    %257 = vmatprep.subr.mxu0 0.0
    %258 = vmatpush1.msra.mxu0 0.0
    %259 = vmatprep.subr.mxu0 0.0
    %260 = vmatpush1.msra.mxu0 %v215
    %261 = vmatprep.subr.mxu0 0.0
    %262 = vmatpush1.msra.mxu0 %v214
    %263 = vmatprep.subr.mxu0 0.0
    %264 = vmatpush1.msra.mxu0 %v213
    %265 = vmatprep.subr.mxu0 0.0
    %266 = vmatpush1.msra.mxu0 %v212
    %267 = vmatprep.subr.mxu0 0.0
    %268 = vmatpush2.msra.mxu0 0.0
    %269 = vmatprep.subr.mxu0 0.0
    %270 = vmatpush2.msra.mxu0 0.0
    %271 = vmatprep.subr.mxu0 0.0
    %272 = vmatpush2.msra.mxu0 0.0
    %273 = vmatprep.subr.mxu0 0.0
    %274 = vmatpush2.msra.mxu0 0.0
    %275 = vmatprep.subr.mxu0 0.0
    %276 = vmatpush2.msra.mxu0 0.0
    %277 = vmatprep.subr.mxu0 0.0
    %278 = vmatpush2.msra.mxu0 0.0
    %279 = vmatprep.subr.mxu0 0.0
    %280 = vmatpush2.msra.mxu0 0.0
    %281 = vmatprep.subr.mxu0 0.0
    %282 = vmatpush2.msra.mxu0 0.0
    %283 = vmatprep.subr.mxu0 0.0
    %284 = vmatpush2.msra.mxu0 0.0
    %285 = vmatprep.subr.mxu0 0.0
    %286 = vmatpush2.msra.mxu0 0.0
    %287 = vmatprep.subr.mxu0 0.0
    %288 = vmatpush2.msra.mxu0 0.0
    %289 = vmatprep.subr.mxu0 0.0
    %290 = vmatpush2.msra.mxu0 0.0
    %291 = vmatprep.subr.mxu0 0.0
    %292 = vmatpush2.msra.mxu0 0.0
    %293 = vmatprep.subr.mxu0 0.0
    %294 = vmatpush2.msra.mxu0 0.0
    %295 = vmatprep.subr.mxu0 0.0
    %296 = vmatpush2.msra.mxu0 0.0
    %297 = vmatprep.subr.mxu0 0.0
    %298 = vmatpush2.msra.mxu0 0.0
    %299 = vmatprep.mubr.f32.mxu0 0.0
    %300 = vmatmul.mubr.f32.gmra.mxu0 %v233
    %v301 = vpop.f32.mrf.mxu0
    %v302 = vadd.f32 0.0, %v301
    %v303 = vpop.f32.mrf.mxu0
    %304 = vdwg.mxu0
    %v305 = vadd.f32 %v204, %v302
    %v306 = vxor.u32 %v305, 2147483648
    %v307 = vmul.f32 %v306, 1.442695
    %v308 = vpow.pop %v307
    %v309 = vadd.f32 %v308, 1.0
    %v310 = vrcp.pop %v309
    %v311 = vmul.f32 1.0, %v310
    %v312 = vtanh.pop %v305
    %v313 = vmul.f32 %v311, 0.0
    %315 = vrot.lane.b32.xlu0 %v312, 64
    %v316 = vpop.permute.xlu0 %315
    %v318 = vmul.f32 %v311, %v316
    %320 = vrot.lane.b32.xlu0 %v318, 32
    %v321 = vpop.permute.xlu0 %320
    %v323 = vadd.f32 %v313, %v321
    %v324 = vtanh.pop %v323
    %326 = vrot.lane.b32.xlu0 %v324, 64
    %v327 = vpop.permute.xlu0 %326
    %v329 = vmul.f32 %v311, %v327
    %330 = vmatprep.subr.mxu0 0.0
    %331 = vmatpush1.msra.mxu0 0.0
    %332 = vmatprep.subr.mxu0 0.0
    %333 = vmatpush1.msra.mxu0 0.0
    %334 = vmatprep.subr.mxu0 0.0
    %335 = vmatpush1.msra.mxu0 0.0
    %336 = vmatprep.subr.mxu0 0.0
    %337 = vmatpush1.msra.mxu0 0.0
    %338 = vmatprep.subr.mxu0 0.0
    %339 = vmatpush1.msra.mxu0 0.0
    %340 = vmatprep.subr.mxu0 0.0
    %341 = vmatpush1.msra.mxu0 0.0
    %342 = vmatprep.subr.mxu0 0.0
    %343 = vmatpush1.msra.mxu0 0.0
    %344 = vmatprep.subr.mxu0 0.0
    %345 = vmatpush1.msra.mxu0 0.0
    %346 = vmatprep.subr.mxu0 0.0
    %347 = vmatpush1.msra.mxu0 0.0
    %348 = vmatprep.subr.mxu0 0.0
    %349 = vmatpush1.msra.mxu0 0.0
    %350 = vmatprep.subr.mxu0 0.0
    %351 = vmatpush1.msra.mxu0 0.0
    %352 = vmatprep.subr.mxu0 0.0
    %353 = vmatpush1.msra.mxu0 0.0
    %354 = vmatprep.subr.mxu0 0.0
    %355 = vmatpush1.msra.mxu0 %v223
    %356 = vmatprep.subr.mxu0 0.0
    %357 = vmatpush1.msra.mxu0 %v222
    %358 = vmatprep.subr.mxu0 0.0
    %359 = vmatpush1.msra.mxu0 %v221
    %360 = vmatprep.subr.mxu0 0.0
    %361 = vmatpush1.msra.mxu0 %v220
    %362 = vmatprep.subr.mxu0 0.0
    %363 = vmatpush2.msra.mxu0 0.0
    %364 = vmatprep.subr.mxu0 0.0
    %365 = vmatpush2.msra.mxu0 0.0
    %366 = vmatprep.subr.mxu0 0.0
    %367 = vmatpush2.msra.mxu0 0.0
    %368 = vmatprep.subr.mxu0 0.0
    %369 = vmatpush2.msra.mxu0 0.0
    %370 = vmatprep.subr.mxu0 0.0
    %371 = vmatpush2.msra.mxu0 0.0
    %372 = vmatprep.subr.mxu0 0.0
    %373 = vmatpush2.msra.mxu0 0.0
    %374 = vmatprep.subr.mxu0 0.0
    %375 = vmatpush2.msra.mxu0 0.0
    %376 = vmatprep.subr.mxu0 0.0
    %377 = vmatpush2.msra.mxu0 0.0
    %378 = vmatprep.subr.mxu0 0.0
    %379 = vmatpush2.msra.mxu0 0.0
    %380 = vmatprep.subr.mxu0 0.0
    %381 = vmatpush2.msra.mxu0 0.0
    %382 = vmatprep.subr.mxu0 0.0
    %383 = vmatpush2.msra.mxu0 0.0
    %384 = vmatprep.subr.mxu0 0.0
    %385 = vmatpush2.msra.mxu0 0.0
    %386 = vmatprep.subr.mxu0 0.0
    %387 = vmatpush2.msra.mxu0 0.0
    %388 = vmatprep.subr.mxu0 0.0
    %389 = vmatpush2.msra.mxu0 0.0
    %390 = vmatprep.subr.mxu0 0.0
    %391 = vmatpush2.msra.mxu0 0.0
    %392 = vmatprep.subr.mxu0 0.0
    %393 = vmatpush2.msra.mxu0 0.0
    %394 = vmatprep.mubr.f32.mxu0 0.0
    %395 = vmatmul.mubr.f32.gmra.mxu0 %v233
    %v396 = vpop.f32.mrf.mxu0
    %v397 = vadd.f32 0.0, %v396
    %v398 = vpop.f32.mrf.mxu0
    %399 = vdwg.mxu0
    %401 = vrot.lane.b32.xlu0 %v329, 32
    %v402 = vpop.permute.xlu0 %401
    %v403 = vsel %vm231, %v402, 0
    %405 = vmatprep.subr.mxu0 0.0
    %406 = vmatpush1.msra.mxu0 0.0
    %407 = vmatprep.subr.mxu0 0.0
    %408 = vmatpush1.msra.mxu0 0.0
    %409 = vmatprep.subr.mxu0 0.0
    %410 = vmatpush1.msra.mxu0 0.0
    %411 = vmatprep.subr.mxu0 0.0
    %412 = vmatpush1.msra.mxu0 0.0
    %413 = vmatprep.subr.mxu0 0.0
    %414 = vmatpush1.msra.mxu0 0.0
    %415 = vmatprep.subr.mxu0 0.0
    %416 = vmatpush1.msra.mxu0 0.0
    %417 = vmatprep.subr.mxu0 0.0
    %418 = vmatpush1.msra.mxu0 0.0
    %419 = vmatprep.subr.mxu0 0.0
    %420 = vmatpush1.msra.mxu0 0.0
    %421 = vmatprep.subr.mxu0 0.0
    %422 = vmatpush1.msra.mxu0 0.0
    %423 = vmatprep.subr.mxu0 0.0
    %424 = vmatpush1.msra.mxu0 0.0
    %425 = vmatprep.subr.mxu0 0.0
    %426 = vmatpush1.msra.mxu0 0.0
    %427 = vmatprep.subr.mxu0 0.0
    %428 = vmatpush1.msra.mxu0 0.0
    %429 = vmatprep.subr.mxu0 0.0
    %430 = vmatpush1.msra.mxu0 %v219
    %431 = vmatprep.subr.mxu0 0.0
    %432 = vmatpush1.msra.mxu0 %v218
    %433 = vmatprep.subr.mxu0 0.0
    %434 = vmatpush1.msra.mxu0 %v217
    %435 = vmatprep.subr.mxu0 0.0
    %436 = vmatpush1.msra.mxu0 %v216
    %437 = vmatprep.subr.mxu0 0.0
    %438 = vmatpush2.msra.mxu0 0.0
    %439 = vmatprep.subr.mxu0 0.0
    %440 = vmatpush2.msra.mxu0 0.0
    %441 = vmatprep.subr.mxu0 0.0
    %442 = vmatpush2.msra.mxu0 0.0
    %443 = vmatprep.subr.mxu0 0.0
    %444 = vmatpush2.msra.mxu0 0.0
    %445 = vmatprep.subr.mxu0 0.0
    %446 = vmatpush2.msra.mxu0 0.0
    %447 = vmatprep.subr.mxu0 0.0
    %448 = vmatpush2.msra.mxu0 0.0
    %449 = vmatprep.subr.mxu0 0.0
    %450 = vmatpush2.msra.mxu0 0.0
    %451 = vmatprep.subr.mxu0 0.0
    %452 = vmatpush2.msra.mxu0 0.0
    %453 = vmatprep.subr.mxu0 0.0
    %454 = vmatpush2.msra.mxu0 0.0
    %455 = vmatprep.subr.mxu0 0.0
    %456 = vmatpush2.msra.mxu0 0.0
    %457 = vmatprep.subr.mxu0 0.0
    %458 = vmatpush2.msra.mxu0 0.0
    %459 = vmatprep.subr.mxu0 0.0
    %460 = vmatpush2.msra.mxu0 0.0
    %461 = vmatprep.subr.mxu0 0.0
    %462 = vmatpush2.msra.mxu0 0.0
    %463 = vmatprep.subr.mxu0 0.0
    %464 = vmatpush2.msra.mxu0 0.0
    %465 = vmatprep.subr.mxu0 0.0
    %466 = vmatpush2.msra.mxu0 0.0
    %467 = vmatprep.subr.mxu0 0.0
    %468 = vmatpush2.msra.mxu0 0.0
    %469 = vmatprep.mubr.f32.mxu0 0.0
    %470 = vmatmul.mubr.f32.gmra.mxu0 %v403
    %v471 = vpop.f32.mrf.mxu0
    %v472 = vadd.f32 %v397, %v471
    %v473 = vpop.f32.mrf.mxu0
    %474 = vdwg.mxu0
    %v475 = vadd.f32 %v472, %v229
    %v476 = vxor.u32 %v475, 2147483648
    %v477 = vmul.f32 %v476, 1.442695
    %v478 = vpow.pop %v477
    %v479 = vadd.f32 %v478, 1.0
    %v480 = vrcp.pop %v479
    %v481 = vmul.f32 1.0, %v480
    %v482 = vtanh.pop %v475
    %v483 = vmul.f32 %v481, 0.0
    %485 = vrot.lane.b32.xlu0 %v482, 64
    %v486 = vpop.permute.xlu0 %485
    %v488 = vmul.f32 %v481, %v486
    %490 = vrot.lane.b32.xlu0 %v488, 32
    %v491 = vpop.permute.xlu0 %490
    %v493 = vadd.f32 %v483, %v491
    %v494 = vtanh.pop %v493
    %496 = vrot.lane.b32.xlu0 %v494, 64
    %v497 = vpop.permute.xlu0 %496
    %v499 = vmul.f32 %v481, %v497
    %501 = vrot.lane.b32.xlu0 %v499, 32
    %v502 = vpop.permute.xlu0 %501
    %vm504 = vcmask 254976
    %505 = vst.msk [vmem:[#allocation2] sm:$0x3] %vm504, %v502
    %506 = vmatprep.subr.mxu0 0.0
    %507 = vmatpush1.msra.mxu0 0.0
    %508 = vmatprep.subr.mxu0 0.0
    %509 = vmatpush1.msra.mxu0 0.0
    %510 = vmatprep.subr.mxu0 0.0
    %511 = vmatpush1.msra.mxu0 0.0
    %512 = vmatprep.subr.mxu0 0.0
    %513 = vmatpush1.msra.mxu0 0.0
    %514 = vmatprep.subr.mxu0 0.0
    %515 = vmatpush1.msra.mxu0 0.0
    %516 = vmatprep.subr.mxu0 0.0
    %517 = vmatpush1.msra.mxu0 0.0
    %518 = vmatprep.subr.mxu0 0.0
    %519 = vmatpush1.msra.mxu0 0.0
    %520 = vmatprep.subr.mxu0 0.0
    %521 = vmatpush1.msra.mxu0 0.0
    %522 = vmatprep.subr.mxu0 0.0
    %523 = vmatpush1.msra.mxu0 0.0
    %524 = vmatprep.subr.mxu0 0.0
    %525 = vmatpush1.msra.mxu0 0.0
    %526 = vmatprep.subr.mxu0 0.0
    %527 = vmatpush1.msra.mxu0 0.0
    %528 = vmatprep.subr.mxu0 0.0
    %529 = vmatpush1.msra.mxu0 0.0
    %530 = vmatprep.subr.mxu0 0.0
    %531 = vmatpush1.msra.mxu0 %v215
    %532 = vmatprep.subr.mxu0 0.0
    %533 = vmatpush1.msra.mxu0 %v214
    %534 = vmatprep.subr.mxu0 0.0
    %535 = vmatpush1.msra.mxu0 %v213
    %536 = vmatprep.subr.mxu0 0.0
    %537 = vmatpush1.msra.mxu0 %v212
    %538 = vmatprep.subr.mxu0 0.0
    %539 = vmatpush2.msra.mxu0 0.0
    %540 = vmatprep.subr.mxu0 0.0
    %541 = vmatpush2.msra.mxu0 0.0
    %542 = vmatprep.subr.mxu0 0.0
    %543 = vmatpush2.msra.mxu0 0.0
    %544 = vmatprep.subr.mxu0 0.0
    %545 = vmatpush2.msra.mxu0 0.0
    %546 = vmatprep.subr.mxu0 0.0
    %547 = vmatpush2.msra.mxu0 0.0
    %548 = vmatprep.subr.mxu0 0.0
    %549 = vmatpush2.msra.mxu0 0.0
    %550 = vmatprep.subr.mxu0 0.0
    %551 = vmatpush2.msra.mxu0 0.0
    %552 = vmatprep.subr.mxu0 0.0
    %553 = vmatpush2.msra.mxu0 0.0
    %554 = vmatprep.subr.mxu0 0.0
    %555 = vmatpush2.msra.mxu0 0.0
    %556 = vmatprep.subr.mxu0 0.0
    %557 = vmatpush2.msra.mxu0 0.0
    %558 = vmatprep.subr.mxu0 0.0
    %559 = vmatpush2.msra.mxu0 0.0
    %560 = vmatprep.subr.mxu0 0.0
    %561 = vmatpush2.msra.mxu0 0.0
    %562 = vmatprep.subr.mxu0 0.0
    %563 = vmatpush2.msra.mxu0 0.0
    %564 = vmatprep.subr.mxu0 0.0
    %565 = vmatpush2.msra.mxu0 0.0
    %566 = vmatprep.subr.mxu0 0.0
    %567 = vmatpush2.msra.mxu0 0.0
    %568 = vmatprep.subr.mxu0 0.0
    %569 = vmatpush2.msra.mxu0 0.0
    %570 = vmatprep.mubr.f32.mxu0 0.0
    %571 = vmatmul.mubr.f32.gmra.mxu0 %v403
    %v572 = vpop.f32.mrf.mxu0
    %v573 = vadd.f32 0.0, %v572
    %v574 = vpop.f32.mrf.mxu0
    %575 = vdwg.mxu0
    %v577 = vrot.slane %v573, 6
    %v579 = vadd.f32 %v204, %v577
    %v580 = vxor.u32 %v579, 2147483648
    %v581 = vmul.f32 %v580, 1.442695
    %v582 = vpow.pop %v581
    %v583 = vadd.f32 %v582, 1.0
    %v584 = vrcp.pop %v583
    %v585 = vmul.f32 1.0, %v584
    %v586 = vtanh.pop %v579
    %v588 = vrot.slane %v323, 6
    %v590 = vmul.f32 %v585, %v588
    %592 = vrot.lane.b32.xlu0 %v586, 64
    %v593 = vpop.permute.xlu0 %592
    %v595 = vmul.f32 %v585, %v593
    %597 = vrot.lane.b32.xlu0 %v595, 32
    %v598 = vpop.permute.xlu0 %597
    %v600 = vadd.f32 %v590, %v598
    %v601 = vtanh.pop %v600
    %603 = vrot.lane.b32.xlu0 %v601, 64
    %v604 = vpop.permute.xlu0 %603
    %v606 = vmul.f32 %v585, %v604
    %v607 = vsel %vm231, %v502, 0
    %609 = vmatprep.subr.mxu0 0.0
    %610 = vmatpush1.msra.mxu0 0.0
    %611 = vmatprep.subr.mxu0 0.0
    %612 = vmatpush1.msra.mxu0 0.0
    %613 = vmatprep.subr.mxu0 0.0
    %614 = vmatpush1.msra.mxu0 0.0
    %615 = vmatprep.subr.mxu0 0.0
    %616 = vmatpush1.msra.mxu0 0.0
    %617 = vmatprep.subr.mxu0 0.0
    %618 = vmatpush1.msra.mxu0 0.0
    %619 = vmatprep.subr.mxu0 0.0
    %620 = vmatpush1.msra.mxu0 0.0
    %621 = vmatprep.subr.mxu0 0.0
    %622 = vmatpush1.msra.mxu0 0.0
    %623 = vmatprep.subr.mxu0 0.0
    %624 = vmatpush1.msra.mxu0 0.0
    %625 = vmatprep.subr.mxu0 0.0
    %626 = vmatpush1.msra.mxu0 0.0
    %627 = vmatprep.subr.mxu0 0.0
    %628 = vmatpush1.msra.mxu0 0.0
    %629 = vmatprep.subr.mxu0 0.0
    %630 = vmatpush1.msra.mxu0 0.0
    %631 = vmatprep.subr.mxu0 0.0
    %632 = vmatpush1.msra.mxu0 0.0
    %633 = vmatprep.subr.mxu0 0.0
    %634 = vmatpush1.msra.mxu0 %v223
    %635 = vmatprep.subr.mxu0 0.0
    %636 = vmatpush1.msra.mxu0 %v222
    %637 = vmatprep.subr.mxu0 0.0
    %638 = vmatpush1.msra.mxu0 %v221
    %639 = vmatprep.subr.mxu0 0.0
    %640 = vmatpush1.msra.mxu0 %v220
    %641 = vmatprep.subr.mxu0 0.0
    %642 = vmatpush2.msra.mxu0 0.0
    %643 = vmatprep.subr.mxu0 0.0
    %644 = vmatpush2.msra.mxu0 0.0
    %645 = vmatprep.subr.mxu0 0.0
    %646 = vmatpush2.msra.mxu0 0.0
    %647 = vmatprep.subr.mxu0 0.0
    %648 = vmatpush2.msra.mxu0 0.0
    %649 = vmatprep.subr.mxu0 0.0
    %650 = vmatpush2.msra.mxu0 0.0
    %651 = vmatprep.subr.mxu0 0.0
    %652 = vmatpush2.msra.mxu0 0.0
    %653 = vmatprep.subr.mxu0 0.0
    %654 = vmatpush2.msra.mxu0 0.0
    %655 = vmatprep.subr.mxu0 0.0
    %656 = vmatpush2.msra.mxu0 0.0
    %657 = vmatprep.subr.mxu0 0.0
    %658 = vmatpush2.msra.mxu0 0.0
    %659 = vmatprep.subr.mxu0 0.0
    %660 = vmatpush2.msra.mxu0 0.0
    %661 = vmatprep.subr.mxu0 0.0
    %662 = vmatpush2.msra.mxu0 0.0
    %663 = vmatprep.subr.mxu0 0.0
    %664 = vmatpush2.msra.mxu0 0.0
    %665 = vmatprep.subr.mxu0 0.0
    %666 = vmatpush2.msra.mxu0 0.0
    %667 = vmatprep.subr.mxu0 0.0
    %668 = vmatpush2.msra.mxu0 0.0
    %669 = vmatprep.subr.mxu0 0.0
    %670 = vmatpush2.msra.mxu0 0.0
    %671 = vmatprep.subr.mxu0 0.0
    %672 = vmatpush2.msra.mxu0 0.0
    %673 = vmatprep.mubr.f32.mxu0 0.0
    %674 = vmatmul.mubr.f32.gmra.mxu0 %v607
    %v675 = vpop.f32.mrf.mxu0
    %v676 = vadd.f32 0.0, %v675
    %v677 = vpop.f32.mrf.mxu0
    %678 = vdwg.mxu0
    %v680 = vrot.slane %v606, 2
    %681 = vrot.lane.b32.xlu0 %v680, 32
    %v682 = vpop.permute.xlu0 %681
    %v683 = vsel %vm231, %v682, 0
    %685 = vmatprep.subr.mxu0 0.0
    %686 = vmatpush1.msra.mxu0 0.0
    %687 = vmatprep.subr.mxu0 0.0
    %688 = vmatpush1.msra.mxu0 0.0
    %689 = vmatprep.subr.mxu0 0.0
    %690 = vmatpush1.msra.mxu0 0.0
    %691 = vmatprep.subr.mxu0 0.0
    %692 = vmatpush1.msra.mxu0 0.0
    %693 = vmatprep.subr.mxu0 0.0
    %694 = vmatpush1.msra.mxu0 0.0
    %695 = vmatprep.subr.mxu0 0.0
    %696 = vmatpush1.msra.mxu0 0.0
    %697 = vmatprep.subr.mxu0 0.0
    %698 = vmatpush1.msra.mxu0 0.0
    %699 = vmatprep.subr.mxu0 0.0
    %700 = vmatpush1.msra.mxu0 0.0
    %701 = vmatprep.subr.mxu0 0.0
    %702 = vmatpush1.msra.mxu0 0.0
    %703 = vmatprep.subr.mxu0 0.0
    %704 = vmatpush1.msra.mxu0 0.0
    %705 = vmatprep.subr.mxu0 0.0
    %706 = vmatpush1.msra.mxu0 0.0
    %707 = vmatprep.subr.mxu0 0.0
    %708 = vmatpush1.msra.mxu0 0.0
    %709 = vmatprep.subr.mxu0 0.0
    %710 = vmatpush1.msra.mxu0 %v219
    %711 = vmatprep.subr.mxu0 0.0
    %712 = vmatpush1.msra.mxu0 %v218
    %713 = vmatprep.subr.mxu0 0.0
    %714 = vmatpush1.msra.mxu0 %v217
    %715 = vmatprep.subr.mxu0 0.0
    %716 = vmatpush1.msra.mxu0 %v216
    %717 = vmatprep.subr.mxu0 0.0
    %718 = vmatpush2.msra.mxu0 0.0
    %719 = vmatprep.subr.mxu0 0.0
    %720 = vmatpush2.msra.mxu0 0.0
    %721 = vmatprep.subr.mxu0 0.0
    %722 = vmatpush2.msra.mxu0 0.0
    %723 = vmatprep.subr.mxu0 0.0
    %724 = vmatpush2.msra.mxu0 0.0
    %725 = vmatprep.subr.mxu0 0.0
    %726 = vmatpush2.msra.mxu0 0.0
    %727 = vmatprep.subr.mxu0 0.0
    %728 = vmatpush2.msra.mxu0 0.0
    %729 = vmatprep.subr.mxu0 0.0
    %730 = vmatpush2.msra.mxu0 0.0
    %731 = vmatprep.subr.mxu0 0.0
    %732 = vmatpush2.msra.mxu0 0.0
    %733 = vmatprep.subr.mxu0 0.0
    %734 = vmatpush2.msra.mxu0 0.0
    %735 = vmatprep.subr.mxu0 0.0
    %736 = vmatpush2.msra.mxu0 0.0
    %737 = vmatprep.subr.mxu0 0.0
    %738 = vmatpush2.msra.mxu0 0.0
    %739 = vmatprep.subr.mxu0 0.0
    %740 = vmatpush2.msra.mxu0 0.0
    %741 = vmatprep.subr.mxu0 0.0
    %742 = vmatpush2.msra.mxu0 0.0
    %743 = vmatprep.subr.mxu0 0.0
    %744 = vmatpush2.msra.mxu0 0.0
    %745 = vmatprep.subr.mxu0 0.0
    %746 = vmatpush2.msra.mxu0 0.0
    %747 = vmatprep.subr.mxu0 0.0
    %748 = vmatpush2.msra.mxu0 0.0
    %749 = vmatprep.mubr.f32.mxu0 0.0
    %750 = vmatmul.mubr.f32.gmra.mxu0 %v683
    %v751 = vpop.f32.mrf.mxu0
    %v752 = vadd.f32 %v676, %v751
    %v753 = vpop.f32.mrf.mxu0
    %754 = vdwg.mxu0
    %v755 = vadd.f32 %v752, %v229
    %v756 = vxor.u32 %v755, 2147483648
    %v757 = vmul.f32 %v756, 1.442695
    %v758 = vpow.pop %v757
    %v759 = vadd.f32 %v758, 1.0
    %v760 = vrcp.pop %v759
    %v761 = vmul.f32 1.0, %v760
    %v762 = vtanh.pop %v755
    %v763 = vmul.f32 %v761, %v493
    %765 = vrot.lane.b32.xlu0 %v762, 64
    %v766 = vpop.permute.xlu0 %765
    %v768 = vmul.f32 %v761, %v766
    %770 = vrot.lane.b32.xlu0 %v768, 32
    %v771 = vpop.permute.xlu0 %770
    %v773 = vadd.f32 %v763, %v771
    %v774 = vtanh.pop %v773
    %776 = vrot.lane.b32.xlu0 %v774, 64
    %v777 = vpop.permute.xlu0 %776
    %v779 = vmul.f32 %v761, %v777
    %781 = vrot.lane.b32.xlu0 %v779, 32
    %v782 = vpop.permute.xlu0 %781
    %784 = vst.msk [vmem:[#allocation2 + $0x2] sm:$0x3] %vm504, %v782
    %785 = vmatprep.subr.mxu0 0.0
    %786 = vmatpush1.msra.mxu0 0.0
    %787 = vmatprep.subr.mxu0 0.0
    %788 = vmatpush1.msra.mxu0 0.0
    %789 = vmatprep.subr.mxu0 0.0
    %790 = vmatpush1.msra.mxu0 0.0
    %791 = vmatprep.subr.mxu0 0.0
    %792 = vmatpush1.msra.mxu0 0.0
    %793 = vmatprep.subr.mxu0 0.0
    %794 = vmatpush1.msra.mxu0 0.0
    %795 = vmatprep.subr.mxu0 0.0
    %796 = vmatpush1.msra.mxu0 0.0
    %797 = vmatprep.subr.mxu0 0.0
    %798 = vmatpush1.msra.mxu0 0.0
    %799 = vmatprep.subr.mxu0 0.0
    %800 = vmatpush1.msra.mxu0 0.0
    %801 = vmatprep.subr.mxu0 0.0
    %802 = vmatpush1.msra.mxu0 0.0
    %803 = vmatprep.subr.mxu0 0.0
    %804 = vmatpush1.msra.mxu0 0.0
    %805 = vmatprep.subr.mxu0 0.0
    %806 = vmatpush1.msra.mxu0 0.0
    %807 = vmatprep.subr.mxu0 0.0
    %808 = vmatpush1.msra.mxu0 0.0
    %809 = vmatprep.subr.mxu0 0.0
    %810 = vmatpush1.msra.mxu0 %v215
    %811 = vmatprep.subr.mxu0 0.0
    %812 = vmatpush1.msra.mxu0 %v214
    %813 = vmatprep.subr.mxu0 0.0
    %814 = vmatpush1.msra.mxu0 %v213
    %815 = vmatprep.subr.mxu0 0.0
    %816 = vmatpush1.msra.mxu0 %v212
    %817 = vmatprep.subr.mxu0 0.0
    %818 = vmatpush2.msra.mxu0 0.0
    %819 = vmatprep.subr.mxu0 0.0
    %820 = vmatpush2.msra.mxu0 0.0
    %821 = vmatprep.subr.mxu0 0.0
    %822 = vmatpush2.msra.mxu0 0.0
    %823 = vmatprep.subr.mxu0 0.0
    %824 = vmatpush2.msra.mxu0 0.0
    %825 = vmatprep.subr.mxu0 0.0
    %826 = vmatpush2.msra.mxu0 0.0
    %827 = vmatprep.subr.mxu0 0.0
    %828 = vmatpush2.msra.mxu0 0.0
    %829 = vmatprep.subr.mxu0 0.0
    %830 = vmatpush2.msra.mxu0 0.0
    %831 = vmatprep.subr.mxu0 0.0
    %832 = vmatpush2.msra.mxu0 0.0
    %833 = vmatprep.subr.mxu0 0.0
    %834 = vmatpush2.msra.mxu0 0.0
    %835 = vmatprep.subr.mxu0 0.0
    %836 = vmatpush2.msra.mxu0 0.0
    %837 = vmatprep.subr.mxu0 0.0
    %838 = vmatpush2.msra.mxu0 0.0
    %839 = vmatprep.subr.mxu0 0.0
    %840 = vmatpush2.msra.mxu0 0.0
    %841 = vmatprep.subr.mxu0 0.0
    %842 = vmatpush2.msra.mxu0 0.0
    %843 = vmatprep.subr.mxu0 0.0
    %844 = vmatpush2.msra.mxu0 0.0
    %845 = vmatprep.subr.mxu0 0.0
    %846 = vmatpush2.msra.mxu0 0.0
    %847 = vmatprep.subr.mxu0 0.0
    %848 = vmatpush2.msra.mxu0 0.0
    %849 = vmatprep.mubr.f32.mxu0 0.0
    %850 = vmatmul.mubr.f32.gmra.mxu0 %v683
    %v851 = vpop.f32.mrf.mxu0
    %v852 = vadd.f32 0.0, %v851
    %v853 = vpop.f32.mrf.mxu0
    %854 = vdwg.mxu0
    %v856 = vrot.slane %v852, 4
    %v858 = vadd.f32 %v204, %v856
    %v859 = vxor.u32 %v858, 2147483648
    %v860 = vmul.f32 %v859, 1.442695
    %v861 = vpow.pop %v860
    %v862 = vadd.f32 %v861, 1.0
    %v863 = vrcp.pop %v862
    %v864 = vmul.f32 1.0, %v863
    %v865 = vtanh.pop %v858
    %v867 = vrot.slane %v600, 6
    %v869 = vmul.f32 %v864, %v867
    %871 = vrot.lane.b32.xlu0 %v865, 64
    %v872 = vpop.permute.xlu0 %871
    %v874 = vmul.f32 %v864, %v872
    %876 = vrot.lane.b32.xlu0 %v874, 32
    %v877 = vpop.permute.xlu0 %876
    %v879 = vadd.f32 %v869, %v877
    %v880 = vtanh.pop %v879
    %882 = vrot.lane.b32.xlu0 %v880, 64
    %v883 = vpop.permute.xlu0 %882
    %v885 = vmul.f32 %v864, %v883
    %v886 = vsel %vm231, %v782, 0
    %888 = vmatprep.subr.mxu0 0.0
    %889 = vmatpush1.msra.mxu0 0.0
    %890 = vmatprep.subr.mxu0 0.0
    %891 = vmatpush1.msra.mxu0 0.0
    %892 = vmatprep.subr.mxu0 0.0
    %893 = vmatpush1.msra.mxu0 0.0
    %894 = vmatprep.subr.mxu0 0.0
    %895 = vmatpush1.msra.mxu0 0.0
    %896 = vmatprep.subr.mxu0 0.0
    %897 = vmatpush1.msra.mxu0 0.0
    %898 = vmatprep.subr.mxu0 0.0
    %899 = vmatpush1.msra.mxu0 0.0
    %900 = vmatprep.subr.mxu0 0.0
    %901 = vmatpush1.msra.mxu0 0.0
    %902 = vmatprep.subr.mxu0 0.0
    %903 = vmatpush1.msra.mxu0 0.0
    %904 = vmatprep.subr.mxu0 0.0
    %905 = vmatpush1.msra.mxu0 0.0
    %906 = vmatprep.subr.mxu0 0.0
    %907 = vmatpush1.msra.mxu0 0.0
    %908 = vmatprep.subr.mxu0 0.0
    %909 = vmatpush1.msra.mxu0 0.0
    %910 = vmatprep.subr.mxu0 0.0
    %911 = vmatpush1.msra.mxu0 0.0
    %912 = vmatprep.subr.mxu0 0.0
    %913 = vmatpush1.msra.mxu0 %v223
    %914 = vmatprep.subr.mxu0 0.0
    %915 = vmatpush1.msra.mxu0 %v222
    %916 = vmatprep.subr.mxu0 0.0
    %917 = vmatpush1.msra.mxu0 %v221
    %918 = vmatprep.subr.mxu0 0.0
    %919 = vmatpush1.msra.mxu0 %v220
    %920 = vmatprep.subr.mxu0 0.0
    %921 = vmatpush2.msra.mxu0 0.0
    %922 = vmatprep.subr.mxu0 0.0
    %923 = vmatpush2.msra.mxu0 0.0
    %924 = vmatprep.subr.mxu0 0.0
    %925 = vmatpush2.msra.mxu0 0.0
    %926 = vmatprep.subr.mxu0 0.0
    %927 = vmatpush2.msra.mxu0 0.0
    %928 = vmatprep.subr.mxu0 0.0
    %929 = vmatpush2.msra.mxu0 0.0
    %930 = vmatprep.subr.mxu0 0.0
    %931 = vmatpush2.msra.mxu0 0.0
    %932 = vmatprep.subr.mxu0 0.0
    %933 = vmatpush2.msra.mxu0 0.0
    %934 = vmatprep.subr.mxu0 0.0
    %935 = vmatpush2.msra.mxu0 0.0
    %936 = vmatprep.subr.mxu0 0.0
    %937 = vmatpush2.msra.mxu0 0.0
    %938 = vmatprep.subr.mxu0 0.0
    %939 = vmatpush2.msra.mxu0 0.0
    %940 = vmatprep.subr.mxu0 0.0
    %941 = vmatpush2.msra.mxu0 0.0
    %942 = vmatprep.subr.mxu0 0.0
    %943 = vmatpush2.msra.mxu0 0.0
    %944 = vmatprep.subr.mxu0 0.0
    %945 = vmatpush2.msra.mxu0 0.0
    %946 = vmatprep.subr.mxu0 0.0
    %947 = vmatpush2.msra.mxu0 0.0
    %948 = vmatprep.subr.mxu0 0.0
    %949 = vmatpush2.msra.mxu0 0.0
    %950 = vmatprep.subr.mxu0 0.0
    %951 = vmatpush2.msra.mxu0 0.0
    %952 = vmatprep.mubr.f32.mxu0 0.0
    %953 = vmatmul.mubr.f32.gmra.mxu0 %v886
    %v954 = vpop.f32.mrf.mxu0
    %v955 = vadd.f32 0.0, %v954
    %v956 = vpop.f32.mrf.mxu0
    %957 = vdwg.mxu0
    %v959 = vrot.slane %v885, 4
    %960 = vrot.lane.b32.xlu0 %v959, 32
    %v961 = vpop.permute.xlu0 %960
    %v962 = vsel %vm231, %v961, 0
    %964 = vmatprep.subr.mxu0 0.0
    %965 = vmatpush1.msra.mxu0 0.0
    %966 = vmatprep.subr.mxu0 0.0
    %967 = vmatpush1.msra.mxu0 0.0
    %968 = vmatprep.subr.mxu0 0.0
    %969 = vmatpush1.msra.mxu0 0.0
    %970 = vmatprep.subr.mxu0 0.0
    %971 = vmatpush1.msra.mxu0 0.0
    %972 = vmatprep.subr.mxu0 0.0
    %973 = vmatpush1.msra.mxu0 0.0
    %974 = vmatprep.subr.mxu0 0.0
    %975 = vmatpush1.msra.mxu0 0.0
    %976 = vmatprep.subr.mxu0 0.0
    %977 = vmatpush1.msra.mxu0 0.0
    %978 = vmatprep.subr.mxu0 0.0
    %979 = vmatpush1.msra.mxu0 0.0
    %980 = vmatprep.subr.mxu0 0.0
    %981 = vmatpush1.msra.mxu0 0.0
    %982 = vmatprep.subr.mxu0 0.0
    %983 = vmatpush1.msra.mxu0 0.0
    %984 = vmatprep.subr.mxu0 0.0
    %985 = vmatpush1.msra.mxu0 0.0
    %986 = vmatprep.subr.mxu0 0.0
    %987 = vmatpush1.msra.mxu0 0.0
    %988 = vmatprep.subr.mxu0 0.0
    %989 = vmatpush1.msra.mxu0 %v219
    %990 = vmatprep.subr.mxu0 0.0
    %991 = vmatpush1.msra.mxu0 %v218
    %992 = vmatprep.subr.mxu0 0.0
    %993 = vmatpush1.msra.mxu0 %v217
    %994 = vmatprep.subr.mxu0 0.0
    %995 = vmatpush1.msra.mxu0 %v216
    %996 = vmatprep.subr.mxu0 0.0
    %997 = vmatpush2.msra.mxu0 0.0
    %998 = vmatprep.subr.mxu0 0.0
    %999 = vmatpush2.msra.mxu0 0.0
    %1000 = vmatprep.subr.mxu0 0.0
    %1001 = vmatpush2.msra.mxu0 0.0
    %1002 = vmatprep.subr.mxu0 0.0
    %1003 = vmatpush2.msra.mxu0 0.0
    %1004 = vmatprep.subr.mxu0 0.0
    %1005 = vmatpush2.msra.mxu0 0.0
    %1006 = vmatprep.subr.mxu0 0.0
    %1007 = vmatpush2.msra.mxu0 0.0
    %1008 = vmatprep.subr.mxu0 0.0
    %1009 = vmatpush2.msra.mxu0 0.0
    %1010 = vmatprep.subr.mxu0 0.0
    %1011 = vmatpush2.msra.mxu0 0.0
    %1012 = vmatprep.subr.mxu0 0.0
    %1013 = vmatpush2.msra.mxu0 0.0
    %1014 = vmatprep.subr.mxu0 0.0
    %1015 = vmatpush2.msra.mxu0 0.0
    %1016 = vmatprep.subr.mxu0 0.0
    %1017 = vmatpush2.msra.mxu0 0.0
    %1018 = vmatprep.subr.mxu0 0.0
    %1019 = vmatpush2.msra.mxu0 0.0
    %1020 = vmatprep.subr.mxu0 0.0
    %1021 = vmatpush2.msra.mxu0 0.0
    %1022 = vmatprep.subr.mxu0 0.0
    %1023 = vmatpush2.msra.mxu0 0.0
    %1024 = vmatprep.subr.mxu0 0.0
    %1025 = vmatpush2.msra.mxu0 0.0
    %1026 = vmatprep.subr.mxu0 0.0
    %1027 = vmatpush2.msra.mxu0 0.0
    %1028 = vmatprep.mubr.f32.mxu0 0.0
    %1029 = vmatmul.mubr.f32.gmra.mxu0 %v962
    %v1030 = vpop.f32.mrf.mxu0
    %v1031 = vadd.f32 %v955, %v1030
    %v1032 = vpop.f32.mrf.mxu0
    %1033 = vdwg.mxu0
    %v1034 = vadd.f32 %v1031, %v229
    %v1035 = vxor.u32 %v1034, 2147483648
    %v1036 = vmul.f32 %v1035, 1.442695
    %v1037 = vpow.pop %v1036
    %v1038 = vadd.f32 %v1037, 1.0
    %v1039 = vrcp.pop %v1038
    %v1040 = vmul.f32 1.0, %v1039
    %v1041 = vtanh.pop %v1034
    %v1042 = vmul.f32 %v1040, %v773
    %1044 = vrot.lane.b32.xlu0 %v1041, 64
    %v1045 = vpop.permute.xlu0 %1044
    %v1047 = vmul.f32 %v1040, %v1045
    %1049 = vrot.lane.b32.xlu0 %v1047, 32
    %v1050 = vpop.permute.xlu0 %1049
    %v1052 = vadd.f32 %v1042, %v1050
    %v1053 = vtanh.pop %v1052
    %1055 = vrot.lane.b32.xlu0 %v1053, 64
    %v1056 = vpop.permute.xlu0 %1055
    %v1058 = vmul.f32 %v1040, %v1056
    %1060 = vrot.lane.b32.xlu0 %v1058, 32
    %v1061 = vpop.permute.xlu0 %1060
    %1063 = vst.msk [vmem:[#allocation2 + $0x4] sm:$0x3] %vm504, %v1061
    %1064 = vmatprep.subr.mxu0 0.0
    %1065 = vmatpush1.msra.mxu0 0.0
    %1066 = vmatprep.subr.mxu0 0.0
    %1067 = vmatpush1.msra.mxu0 0.0
    %1068 = vmatprep.subr.mxu0 0.0
    %1069 = vmatpush1.msra.mxu0 0.0
    %1070 = vmatprep.subr.mxu0 0.0
    %1071 = vmatpush1.msra.mxu0 0.0
    %1072 = vmatprep.subr.mxu0 0.0
    %1073 = vmatpush1.msra.mxu0 0.0
    %1074 = vmatprep.subr.mxu0 0.0
    %1075 = vmatpush1.msra.mxu0 0.0
    %1076 = vmatprep.subr.mxu0 0.0
    %1077 = vmatpush1.msra.mxu0 0.0
    %1078 = vmatprep.subr.mxu0 0.0
    %1079 = vmatpush1.msra.mxu0 0.0
    %1080 = vmatprep.subr.mxu0 0.0
    %1081 = vmatpush1.msra.mxu0 0.0
    %1082 = vmatprep.subr.mxu0 0.0
    %1083 = vmatpush1.msra.mxu0 0.0
    %1084 = vmatprep.subr.mxu0 0.0
    %1085 = vmatpush1.msra.mxu0 0.0
    %1086 = vmatprep.subr.mxu0 0.0
    %1087 = vmatpush1.msra.mxu0 0.0
    %1088 = vmatprep.subr.mxu0 0.0
    %1089 = vmatpush1.msra.mxu0 %v215
    %1090 = vmatprep.subr.mxu0 0.0
    %1091 = vmatpush1.msra.mxu0 %v214
    %1092 = vmatprep.subr.mxu0 0.0
    %1093 = vmatpush1.msra.mxu0 %v213
    %1094 = vmatprep.subr.mxu0 0.0
    %1095 = vmatpush1.msra.mxu0 %v212
    %1096 = vmatprep.subr.mxu0 0.0
    %1097 = vmatpush2.msra.mxu0 0.0
    %1098 = vmatprep.subr.mxu0 0.0
    %1099 = vmatpush2.msra.mxu0 0.0
    %1100 = vmatprep.subr.mxu0 0.0
    %1101 = vmatpush2.msra.mxu0 0.0
    %1102 = vmatprep.subr.mxu0 0.0
    %1103 = vmatpush2.msra.mxu0 0.0
    %1104 = vmatprep.subr.mxu0 0.0
    %1105 = vmatpush2.msra.mxu0 0.0
    %1106 = vmatprep.subr.mxu0 0.0
    %1107 = vmatpush2.msra.mxu0 0.0
    %1108 = vmatprep.subr.mxu0 0.0
    %1109 = vmatpush2.msra.mxu0 0.0
    %1110 = vmatprep.subr.mxu0 0.0
    %1111 = vmatpush2.msra.mxu0 0.0
    %1112 = vmatprep.subr.mxu0 0.0
    %1113 = vmatpush2.msra.mxu0 0.0
    %1114 = vmatprep.subr.mxu0 0.0
    %1115 = vmatpush2.msra.mxu0 0.0
    %1116 = vmatprep.subr.mxu0 0.0
    %1117 = vmatpush2.msra.mxu0 0.0
    %1118 = vmatprep.subr.mxu0 0.0
    %1119 = vmatpush2.msra.mxu0 0.0
    %1120 = vmatprep.subr.mxu0 0.0
    %1121 = vmatpush2.msra.mxu0 0.0
    %1122 = vmatprep.subr.mxu0 0.0
    %1123 = vmatpush2.msra.mxu0 0.0
    %1124 = vmatprep.subr.mxu0 0.0
    %1125 = vmatpush2.msra.mxu0 0.0
    %1126 = vmatprep.subr.mxu0 0.0
    %1127 = vmatpush2.msra.mxu0 0.0
    %1128 = vmatprep.mubr.f32.mxu0 0.0
    %1129 = vmatmul.mubr.f32.gmra.mxu0 %v962
    %v1130 = vpop.f32.mrf.mxu0
    %v1131 = vadd.f32 0.0, %v1130
    %v1132 = vpop.f32.mrf.mxu0
    %1133 = vdwg.mxu0
    %v1135 = vrot.slane %v1131, 2
    %v1137 = vadd.f32 %v204, %v1135
    %v1138 = vxor.u32 %v1137, 2147483648
    %v1139 = vmul.f32 %v1138, 1.442695
    %v1140 = vpow.pop %v1139
    %v1141 = vadd.f32 %v1140, 1.0
    %v1142 = vrcp.pop %v1141
    %v1143 = vmul.f32 1.0, %v1142
    %v1144 = vtanh.pop %v1137
    %v1146 = vrot.slane %v879, 6
    %v1148 = vmul.f32 %v1143, %v1146
    %1150 = vrot.lane.b32.xlu0 %v1144, 64
    %v1151 = vpop.permute.xlu0 %1150
    %v1153 = vmul.f32 %v1143, %v1151
    %1155 = vrot.lane.b32.xlu0 %v1153, 32
    %v1156 = vpop.permute.xlu0 %1155
    %v1158 = vadd.f32 %v1148, %v1156
    %v1159 = vtanh.pop %v1158
    %1161 = vrot.lane.b32.xlu0 %v1159, 64
    %v1162 = vpop.permute.xlu0 %1161
    %v1164 = vmul.f32 %v1143, %v1162
    %v1165 = vsel %vm231, %v1061, 0
    %1167 = vmatprep.subr.mxu0 0.0
    %1168 = vmatpush1.msra.mxu0 0.0
    %1169 = vmatprep.subr.mxu0 0.0
    %1170 = vmatpush1.msra.mxu0 0.0
    %1171 = vmatprep.subr.mxu0 0.0
    %1172 = vmatpush1.msra.mxu0 0.0
    %1173 = vmatprep.subr.mxu0 0.0
    %1174 = vmatpush1.msra.mxu0 0.0
    %1175 = vmatprep.subr.mxu0 0.0
    %1176 = vmatpush1.msra.mxu0 0.0
    %1177 = vmatprep.subr.mxu0 0.0
    %1178 = vmatpush1.msra.mxu0 0.0
    %1179 = vmatprep.subr.mxu0 0.0
    %1180 = vmatpush1.msra.mxu0 0.0
    %1181 = vmatprep.subr.mxu0 0.0
    %1182 = vmatpush1.msra.mxu0 0.0
    %1183 = vmatprep.subr.mxu0 0.0
    %1184 = vmatpush1.msra.mxu0 0.0
    %1185 = vmatprep.subr.mxu0 0.0
    %1186 = vmatpush1.msra.mxu0 0.0
    %1187 = vmatprep.subr.mxu0 0.0
    %1188 = vmatpush1.msra.mxu0 0.0
    %1189 = vmatprep.subr.mxu0 0.0
    %1190 = vmatpush1.msra.mxu0 0.0
    %1191 = vmatprep.subr.mxu0 0.0
    %1192 = vmatpush1.msra.mxu0 %v223
    %1193 = vmatprep.subr.mxu0 0.0
    %1194 = vmatpush1.msra.mxu0 %v222
    %1195 = vmatprep.subr.mxu0 0.0
    %1196 = vmatpush1.msra.mxu0 %v221
    %1197 = vmatprep.subr.mxu0 0.0
    %1198 = vmatpush1.msra.mxu0 %v220
    %1199 = vmatprep.subr.mxu0 0.0
    %1200 = vmatpush2.msra.mxu0 0.0
    %1201 = vmatprep.subr.mxu0 0.0
    %1202 = vmatpush2.msra.mxu0 0.0
    %1203 = vmatprep.subr.mxu0 0.0
    %1204 = vmatpush2.msra.mxu0 0.0
    %1205 = vmatprep.subr.mxu0 0.0
    %1206 = vmatpush2.msra.mxu0 0.0
    %1207 = vmatprep.subr.mxu0 0.0
    %1208 = vmatpush2.msra.mxu0 0.0
    %1209 = vmatprep.subr.mxu0 0.0
    %1210 = vmatpush2.msra.mxu0 0.0
    %1211 = vmatprep.subr.mxu0 0.0
    %1212 = vmatpush2.msra.mxu0 0.0
    %1213 = vmatprep.subr.mxu0 0.0
    %1214 = vmatpush2.msra.mxu0 0.0
    %1215 = vmatprep.subr.mxu0 0.0
    %1216 = vmatpush2.msra.mxu0 0.0
    %1217 = vmatprep.subr.mxu0 0.0
    %1218 = vmatpush2.msra.mxu0 0.0
    %1219 = vmatprep.subr.mxu0 0.0
    %1220 = vmatpush2.msra.mxu0 0.0
    %1221 = vmatprep.subr.mxu0 0.0
    %1222 = vmatpush2.msra.mxu0 0.0
    %1223 = vmatprep.subr.mxu0 0.0
    %1224 = vmatpush2.msra.mxu0 0.0
    %1225 = vmatprep.subr.mxu0 0.0
    %1226 = vmatpush2.msra.mxu0 0.0
    %1227 = vmatprep.subr.mxu0 0.0
    %1228 = vmatpush2.msra.mxu0 0.0
    %1229 = vmatprep.subr.mxu0 0.0
    %1230 = vmatpush2.msra.mxu0 0.0
    %1231 = vmatprep.mubr.f32.mxu0 0.0
    %1232 = vmatmul.mubr.f32.gmra.mxu0 %v1165
    %v1233 = vpop.f32.mrf.mxu0
    %v1234 = vadd.f32 0.0, %v1233
    %v1235 = vpop.f32.mrf.mxu0
    %1236 = vdwg.mxu0
    %v1238 = vrot.slane %v1164, 6
    %1239 = vrot.lane.b32.xlu0 %v1238, 32
    %v1240 = vpop.permute.xlu0 %1239
    %v1241 = vsel %vm231, %v1240, 0
    %1243 = vmatprep.subr.mxu0 0.0
    %1244 = vmatpush1.msra.mxu0 0.0
    %1245 = vmatprep.subr.mxu0 0.0
    %1246 = vmatpush1.msra.mxu0 0.0
    %1247 = vmatprep.subr.mxu0 0.0
    %1248 = vmatpush1.msra.mxu0 0.0
    %1249 = vmatprep.subr.mxu0 0.0
    %1250 = vmatpush1.msra.mxu0 0.0
    %1251 = vmatprep.subr.mxu0 0.0
    %1252 = vmatpush1.msra.mxu0 0.0
    %1253 = vmatprep.subr.mxu0 0.0
    %1254 = vmatpush1.msra.mxu0 0.0
    %1255 = vmatprep.subr.mxu0 0.0
    %1256 = vmatpush1.msra.mxu0 0.0
    %1257 = vmatprep.subr.mxu0 0.0
    %1258 = vmatpush1.msra.mxu0 0.0
    %1259 = vmatprep.subr.mxu0 0.0
    %1260 = vmatpush1.msra.mxu0 0.0
    %1261 = vmatprep.subr.mxu0 0.0
    %1262 = vmatpush1.msra.mxu0 0.0
    %1263 = vmatprep.subr.mxu0 0.0
    %1264 = vmatpush1.msra.mxu0 0.0
    %1265 = vmatprep.subr.mxu0 0.0
    %1266 = vmatpush1.msra.mxu0 0.0
    %1267 = vmatprep.subr.mxu0 0.0
    %1268 = vmatpush1.msra.mxu0 %v219
    %1269 = vmatprep.subr.mxu0 0.0
    %1270 = vmatpush1.msra.mxu0 %v218
    %1271 = vmatprep.subr.mxu0 0.0
    %1272 = vmatpush1.msra.mxu0 %v217
    %1273 = vmatprep.subr.mxu0 0.0
    %1274 = vmatpush1.msra.mxu0 %v216
    %1275 = vmatprep.subr.mxu0 0.0
    %1276 = vmatpush2.msra.mxu0 0.0
    %1277 = vmatprep.subr.mxu0 0.0
    %1278 = vmatpush2.msra.mxu0 0.0
    %1279 = vmatprep.subr.mxu0 0.0
    %1280 = vmatpush2.msra.mxu0 0.0
    %1281 = vmatprep.subr.mxu0 0.0
    %1282 = vmatpush2.msra.mxu0 0.0
    %1283 = vmatprep.subr.mxu0 0.0
    %1284 = vmatpush2.msra.mxu0 0.0
    %1285 = vmatprep.subr.mxu0 0.0
    %1286 = vmatpush2.msra.mxu0 0.0
    %1287 = vmatprep.subr.mxu0 0.0
    %1288 = vmatpush2.msra.mxu0 0.0
    %1289 = vmatprep.subr.mxu0 0.0
    %1290 = vmatpush2.msra.mxu0 0.0
    %1291 = vmatprep.subr.mxu0 0.0
    %1292 = vmatpush2.msra.mxu0 0.0
    %1293 = vmatprep.subr.mxu0 0.0
    %1294 = vmatpush2.msra.mxu0 0.0
    %1295 = vmatprep.subr.mxu0 0.0
    %1296 = vmatpush2.msra.mxu0 0.0
    %1297 = vmatprep.subr.mxu0 0.0
    %1298 = vmatpush2.msra.mxu0 0.0
    %1299 = vmatprep.subr.mxu0 0.0
    %1300 = vmatpush2.msra.mxu0 0.0
    %1301 = vmatprep.subr.mxu0 0.0
    %1302 = vmatpush2.msra.mxu0 0.0
    %1303 = vmatprep.subr.mxu0 0.0
    %1304 = vmatpush2.msra.mxu0 0.0
    %1305 = vmatprep.subr.mxu0 0.0
    %1306 = vmatpush2.msra.mxu0 0.0
    %1307 = vmatprep.mubr.f32.mxu0 0.0
    %1308 = vmatmul.mubr.f32.gmra.mxu0 %v1241
    %v1309 = vpop.f32.mrf.mxu0
    %v1310 = vadd.f32 %v1234, %v1309
    %v1311 = vpop.f32.mrf.mxu0
    %1312 = vdwg.mxu0
    %v1313 = vadd.f32 %v1310, %v229
    %v1314 = vxor.u32 %v1313, 2147483648
    %v1315 = vmul.f32 %v1314, 1.442695
    %v1316 = vpow.pop %v1315
    %v1317 = vadd.f32 %v1316, 1.0
    %v1318 = vrcp.pop %v1317
    %v1319 = vmul.f32 1.0, %v1318
    %v1320 = vtanh.pop %v1313
    %v1321 = vmul.f32 %v1319, %v1052
    %1323 = vrot.lane.b32.xlu0 %v1320, 64
    %v1324 = vpop.permute.xlu0 %1323
    %v1326 = vmul.f32 %v1319, %v1324
    %1328 = vrot.lane.b32.xlu0 %v1326, 32
    %v1329 = vpop.permute.xlu0 %1328
    %v1331 = vadd.f32 %v1321, %v1329
    %v1332 = vtanh.pop %v1331
    %1334 = vrot.lane.b32.xlu0 %v1332, 64
    %v1335 = vpop.permute.xlu0 %1334
    %v1337 = vmul.f32 %v1319, %v1335
    %1339 = vrot.lane.b32.xlu0 %v1337, 32
    %v1340 = vpop.permute.xlu0 %1339
    %1342 = vst.msk [vmem:[#allocation2 + $0x6] sm:$0x3] %vm504, %v1340
    %1343 = vmatprep.subr.mxu0 0.0
    %1344 = vmatpush1.msra.mxu0 0.0
    %1345 = vmatprep.subr.mxu0 0.0
    %1346 = vmatpush1.msra.mxu0 0.0
    %1347 = vmatprep.subr.mxu0 0.0
    %1348 = vmatpush1.msra.mxu0 0.0
    %1349 = vmatprep.subr.mxu0 0.0
    %1350 = vmatpush1.msra.mxu0 0.0
    %1351 = vmatprep.subr.mxu0 0.0
    %1352 = vmatpush1.msra.mxu0 0.0
    %1353 = vmatprep.subr.mxu0 0.0
    %1354 = vmatpush1.msra.mxu0 0.0
    %1355 = vmatprep.subr.mxu0 0.0
    %1356 = vmatpush1.msra.mxu0 0.0
    %1357 = vmatprep.subr.mxu0 0.0
    %1358 = vmatpush1.msra.mxu0 0.0
    %1359 = vmatprep.subr.mxu0 0.0
    %1360 = vmatpush1.msra.mxu0 0.0
    %1361 = vmatprep.subr.mxu0 0.0
    %1362 = vmatpush1.msra.mxu0 0.0
    %1363 = vmatprep.subr.mxu0 0.0
    %1364 = vmatpush1.msra.mxu0 0.0
    %1365 = vmatprep.subr.mxu0 0.0
    %1366 = vmatpush1.msra.mxu0 0.0
    %1367 = vmatprep.subr.mxu0 0.0
    %1368 = vmatpush1.msra.mxu0 %v215
    %1369 = vmatprep.subr.mxu0 0.0
    %1370 = vmatpush1.msra.mxu0 %v214
    %1371 = vmatprep.subr.mxu0 0.0
    %1372 = vmatpush1.msra.mxu0 %v213
    %1373 = vmatprep.subr.mxu0 0.0
    %1374 = vmatpush1.msra.mxu0 %v212
    %1375 = vmatprep.subr.mxu0 0.0
    %1376 = vmatpush2.msra.mxu0 0.0
    %1377 = vmatprep.subr.mxu0 0.0
    %1378 = vmatpush2.msra.mxu0 0.0
    %1379 = vmatprep.subr.mxu0 0.0
    %1380 = vmatpush2.msra.mxu0 0.0
    %1381 = vmatprep.subr.mxu0 0.0
    %1382 = vmatpush2.msra.mxu0 0.0
    %1383 = vmatprep.subr.mxu0 0.0
    %1384 = vmatpush2.msra.mxu0 0.0
    %1385 = vmatprep.subr.mxu0 0.0
    %1386 = vmatpush2.msra.mxu0 0.0
    %1387 = vmatprep.subr.mxu0 0.0
    %1388 = vmatpush2.msra.mxu0 0.0
    %1389 = vmatprep.subr.mxu0 0.0
    %1390 = vmatpush2.msra.mxu0 0.0
    %1391 = vmatprep.subr.mxu0 0.0
    %1392 = vmatpush2.msra.mxu0 0.0
    %1393 = vmatprep.subr.mxu0 0.0
    %1394 = vmatpush2.msra.mxu0 0.0
    %1395 = vmatprep.subr.mxu0 0.0
    %1396 = vmatpush2.msra.mxu0 0.0
    %1397 = vmatprep.subr.mxu0 0.0
    %1398 = vmatpush2.msra.mxu0 0.0
    %1399 = vmatprep.subr.mxu0 0.0
    %1400 = vmatpush2.msra.mxu0 0.0
    %1401 = vmatprep.subr.mxu0 0.0
    %1402 = vmatpush2.msra.mxu0 0.0
    %1403 = vmatprep.subr.mxu0 0.0
    %1404 = vmatpush2.msra.mxu0 0.0
    %1405 = vmatprep.subr.mxu0 0.0
    %1406 = vmatpush2.msra.mxu0 0.0
    %1407 = vmatprep.mubr.f32.mxu0 0.0
    %1408 = vmatmul.mubr.f32.gmra.mxu0 %v1241
    %v1409 = vpop.f32.mrf.mxu0
    %v1410 = vadd.f32 0.0, %v1409
    %v1411 = vpop.f32.mrf.mxu0
    %1412 = vdwg.mxu0
    %v1413 = vadd.f32 %v209, %v1410
    %v1414 = vxor.u32 %v1413, 2147483648
    %v1415 = vmul.f32 %v1414, 1.442695
    %v1416 = vpow.pop %v1415
    %v1417 = vadd.f32 %v1416, 1.0
    %v1418 = vrcp.pop %v1417
    %v1419 = vmul.f32 1.0, %v1418
    %v1420 = vtanh.pop %v1413
    %v1422 = vrot.slane %v1158, 6
    %v1424 = vmul.f32 %v1419, %v1422
    %1426 = vrot.lane.b32.xlu0 %v1420, 64
    %v1427 = vpop.permute.xlu0 %1426
    %v1429 = vmul.f32 %v1419, %v1427
    %1431 = vrot.lane.b32.xlu0 %v1429, 32
    %v1432 = vpop.permute.xlu0 %1431
    %v1434 = vadd.f32 %v1424, %v1432
    %v1435 = vtanh.pop %v1434
    %1437 = vrot.lane.b32.xlu0 %v1435, 64
    %v1438 = vpop.permute.xlu0 %1437
    %v1440 = vmul.f32 %v1419, %v1438
    %v1441 = vsel %vm231, %v1340, 0
    %1443 = vmatprep.subr.mxu0 0.0
    %1444 = vmatpush1.msra.mxu0 0.0
    %1445 = vmatprep.subr.mxu0 0.0
    %1446 = vmatpush1.msra.mxu0 0.0
    %1447 = vmatprep.subr.mxu0 0.0
    %1448 = vmatpush1.msra.mxu0 0.0
    %1449 = vmatprep.subr.mxu0 0.0
    %1450 = vmatpush1.msra.mxu0 0.0
    %1451 = vmatprep.subr.mxu0 0.0
    %1452 = vmatpush1.msra.mxu0 0.0
    %1453 = vmatprep.subr.mxu0 0.0
    %1454 = vmatpush1.msra.mxu0 0.0
    %1455 = vmatprep.subr.mxu0 0.0
    %1456 = vmatpush1.msra.mxu0 0.0
    %1457 = vmatprep.subr.mxu0 0.0
    %1458 = vmatpush1.msra.mxu0 0.0
    %1459 = vmatprep.subr.mxu0 0.0
    %1460 = vmatpush1.msra.mxu0 0.0
    %1461 = vmatprep.subr.mxu0 0.0
    %1462 = vmatpush1.msra.mxu0 0.0
    %1463 = vmatprep.subr.mxu0 0.0
    %1464 = vmatpush1.msra.mxu0 0.0
    %1465 = vmatprep.subr.mxu0 0.0
    %1466 = vmatpush1.msra.mxu0 0.0
    %1467 = vmatprep.subr.mxu0 0.0
    %1468 = vmatpush1.msra.mxu0 %v223
    %1469 = vmatprep.subr.mxu0 0.0
    %1470 = vmatpush1.msra.mxu0 %v222
    %1471 = vmatprep.subr.mxu0 0.0
    %1472 = vmatpush1.msra.mxu0 %v221
    %1473 = vmatprep.subr.mxu0 0.0
    %1474 = vmatpush1.msra.mxu0 %v220
    %1475 = vmatprep.subr.mxu0 0.0
    %1476 = vmatpush2.msra.mxu0 0.0
    %1477 = vmatprep.subr.mxu0 0.0
    %1478 = vmatpush2.msra.mxu0 0.0
    %1479 = vmatprep.subr.mxu0 0.0
    %1480 = vmatpush2.msra.mxu0 0.0
    %1481 = vmatprep.subr.mxu0 0.0
    %1482 = vmatpush2.msra.mxu0 0.0
    %1483 = vmatprep.subr.mxu0 0.0
    %1484 = vmatpush2.msra.mxu0 0.0
    %1485 = vmatprep.subr.mxu0 0.0
    %1486 = vmatpush2.msra.mxu0 0.0
    %1487 = vmatprep.subr.mxu0 0.0
    %1488 = vmatpush2.msra.mxu0 0.0
    %1489 = vmatprep.subr.mxu0 0.0
    %1490 = vmatpush2.msra.mxu0 0.0
    %1491 = vmatprep.subr.mxu0 0.0
    %1492 = vmatpush2.msra.mxu0 0.0
    %1493 = vmatprep.subr.mxu0 0.0
    %1494 = vmatpush2.msra.mxu0 0.0
    %1495 = vmatprep.subr.mxu0 0.0
    %1496 = vmatpush2.msra.mxu0 0.0
    %1497 = vmatprep.subr.mxu0 0.0
    %1498 = vmatpush2.msra.mxu0 0.0
    %1499 = vmatprep.subr.mxu0 0.0
    %1500 = vmatpush2.msra.mxu0 0.0
    %1501 = vmatprep.subr.mxu0 0.0
    %1502 = vmatpush2.msra.mxu0 0.0
    %1503 = vmatprep.subr.mxu0 0.0
    %1504 = vmatpush2.msra.mxu0 0.0
    %1505 = vmatprep.subr.mxu0 0.0
    %1506 = vmatpush2.msra.mxu0 0.0
    %1507 = vmatprep.mubr.f32.mxu0 0.0
    %1508 = vmatmul.mubr.f32.gmra.mxu0 %v1441
    %v1509 = vpop.f32.mrf.mxu0
    %v1510 = vadd.f32 0.0, %v1509
    %v1511 = vpop.f32.mrf.mxu0
    %1512 = vdwg.mxu0
    %1514 = vrot.lane.b32.xlu0 %v1440, 32
    %v1515 = vpop.permute.xlu0 %1514
    %v1516 = vsel %vm231, %v1515, 0
    %1518 = vmatprep.subr.mxu0 0.0
    %1519 = vmatpush1.msra.mxu0 0.0
    %1520 = vmatprep.subr.mxu0 0.0
    %1521 = vmatpush1.msra.mxu0 0.0
    %1522 = vmatprep.subr.mxu0 0.0
    %1523 = vmatpush1.msra.mxu0 0.0
    %1524 = vmatprep.subr.mxu0 0.0
    %1525 = vmatpush1.msra.mxu0 0.0
    %1526 = vmatprep.subr.mxu0 0.0
    %1527 = vmatpush1.msra.mxu0 0.0
    %1528 = vmatprep.subr.mxu0 0.0
    %1529 = vmatpush1.msra.mxu0 0.0
    %1530 = vmatprep.subr.mxu0 0.0
    %1531 = vmatpush1.msra.mxu0 0.0
    %1532 = vmatprep.subr.mxu0 0.0
    %1533 = vmatpush1.msra.mxu0 0.0
    %1534 = vmatprep.subr.mxu0 0.0
    %1535 = vmatpush1.msra.mxu0 0.0
    %1536 = vmatprep.subr.mxu0 0.0
    %1537 = vmatpush1.msra.mxu0 0.0
    %1538 = vmatprep.subr.mxu0 0.0
    %1539 = vmatpush1.msra.mxu0 0.0
    %1540 = vmatprep.subr.mxu0 0.0
    %1541 = vmatpush1.msra.mxu0 0.0
    %1542 = vmatprep.subr.mxu0 0.0
    %1543 = vmatpush1.msra.mxu0 %v219
    %1544 = vmatprep.subr.mxu0 0.0
    %1545 = vmatpush1.msra.mxu0 %v218
    %1546 = vmatprep.subr.mxu0 0.0
    %1547 = vmatpush1.msra.mxu0 %v217
    %1548 = vmatprep.subr.mxu0 0.0
    %1549 = vmatpush1.msra.mxu0 %v216
    %1550 = vmatprep.subr.mxu0 0.0
    %1551 = vmatpush2.msra.mxu0 0.0
    %1552 = vmatprep.subr.mxu0 0.0
    %1553 = vmatpush2.msra.mxu0 0.0
    %1554 = vmatprep.subr.mxu0 0.0
    %1555 = vmatpush2.msra.mxu0 0.0
    %1556 = vmatprep.subr.mxu0 0.0
    %1557 = vmatpush2.msra.mxu0 0.0
    %1558 = vmatprep.subr.mxu0 0.0
    %1559 = vmatpush2.msra.mxu0 0.0
    %1560 = vmatprep.subr.mxu0 0.0
    %1561 = vmatpush2.msra.mxu0 0.0
    %1562 = vmatprep.subr.mxu0 0.0
    %1563 = vmatpush2.msra.mxu0 0.0
    %1564 = vmatprep.subr.mxu0 0.0
    %1565 = vmatpush2.msra.mxu0 0.0
    %1566 = vmatprep.subr.mxu0 0.0
    %1567 = vmatpush2.msra.mxu0 0.0
    %1568 = vmatprep.subr.mxu0 0.0
    %1569 = vmatpush2.msra.mxu0 0.0
    %1570 = vmatprep.subr.mxu0 0.0
    %1571 = vmatpush2.msra.mxu0 0.0
    %1572 = vmatprep.subr.mxu0 0.0
    %1573 = vmatpush2.msra.mxu0 0.0
    %1574 = vmatprep.subr.mxu0 0.0
    %1575 = vmatpush2.msra.mxu0 0.0
    %1576 = vmatprep.subr.mxu0 0.0
    %1577 = vmatpush2.msra.mxu0 0.0
    %1578 = vmatprep.subr.mxu0 0.0
    %1579 = vmatpush2.msra.mxu0 0.0
    %1580 = vmatprep.subr.mxu0 0.0
    %1581 = vmatpush2.msra.mxu0 0.0
    %1582 = vmatprep.mubr.f32.mxu0 0.0
    %1583 = vmatmul.mubr.f32.gmra.mxu0 %v1516
    %v1584 = vpop.f32.mrf.mxu0
    %v1585 = vadd.f32 %v1510, %v1584
    %v1586 = vpop.f32.mrf.mxu0
    %1587 = vdwg.mxu0
    %v1588 = vadd.f32 %v1585, %v229
    %v1589 = vxor.u32 %v1588, 2147483648
    %v1590 = vmul.f32 %v1589, 1.442695
    %v1591 = vpow.pop %v1590
    %v1592 = vadd.f32 %v1591, 1.0
    %v1593 = vrcp.pop %v1592
    %v1594 = vmul.f32 1.0, %v1593
    %v1595 = vtanh.pop %v1588
    %v1596 = vmul.f32 %v1594, %v1331
    %1598 = vrot.lane.b32.xlu0 %v1595, 64
    %v1599 = vpop.permute.xlu0 %1598
    %v1601 = vmul.f32 %v1594, %v1599
    %1603 = vrot.lane.b32.xlu0 %v1601, 32
    %v1604 = vpop.permute.xlu0 %1603
    %v1606 = vadd.f32 %v1596, %v1604
    %v1607 = vtanh.pop %v1606
    %1609 = vrot.lane.b32.xlu0 %v1607, 64
    %v1610 = vpop.permute.xlu0 %1609
    %v1612 = vmul.f32 %v1594, %v1610
    %1614 = vrot.lane.b32.xlu0 %v1612, 32
    %v1615 = vpop.permute.xlu0 %1614
    %1617 = vst.msk [vmem:[#allocation2 + $0x8] sm:$0x3] %vm504, %v1615
    %1618 = vmatprep.subr.mxu0 0.0
    %1619 = vmatpush1.msra.mxu0 0.0
    %1620 = vmatprep.subr.mxu0 0.0
    %1621 = vmatpush1.msra.mxu0 0.0
    %1622 = vmatprep.subr.mxu0 0.0
    %1623 = vmatpush1.msra.mxu0 0.0
    %1624 = vmatprep.subr.mxu0 0.0
    %1625 = vmatpush1.msra.mxu0 0.0
    %1626 = vmatprep.subr.mxu0 0.0
    %1627 = vmatpush1.msra.mxu0 0.0
    %1628 = vmatprep.subr.mxu0 0.0
    %1629 = vmatpush1.msra.mxu0 0.0
    %1630 = vmatprep.subr.mxu0 0.0
    %1631 = vmatpush1.msra.mxu0 0.0
    %1632 = vmatprep.subr.mxu0 0.0
    %1633 = vmatpush1.msra.mxu0 0.0
    %1634 = vmatprep.subr.mxu0 0.0
    %1635 = vmatpush1.msra.mxu0 0.0
    %1636 = vmatprep.subr.mxu0 0.0
    %1637 = vmatpush1.msra.mxu0 0.0
    %1638 = vmatprep.subr.mxu0 0.0
    %1639 = vmatpush1.msra.mxu0 0.0
    %1640 = vmatprep.subr.mxu0 0.0
    %1641 = vmatpush1.msra.mxu0 0.0
    %1642 = vmatprep.subr.mxu0 0.0
    %1643 = vmatpush1.msra.mxu0 %v215
    %1644 = vmatprep.subr.mxu0 0.0
    %1645 = vmatpush1.msra.mxu0 %v214
    %1646 = vmatprep.subr.mxu0 0.0
    %1647 = vmatpush1.msra.mxu0 %v213
    %1648 = vmatprep.subr.mxu0 0.0
    %1649 = vmatpush1.msra.mxu0 %v212
    %1650 = vmatprep.subr.mxu0 0.0
    %1651 = vmatpush2.msra.mxu0 0.0
    %1652 = vmatprep.subr.mxu0 0.0
    %1653 = vmatpush2.msra.mxu0 0.0
    %1654 = vmatprep.subr.mxu0 0.0
    %1655 = vmatpush2.msra.mxu0 0.0
    %1656 = vmatprep.subr.mxu0 0.0
    %1657 = vmatpush2.msra.mxu0 0.0
    %1658 = vmatprep.subr.mxu0 0.0
    %1659 = vmatpush2.msra.mxu0 0.0
    %1660 = vmatprep.subr.mxu0 0.0
    %1661 = vmatpush2.msra.mxu0 0.0
    %1662 = vmatprep.subr.mxu0 0.0
    %1663 = vmatpush2.msra.mxu0 0.0
    %1664 = vmatprep.subr.mxu0 0.0
    %1665 = vmatpush2.msra.mxu0 0.0
    %1666 = vmatprep.subr.mxu0 0.0
    %1667 = vmatpush2.msra.mxu0 0.0
    %1668 = vmatprep.subr.mxu0 0.0
    %1669 = vmatpush2.msra.mxu0 0.0
    %1670 = vmatprep.subr.mxu0 0.0
    %1671 = vmatpush2.msra.mxu0 0.0
    %1672 = vmatprep.subr.mxu0 0.0
    %1673 = vmatpush2.msra.mxu0 0.0
    %1674 = vmatprep.subr.mxu0 0.0
    %1675 = vmatpush2.msra.mxu0 0.0
    %1676 = vmatprep.subr.mxu0 0.0
    %1677 = vmatpush2.msra.mxu0 0.0
    %1678 = vmatprep.subr.mxu0 0.0
    %1679 = vmatpush2.msra.mxu0 0.0
    %1680 = vmatprep.subr.mxu0 0.0
    %1681 = vmatpush2.msra.mxu0 0.0
    %1682 = vmatprep.mubr.f32.mxu0 0.0
    %1683 = vmatmul.mubr.f32.gmra.mxu0 %v1516
    %v1684 = vpop.f32.mrf.mxu0
    %v1685 = vadd.f32 0.0, %v1684
    %v1686 = vpop.f32.mrf.mxu0
    %1687 = vdwg.mxu0
    %v1689 = vrot.slane %v1685, 6
    %v1691 = vadd.f32 %v209, %v1689
    %v1692 = vxor.u32 %v1691, 2147483648
    %v1693 = vmul.f32 %v1692, 1.442695
    %v1694 = vpow.pop %v1693
    %v1695 = vadd.f32 %v1694, 1.0
    %v1696 = vrcp.pop %v1695
    %v1697 = vmul.f32 1.0, %v1696
    %v1698 = vtanh.pop %v1691
    %v1700 = vrot.slane %v1434, 6
    %v1702 = vmul.f32 %v1697, %v1700
    %1704 = vrot.lane.b32.xlu0 %v1698, 64
    %v1705 = vpop.permute.xlu0 %1704
    %v1707 = vmul.f32 %v1697, %v1705
    %1709 = vrot.lane.b32.xlu0 %v1707, 32
    %v1710 = vpop.permute.xlu0 %1709
    %v1712 = vadd.f32 %v1702, %v1710
    %v1713 = vtanh.pop %v1712
    %1715 = vrot.lane.b32.xlu0 %v1713, 64
    %v1716 = vpop.permute.xlu0 %1715
    %v1718 = vmul.f32 %v1697, %v1716
    %v1719 = vsel %vm231, %v1615, 0
    %1721 = vmatprep.subr.mxu0 0.0
    %1722 = vmatpush1.msra.mxu0 0.0
    %1723 = vmatprep.subr.mxu0 0.0
    %1724 = vmatpush1.msra.mxu0 0.0
    %1725 = vmatprep.subr.mxu0 0.0
    %1726 = vmatpush1.msra.mxu0 0.0
    %1727 = vmatprep.subr.mxu0 0.0
    %1728 = vmatpush1.msra.mxu0 0.0
    %1729 = vmatprep.subr.mxu0 0.0
    %1730 = vmatpush1.msra.mxu0 0.0
    %1731 = vmatprep.subr.mxu0 0.0
    %1732 = vmatpush1.msra.mxu0 0.0
    %1733 = vmatprep.subr.mxu0 0.0
    %1734 = vmatpush1.msra.mxu0 0.0
    %1735 = vmatprep.subr.mxu0 0.0
    %1736 = vmatpush1.msra.mxu0 0.0
    %1737 = vmatprep.subr.mxu0 0.0
    %1738 = vmatpush1.msra.mxu0 0.0
    %1739 = vmatprep.subr.mxu0 0.0
    %1740 = vmatpush1.msra.mxu0 0.0
    %1741 = vmatprep.subr.mxu0 0.0
    %1742 = vmatpush1.msra.mxu0 0.0
    %1743 = vmatprep.subr.mxu0 0.0
    %1744 = vmatpush1.msra.mxu0 0.0
    %1745 = vmatprep.subr.mxu0 0.0
    %1746 = vmatpush1.msra.mxu0 %v223
    %1747 = vmatprep.subr.mxu0 0.0
    %1748 = vmatpush1.msra.mxu0 %v222
    %1749 = vmatprep.subr.mxu0 0.0
    %1750 = vmatpush1.msra.mxu0 %v221
    %1751 = vmatprep.subr.mxu0 0.0
    %1752 = vmatpush1.msra.mxu0 %v220
    %1753 = vmatprep.subr.mxu0 0.0
    %1754 = vmatpush2.msra.mxu0 0.0
    %1755 = vmatprep.subr.mxu0 0.0
    %1756 = vmatpush2.msra.mxu0 0.0
    %1757 = vmatprep.subr.mxu0 0.0
    %1758 = vmatpush2.msra.mxu0 0.0
    %1759 = vmatprep.subr.mxu0 0.0
    %1760 = vmatpush2.msra.mxu0 0.0
    %1761 = vmatprep.subr.mxu0 0.0
    %1762 = vmatpush2.msra.mxu0 0.0
    %1763 = vmatprep.subr.mxu0 0.0
    %1764 = vmatpush2.msra.mxu0 0.0
    %1765 = vmatprep.subr.mxu0 0.0
    %1766 = vmatpush2.msra.mxu0 0.0
    %1767 = vmatprep.subr.mxu0 0.0
    %1768 = vmatpush2.msra.mxu0 0.0
    %1769 = vmatprep.subr.mxu0 0.0
    %1770 = vmatpush2.msra.mxu0 0.0
    %1771 = vmatprep.subr.mxu0 0.0
    %1772 = vmatpush2.msra.mxu0 0.0
    %1773 = vmatprep.subr.mxu0 0.0
    %1774 = vmatpush2.msra.mxu0 0.0
    %1775 = vmatprep.subr.mxu0 0.0
    %1776 = vmatpush2.msra.mxu0 0.0
    %1777 = vmatprep.subr.mxu0 0.0
    %1778 = vmatpush2.msra.mxu0 0.0
    %1779 = vmatprep.subr.mxu0 0.0
    %1780 = vmatpush2.msra.mxu0 0.0
    %1781 = vmatprep.subr.mxu0 0.0
    %1782 = vmatpush2.msra.mxu0 0.0
    %1783 = vmatprep.subr.mxu0 0.0
    %1784 = vmatpush2.msra.mxu0 0.0
    %1785 = vmatprep.mubr.f32.mxu0 0.0
    %1786 = vmatmul.mubr.f32.gmra.mxu0 %v1719
    %v1787 = vpop.f32.mrf.mxu0
    %v1788 = vadd.f32 0.0, %v1787
    %v1789 = vpop.f32.mrf.mxu0
    %1790 = vdwg.mxu0
    %v1792 = vrot.slane %v1718, 2
    %1793 = vrot.lane.b32.xlu0 %v1792, 32
    %v1794 = vpop.permute.xlu0 %1793
    %v1795 = vsel %vm231, %v1794, 0
    %1797 = vmatprep.subr.mxu0 0.0
    %1798 = vmatpush1.msra.mxu0 0.0
    %1799 = vmatprep.subr.mxu0 0.0
    %1800 = vmatpush1.msra.mxu0 0.0
    %1801 = vmatprep.subr.mxu0 0.0
    %1802 = vmatpush1.msra.mxu0 0.0
    %1803 = vmatprep.subr.mxu0 0.0
    %1804 = vmatpush1.msra.mxu0 0.0
    %1805 = vmatprep.subr.mxu0 0.0
    %1806 = vmatpush1.msra.mxu0 0.0
    %1807 = vmatprep.subr.mxu0 0.0
    %1808 = vmatpush1.msra.mxu0 0.0
    %1809 = vmatprep.subr.mxu0 0.0
    %1810 = vmatpush1.msra.mxu0 0.0
    %1811 = vmatprep.subr.mxu0 0.0
    %1812 = vmatpush1.msra.mxu0 0.0
    %1813 = vmatprep.subr.mxu0 0.0
    %1814 = vmatpush1.msra.mxu0 0.0
    %1815 = vmatprep.subr.mxu0 0.0
    %1816 = vmatpush1.msra.mxu0 0.0
    %1817 = vmatprep.subr.mxu0 0.0
    %1818 = vmatpush1.msra.mxu0 0.0
    %1819 = vmatprep.subr.mxu0 0.0
    %1820 = vmatpush1.msra.mxu0 0.0
    %1821 = vmatprep.subr.mxu0 0.0
    %1822 = vmatpush1.msra.mxu0 %v219
    %1823 = vmatprep.subr.mxu0 0.0
    %1824 = vmatpush1.msra.mxu0 %v218
    %1825 = vmatprep.subr.mxu0 0.0
    %1826 = vmatpush1.msra.mxu0 %v217
    %1827 = vmatprep.subr.mxu0 0.0
    %1828 = vmatpush1.msra.mxu0 %v216
    %1829 = vmatprep.subr.mxu0 0.0
    %1830 = vmatpush2.msra.mxu0 0.0
    %1831 = vmatprep.subr.mxu0 0.0
    %1832 = vmatpush2.msra.mxu0 0.0
    %1833 = vmatprep.subr.mxu0 0.0
    %1834 = vmatpush2.msra.mxu0 0.0
    %1835 = vmatprep.subr.mxu0 0.0
    %1836 = vmatpush2.msra.mxu0 0.0
    %1837 = vmatprep.subr.mxu0 0.0
    %1838 = vmatpush2.msra.mxu0 0.0
    %1839 = vmatprep.subr.mxu0 0.0
    %1840 = vmatpush2.msra.mxu0 0.0
    %1841 = vmatprep.subr.mxu0 0.0
    %1842 = vmatpush2.msra.mxu0 0.0
    %1843 = vmatprep.subr.mxu0 0.0
    %1844 = vmatpush2.msra.mxu0 0.0
    %1845 = vmatprep.subr.mxu0 0.0
    %1846 = vmatpush2.msra.mxu0 0.0
    %1847 = vmatprep.subr.mxu0 0.0
    %1848 = vmatpush2.msra.mxu0 0.0
    %1849 = vmatprep.subr.mxu0 0.0
    %1850 = vmatpush2.msra.mxu0 0.0
    %1851 = vmatprep.subr.mxu0 0.0
    %1852 = vmatpush2.msra.mxu0 0.0
    %1853 = vmatprep.subr.mxu0 0.0
    %1854 = vmatpush2.msra.mxu0 0.0
    %1855 = vmatprep.subr.mxu0 0.0
    %1856 = vmatpush2.msra.mxu0 0.0
    %1857 = vmatprep.subr.mxu0 0.0
    %1858 = vmatpush2.msra.mxu0 0.0
    %1859 = vmatprep.subr.mxu0 0.0
    %1860 = vmatpush2.msra.mxu0 0.0
    %1861 = vmatprep.mubr.f32.mxu0 0.0
    %1862 = vmatmul.mubr.f32.gmra.mxu0 %v1795
    %v1863 = vpop.f32.mrf.mxu0
    %v1864 = vadd.f32 %v1788, %v1863
    %v1865 = vpop.f32.mrf.mxu0
    %1866 = vdwg.mxu0
    %v1867 = vadd.f32 %v1864, %v229
    %v1868 = vxor.u32 %v1867, 2147483648
    %v1869 = vmul.f32 %v1868, 1.442695
    %v1870 = vpow.pop %v1869
    %v1871 = vadd.f32 %v1870, 1.0
    %v1872 = vrcp.pop %v1871
    %v1873 = vmul.f32 1.0, %v1872
    %v1874 = vtanh.pop %v1867
    %v1875 = vmul.f32 %v1873, %v1606
    %1877 = vrot.lane.b32.xlu0 %v1874, 64
    %v1878 = vpop.permute.xlu0 %1877
    %v1880 = vmul.f32 %v1873, %v1878
    %1882 = vrot.lane.b32.xlu0 %v1880, 32
    %v1883 = vpop.permute.xlu0 %1882
    %v1885 = vadd.f32 %v1875, %v1883
    %v1886 = vtanh.pop %v1885
    %1888 = vrot.lane.b32.xlu0 %v1886, 64
    %v1889 = vpop.permute.xlu0 %1888
    %v1891 = vmul.f32 %v1873, %v1889
    %1893 = vrot.lane.b32.xlu0 %v1891, 32
    %v1894 = vpop.permute.xlu0 %1893
    %1896 = vst.msk [vmem:[#allocation2 + $0xa] sm:$0x3] %vm504, %v1894
    %1897 = vmatprep.subr.mxu0 0.0
    %1898 = vmatpush1.msra.mxu0 0.0
    %1899 = vmatprep.subr.mxu0 0.0
    %1900 = vmatpush1.msra.mxu0 0.0
    %1901 = vmatprep.subr.mxu0 0.0
    %1902 = vmatpush1.msra.mxu0 0.0
    %1903 = vmatprep.subr.mxu0 0.0
    %1904 = vmatpush1.msra.mxu0 0.0
    %1905 = vmatprep.subr.mxu0 0.0
    %1906 = vmatpush1.msra.mxu0 0.0
    %1907 = vmatprep.subr.mxu0 0.0
    %1908 = vmatpush1.msra.mxu0 0.0
    %1909 = vmatprep.subr.mxu0 0.0
    %1910 = vmatpush1.msra.mxu0 0.0
    %1911 = vmatprep.subr.mxu0 0.0
    %1912 = vmatpush1.msra.mxu0 0.0
    %1913 = vmatprep.subr.mxu0 0.0
    %1914 = vmatpush1.msra.mxu0 0.0
    %1915 = vmatprep.subr.mxu0 0.0
    %1916 = vmatpush1.msra.mxu0 0.0
    %1917 = vmatprep.subr.mxu0 0.0
    %1918 = vmatpush1.msra.mxu0 0.0
    %1919 = vmatprep.subr.mxu0 0.0
    %1920 = vmatpush1.msra.mxu0 0.0
    %1921 = vmatprep.subr.mxu0 0.0
    %1922 = vmatpush1.msra.mxu0 %v215
    %1923 = vmatprep.subr.mxu0 0.0
    %1924 = vmatpush1.msra.mxu0 %v214
    %1925 = vmatprep.subr.mxu0 0.0
    %1926 = vmatpush1.msra.mxu0 %v213
    %1927 = vmatprep.subr.mxu0 0.0
    %1928 = vmatpush1.msra.mxu0 %v212
    %1929 = vmatprep.subr.mxu0 0.0
    %1930 = vmatpush2.msra.mxu0 0.0
    %1931 = vmatprep.subr.mxu0 0.0
    %1932 = vmatpush2.msra.mxu0 0.0
    %1933 = vmatprep.subr.mxu0 0.0
    %1934 = vmatpush2.msra.mxu0 0.0
    %1935 = vmatprep.subr.mxu0 0.0
    %1936 = vmatpush2.msra.mxu0 0.0
    %1937 = vmatprep.subr.mxu0 0.0
    %1938 = vmatpush2.msra.mxu0 0.0
    %1939 = vmatprep.subr.mxu0 0.0
    %1940 = vmatpush2.msra.mxu0 0.0
    %1941 = vmatprep.subr.mxu0 0.0
    %1942 = vmatpush2.msra.mxu0 0.0
    %1943 = vmatprep.subr.mxu0 0.0
    %1944 = vmatpush2.msra.mxu0 0.0
    %1945 = vmatprep.subr.mxu0 0.0
    %1946 = vmatpush2.msra.mxu0 0.0
    %1947 = vmatprep.subr.mxu0 0.0
    %1948 = vmatpush2.msra.mxu0 0.0
    %1949 = vmatprep.subr.mxu0 0.0
    %1950 = vmatpush2.msra.mxu0 0.0
    %1951 = vmatprep.subr.mxu0 0.0
    %1952 = vmatpush2.msra.mxu0 0.0
    %1953 = vmatprep.subr.mxu0 0.0
    %1954 = vmatpush2.msra.mxu0 0.0
    %1955 = vmatprep.subr.mxu0 0.0
    %1956 = vmatpush2.msra.mxu0 0.0
    %1957 = vmatprep.subr.mxu0 0.0
    %1958 = vmatpush2.msra.mxu0 0.0
    %1959 = vmatprep.subr.mxu0 0.0
    %1960 = vmatpush2.msra.mxu0 0.0
    %1961 = vmatprep.mubr.f32.mxu0 0.0
    %1962 = vmatmul.mubr.f32.gmra.mxu0 %v1795
    %v1963 = vpop.f32.mrf.mxu0
    %v1964 = vadd.f32 0.0, %v1963
    %v1965 = vpop.f32.mrf.mxu0
    %1966 = vdwg.mxu0
    %v1968 = vrot.slane %v1964, 4
    %v1970 = vadd.f32 %v209, %v1968
    %v1971 = vxor.u32 %v1970, 2147483648
    %v1972 = vmul.f32 %v1971, 1.442695
    %v1973 = vpow.pop %v1972
    %v1974 = vadd.f32 %v1973, 1.0
    %v1975 = vrcp.pop %v1974
    %v1976 = vmul.f32 1.0, %v1975
    %v1977 = vtanh.pop %v1970
    %v1979 = vrot.slane %v1712, 6
    %v1981 = vmul.f32 %v1976, %v1979
    %1983 = vrot.lane.b32.xlu0 %v1977, 64
    %v1984 = vpop.permute.xlu0 %1983
    %v1986 = vmul.f32 %v1976, %v1984
    %1988 = vrot.lane.b32.xlu0 %v1986, 32
    %v1989 = vpop.permute.xlu0 %1988
    %v1991 = vadd.f32 %v1981, %v1989
    %v1992 = vtanh.pop %v1991
    %1994 = vrot.lane.b32.xlu0 %v1992, 64
    %v1995 = vpop.permute.xlu0 %1994
    %v1997 = vmul.f32 %v1976, %v1995
    %v1998 = vsel %vm231, %v1894, 0
    %2000 = vmatprep.subr.mxu0 0.0
    %2001 = vmatpush1.msra.mxu0 0.0
    %2002 = vmatprep.subr.mxu0 0.0
    %2003 = vmatpush1.msra.mxu0 0.0
    %2004 = vmatprep.subr.mxu0 0.0
    %2005 = vmatpush1.msra.mxu0 0.0
    %2006 = vmatprep.subr.mxu0 0.0
    %2007 = vmatpush1.msra.mxu0 0.0
    %2008 = vmatprep.subr.mxu0 0.0
    %2009 = vmatpush1.msra.mxu0 0.0
    %2010 = vmatprep.subr.mxu0 0.0
    %2011 = vmatpush1.msra.mxu0 0.0
    %2012 = vmatprep.subr.mxu0 0.0
    %2013 = vmatpush1.msra.mxu0 0.0
    %2014 = vmatprep.subr.mxu0 0.0
    %2015 = vmatpush1.msra.mxu0 0.0
    %2016 = vmatprep.subr.mxu0 0.0
    %2017 = vmatpush1.msra.mxu0 0.0
    %2018 = vmatprep.subr.mxu0 0.0
    %2019 = vmatpush1.msra.mxu0 0.0
    %2020 = vmatprep.subr.mxu0 0.0
    %2021 = vmatpush1.msra.mxu0 0.0
    %2022 = vmatprep.subr.mxu0 0.0
    %2023 = vmatpush1.msra.mxu0 0.0
    %2024 = vmatprep.subr.mxu0 0.0
    %2025 = vmatpush1.msra.mxu0 %v223
    %2026 = vmatprep.subr.mxu0 0.0
    %2027 = vmatpush1.msra.mxu0 %v222
    %2028 = vmatprep.subr.mxu0 0.0
    %2029 = vmatpush1.msra.mxu0 %v221
    %2030 = vmatprep.subr.mxu0 0.0
    %2031 = vmatpush1.msra.mxu0 %v220
    %2032 = vmatprep.subr.mxu0 0.0
    %2033 = vmatpush2.msra.mxu0 0.0
    %2034 = vmatprep.subr.mxu0 0.0
    %2035 = vmatpush2.msra.mxu0 0.0
    %2036 = vmatprep.subr.mxu0 0.0
    %2037 = vmatpush2.msra.mxu0 0.0
    %2038 = vmatprep.subr.mxu0 0.0
    %2039 = vmatpush2.msra.mxu0 0.0
    %2040 = vmatprep.subr.mxu0 0.0
    %2041 = vmatpush2.msra.mxu0 0.0
    %2042 = vmatprep.subr.mxu0 0.0
    %2043 = vmatpush2.msra.mxu0 0.0
    %2044 = vmatprep.subr.mxu0 0.0
    %2045 = vmatpush2.msra.mxu0 0.0
    %2046 = vmatprep.subr.mxu0 0.0
    %2047 = vmatpush2.msra.mxu0 0.0
    %2048 = vmatprep.subr.mxu0 0.0
    %2049 = vmatpush2.msra.mxu0 0.0
    %2050 = vmatprep.subr.mxu0 0.0
    %2051 = vmatpush2.msra.mxu0 0.0
    %2052 = vmatprep.subr.mxu0 0.0
    %2053 = vmatpush2.msra.mxu0 0.0
    %2054 = vmatprep.subr.mxu0 0.0
    %2055 = vmatpush2.msra.mxu0 0.0
    %2056 = vmatprep.subr.mxu0 0.0
    %2057 = vmatpush2.msra.mxu0 0.0
    %2058 = vmatprep.subr.mxu0 0.0
    %2059 = vmatpush2.msra.mxu0 0.0
    %2060 = vmatprep.subr.mxu0 0.0
    %2061 = vmatpush2.msra.mxu0 0.0
    %2062 = vmatprep.subr.mxu0 0.0
    %2063 = vmatpush2.msra.mxu0 0.0
    %2064 = vmatprep.mubr.f32.mxu0 0.0
    %2065 = vmatmul.mubr.f32.gmra.mxu0 %v1998
    %v2066 = vpop.f32.mrf.mxu0
    %v2067 = vadd.f32 0.0, %v2066
    %v2068 = vpop.f32.mrf.mxu0
    %2069 = vdwg.mxu0
    %v2071 = vrot.slane %v1997, 4
    %2072 = vrot.lane.b32.xlu0 %v2071, 32
    %v2073 = vpop.permute.xlu0 %2072
    %v2074 = vsel %vm231, %v2073, 0
    %2076 = vmatprep.subr.mxu0 0.0
    %2077 = vmatpush1.msra.mxu0 0.0
    %2078 = vmatprep.subr.mxu0 0.0
    %2079 = vmatpush1.msra.mxu0 0.0
    %2080 = vmatprep.subr.mxu0 0.0
    %2081 = vmatpush1.msra.mxu0 0.0
    %2082 = vmatprep.subr.mxu0 0.0
    %2083 = vmatpush1.msra.mxu0 0.0
    %2084 = vmatprep.subr.mxu0 0.0
    %2085 = vmatpush1.msra.mxu0 0.0
    %2086 = vmatprep.subr.mxu0 0.0
    %2087 = vmatpush1.msra.mxu0 0.0
    %2088 = vmatprep.subr.mxu0 0.0
    %2089 = vmatpush1.msra.mxu0 0.0
    %2090 = vmatprep.subr.mxu0 0.0
    %2091 = vmatpush1.msra.mxu0 0.0
    %2092 = vmatprep.subr.mxu0 0.0
    %2093 = vmatpush1.msra.mxu0 0.0
    %2094 = vmatprep.subr.mxu0 0.0
    %2095 = vmatpush1.msra.mxu0 0.0
    %2096 = vmatprep.subr.mxu0 0.0
    %2097 = vmatpush1.msra.mxu0 0.0
    %2098 = vmatprep.subr.mxu0 0.0
    %2099 = vmatpush1.msra.mxu0 0.0
    %2100 = vmatprep.subr.mxu0 0.0
    %2101 = vmatpush1.msra.mxu0 %v219
    %2102 = vmatprep.subr.mxu0 0.0
    %2103 = vmatpush1.msra.mxu0 %v218
    %2104 = vmatprep.subr.mxu0 0.0
    %2105 = vmatpush1.msra.mxu0 %v217
    %2106 = vmatprep.subr.mxu0 0.0
    %2107 = vmatpush1.msra.mxu0 %v216
    %2108 = vmatprep.subr.mxu0 0.0
    %2109 = vmatpush2.msra.mxu0 0.0
    %2110 = vmatprep.subr.mxu0 0.0
    %2111 = vmatpush2.msra.mxu0 0.0
    %2112 = vmatprep.subr.mxu0 0.0
    %2113 = vmatpush2.msra.mxu0 0.0
    %2114 = vmatprep.subr.mxu0 0.0
    %2115 = vmatpush2.msra.mxu0 0.0
    %2116 = vmatprep.subr.mxu0 0.0
    %2117 = vmatpush2.msra.mxu0 0.0
    %2118 = vmatprep.subr.mxu0 0.0
    %2119 = vmatpush2.msra.mxu0 0.0
    %2120 = vmatprep.subr.mxu0 0.0
    %2121 = vmatpush2.msra.mxu0 0.0
    %2122 = vmatprep.subr.mxu0 0.0
    %2123 = vmatpush2.msra.mxu0 0.0
    %2124 = vmatprep.subr.mxu0 0.0
    %2125 = vmatpush2.msra.mxu0 0.0
    %2126 = vmatprep.subr.mxu0 0.0
    %2127 = vmatpush2.msra.mxu0 0.0
    %2128 = vmatprep.subr.mxu0 0.0
    %2129 = vmatpush2.msra.mxu0 0.0
    %2130 = vmatprep.subr.mxu0 0.0
    %2131 = vmatpush2.msra.mxu0 0.0
    %2132 = vmatprep.subr.mxu0 0.0
    %2133 = vmatpush2.msra.mxu0 0.0
    %2134 = vmatprep.subr.mxu0 0.0
    %2135 = vmatpush2.msra.mxu0 0.0
    %2136 = vmatprep.subr.mxu0 0.0
    %2137 = vmatpush2.msra.mxu0 0.0
    %2138 = vmatprep.subr.mxu0 0.0
    %2139 = vmatpush2.msra.mxu0 0.0
    %2140 = vmatprep.mubr.f32.mxu0 0.0
    %2141 = vmatmul.mubr.f32.gmra.mxu0 %v2074
    %v2142 = vpop.f32.mrf.mxu0
    %v2143 = vadd.f32 %v2067, %v2142
    %v2144 = vpop.f32.mrf.mxu0
    %2145 = vdwg.mxu0
    %v2146 = vadd.f32 %v2143, %v229
    %v2147 = vxor.u32 %v2146, 2147483648
    %v2148 = vmul.f32 %v2147, 1.442695
    %v2149 = vpow.pop %v2148
    %v2150 = vadd.f32 %v2149, 1.0
    %v2151 = vrcp.pop %v2150
    %v2152 = vmul.f32 1.0, %v2151
    %v2153 = vtanh.pop %v2146
    %v2154 = vmul.f32 %v2152, %v1885
    %2156 = vrot.lane.b32.xlu0 %v2153, 64
    %v2157 = vpop.permute.xlu0 %2156
    %v2159 = vmul.f32 %v2152, %v2157
    %2161 = vrot.lane.b32.xlu0 %v2159, 32
    %v2162 = vpop.permute.xlu0 %2161
    %v2164 = vadd.f32 %v2154, %v2162
    %v2165 = vtanh.pop %v2164
    %2167 = vrot.lane.b32.xlu0 %v2165, 64
    %v2168 = vpop.permute.xlu0 %2167
    %v2170 = vmul.f32 %v2152, %v2168
    %2172 = vrot.lane.b32.xlu0 %v2170, 32
    %v2173 = vpop.permute.xlu0 %2172
    %2175 = vst.msk [vmem:[#allocation2 + $0xc] sm:$0x3] %vm504, %v2173
    %2176 = vmatprep.subr.mxu0 0.0
    %2177 = vmatpush1.msra.mxu0 0.0
    %2178 = vmatprep.subr.mxu0 0.0
    %2179 = vmatpush1.msra.mxu0 0.0
    %2180 = vmatprep.subr.mxu0 0.0
    %2181 = vmatpush1.msra.mxu0 0.0
    %2182 = vmatprep.subr.mxu0 0.0
    %2183 = vmatpush1.msra.mxu0 0.0
    %2184 = vmatprep.subr.mxu0 0.0
    %2185 = vmatpush1.msra.mxu0 0.0
    %2186 = vmatprep.subr.mxu0 0.0
    %2187 = vmatpush1.msra.mxu0 0.0
    %2188 = vmatprep.subr.mxu0 0.0
    %2189 = vmatpush1.msra.mxu0 0.0
    %2190 = vmatprep.subr.mxu0 0.0
    %2191 = vmatpush1.msra.mxu0 0.0
    %2192 = vmatprep.subr.mxu0 0.0
    %2193 = vmatpush1.msra.mxu0 0.0
    %2194 = vmatprep.subr.mxu0 0.0
    %2195 = vmatpush1.msra.mxu0 0.0
    %2196 = vmatprep.subr.mxu0 0.0
    %2197 = vmatpush1.msra.mxu0 0.0
    %2198 = vmatprep.subr.mxu0 0.0
    %2199 = vmatpush1.msra.mxu0 0.0
    %2200 = vmatprep.subr.mxu0 0.0
    %2201 = vmatpush1.msra.mxu0 %v215
    %2202 = vmatprep.subr.mxu0 0.0
    %2203 = vmatpush1.msra.mxu0 %v214
    %2204 = vmatprep.subr.mxu0 0.0
    %2205 = vmatpush1.msra.mxu0 %v213
    %2206 = vmatprep.subr.mxu0 0.0
    %2207 = vmatpush1.msra.mxu0 %v212
    %2208 = vmatprep.subr.mxu0 0.0
    %2209 = vmatpush2.msra.mxu0 0.0
    %2210 = vmatprep.subr.mxu0 0.0
    %2211 = vmatpush2.msra.mxu0 0.0
    %2212 = vmatprep.subr.mxu0 0.0
    %2213 = vmatpush2.msra.mxu0 0.0
    %2214 = vmatprep.subr.mxu0 0.0
    %2215 = vmatpush2.msra.mxu0 0.0
    %2216 = vmatprep.subr.mxu0 0.0
    %2217 = vmatpush2.msra.mxu0 0.0
    %2218 = vmatprep.subr.mxu0 0.0
    %2219 = vmatpush2.msra.mxu0 0.0
    %2220 = vmatprep.subr.mxu0 0.0
    %2221 = vmatpush2.msra.mxu0 0.0
    %2222 = vmatprep.subr.mxu0 0.0
    %2223 = vmatpush2.msra.mxu0 0.0
    %2224 = vmatprep.subr.mxu0 0.0
    %2225 = vmatpush2.msra.mxu0 0.0
    %2226 = vmatprep.subr.mxu0 0.0
    %2227 = vmatpush2.msra.mxu0 0.0
    %2228 = vmatprep.subr.mxu0 0.0
    %2229 = vmatpush2.msra.mxu0 0.0
    %2230 = vmatprep.subr.mxu0 0.0
    %2231 = vmatpush2.msra.mxu0 0.0
    %2232 = vmatprep.subr.mxu0 0.0
    %2233 = vmatpush2.msra.mxu0 0.0
    %2234 = vmatprep.subr.mxu0 0.0
    %2235 = vmatpush2.msra.mxu0 0.0
    %2236 = vmatprep.subr.mxu0 0.0
    %2237 = vmatpush2.msra.mxu0 0.0
    %2238 = vmatprep.subr.mxu0 0.0
    %2239 = vmatpush2.msra.mxu0 0.0
    %2240 = vmatprep.mubr.f32.mxu0 0.0
    %2241 = vmatmul.mubr.f32.gmra.mxu0 %v2074
    %v2242 = vpop.f32.mrf.mxu0
    %v2243 = vadd.f32 0.0, %v2242
    %v2244 = vpop.f32.mrf.mxu0
    %2245 = vdwg.mxu0
    %v2247 = vrot.slane %v2243, 2
    %v2249 = vadd.f32 %v209, %v2247
    %v2250 = vxor.u32 %v2249, 2147483648
    %v2251 = vmul.f32 %v2250, 1.442695
    %v2252 = vpow.pop %v2251
    %v2253 = vadd.f32 %v2252, 1.0
    %v2254 = vrcp.pop %v2253
    %v2255 = vmul.f32 1.0, %v2254
    %v2256 = vtanh.pop %v2249
    %v2258 = vrot.slane %v1991, 6
    %v2260 = vmul.f32 %v2255, %v2258
    %2262 = vrot.lane.b32.xlu0 %v2256, 64
    %v2263 = vpop.permute.xlu0 %2262
    %v2265 = vmul.f32 %v2255, %v2263
    %2267 = vrot.lane.b32.xlu0 %v2265, 32
    %v2268 = vpop.permute.xlu0 %2267
    %v2270 = vadd.f32 %v2260, %v2268
    %v2271 = vtanh.pop %v2270
    %2273 = vrot.lane.b32.xlu0 %v2271, 64
    %v2274 = vpop.permute.xlu0 %2273
    %v2276 = vmul.f32 %v2255, %v2274
    %v2277 = vsel %vm231, %v2173, 0
    %2279 = vmatprep.subr.mxu0 0.0
    %2280 = vmatpush1.msra.mxu0 0.0
    %2281 = vmatprep.subr.mxu0 0.0
    %2282 = vmatpush1.msra.mxu0 0.0
    %2283 = vmatprep.subr.mxu0 0.0
    %2284 = vmatpush1.msra.mxu0 0.0
    %2285 = vmatprep.subr.mxu0 0.0
    %2286 = vmatpush1.msra.mxu0 0.0
    %2287 = vmatprep.subr.mxu0 0.0
    %2288 = vmatpush1.msra.mxu0 0.0
    %2289 = vmatprep.subr.mxu0 0.0
    %2290 = vmatpush1.msra.mxu0 0.0
    %2291 = vmatprep.subr.mxu0 0.0
    %2292 = vmatpush1.msra.mxu0 0.0
    %2293 = vmatprep.subr.mxu0 0.0
    %2294 = vmatpush1.msra.mxu0 0.0
    %2295 = vmatprep.subr.mxu0 0.0
    %2296 = vmatpush1.msra.mxu0 0.0
    %2297 = vmatprep.subr.mxu0 0.0
    %2298 = vmatpush1.msra.mxu0 0.0
    %2299 = vmatprep.subr.mxu0 0.0
    %2300 = vmatpush1.msra.mxu0 0.0
    %2301 = vmatprep.subr.mxu0 0.0
    %2302 = vmatpush1.msra.mxu0 0.0
    %2303 = vmatprep.subr.mxu0 0.0
    %2304 = vmatpush1.msra.mxu0 %v223
    %2305 = vmatprep.subr.mxu0 0.0
    %2306 = vmatpush1.msra.mxu0 %v222
    %2307 = vmatprep.subr.mxu0 0.0
    %2308 = vmatpush1.msra.mxu0 %v221
    %2309 = vmatprep.subr.mxu0 0.0
    %2310 = vmatpush1.msra.mxu0 %v220
    %2311 = vmatprep.subr.mxu0 0.0
    %2312 = vmatpush2.msra.mxu0 0.0
    %2313 = vmatprep.subr.mxu0 0.0
    %2314 = vmatpush2.msra.mxu0 0.0
    %2315 = vmatprep.subr.mxu0 0.0
    %2316 = vmatpush2.msra.mxu0 0.0
    %2317 = vmatprep.subr.mxu0 0.0
    %2318 = vmatpush2.msra.mxu0 0.0
    %2319 = vmatprep.subr.mxu0 0.0
    %2320 = vmatpush2.msra.mxu0 0.0
    %2321 = vmatprep.subr.mxu0 0.0
    %2322 = vmatpush2.msra.mxu0 0.0
    %2323 = vmatprep.subr.mxu0 0.0
    %2324 = vmatpush2.msra.mxu0 0.0
    %2325 = vmatprep.subr.mxu0 0.0
    %2326 = vmatpush2.msra.mxu0 0.0
    %2327 = vmatprep.subr.mxu0 0.0
    %2328 = vmatpush2.msra.mxu0 0.0
    %2329 = vmatprep.subr.mxu0 0.0
    %2330 = vmatpush2.msra.mxu0 0.0
    %2331 = vmatprep.subr.mxu0 0.0
    %2332 = vmatpush2.msra.mxu0 0.0
    %2333 = vmatprep.subr.mxu0 0.0
    %2334 = vmatpush2.msra.mxu0 0.0
    %2335 = vmatprep.subr.mxu0 0.0
    %2336 = vmatpush2.msra.mxu0 0.0
    %2337 = vmatprep.subr.mxu0 0.0
    %2338 = vmatpush2.msra.mxu0 0.0
    %2339 = vmatprep.subr.mxu0 0.0
    %2340 = vmatpush2.msra.mxu0 0.0
    %2341 = vmatprep.subr.mxu0 0.0
    %2342 = vmatpush2.msra.mxu0 0.0
    %2343 = vmatprep.mubr.f32.mxu0 0.0
    %2344 = vmatmul.mubr.f32.gmra.mxu0 %v2277
    %v2345 = vpop.f32.mrf.mxu0
    %v2346 = vadd.f32 0.0, %v2345
    %v2347 = vpop.f32.mrf.mxu0
    %2348 = vdwg.mxu0
    %v2350 = vrot.slane %v2276, 6
    %2351 = vrot.lane.b32.xlu0 %v2350, 32
    %v2352 = vpop.permute.xlu0 %2351
    %v2353 = vsel %vm231, %v2352, 0
    %2355 = vmatprep.subr.mxu0 0.0
    %2356 = vmatpush1.msra.mxu0 0.0
    %2357 = vmatprep.subr.mxu0 0.0
    %2358 = vmatpush1.msra.mxu0 0.0
    %2359 = vmatprep.subr.mxu0 0.0
    %2360 = vmatpush1.msra.mxu0 0.0
    %2361 = vmatprep.subr.mxu0 0.0
    %2362 = vmatpush1.msra.mxu0 0.0
    %2363 = vmatprep.subr.mxu0 0.0
    %2364 = vmatpush1.msra.mxu0 0.0
    %2365 = vmatprep.subr.mxu0 0.0
    %2366 = vmatpush1.msra.mxu0 0.0
    %2367 = vmatprep.subr.mxu0 0.0
    %2368 = vmatpush1.msra.mxu0 0.0
    %2369 = vmatprep.subr.mxu0 0.0
    %2370 = vmatpush1.msra.mxu0 0.0
    %2371 = vmatprep.subr.mxu0 0.0
    %2372 = vmatpush1.msra.mxu0 0.0
    %2373 = vmatprep.subr.mxu0 0.0
    %2374 = vmatpush1.msra.mxu0 0.0
    %2375 = vmatprep.subr.mxu0 0.0
    %2376 = vmatpush1.msra.mxu0 0.0
    %2377 = vmatprep.subr.mxu0 0.0
    %2378 = vmatpush1.msra.mxu0 0.0
    %2379 = vmatprep.subr.mxu0 0.0
    %2380 = vmatpush1.msra.mxu0 %v219
    %2381 = vmatprep.subr.mxu0 0.0
    %2382 = vmatpush1.msra.mxu0 %v218
    %2383 = vmatprep.subr.mxu0 0.0
    %2384 = vmatpush1.msra.mxu0 %v217
    %2385 = vmatprep.subr.mxu0 0.0
    %2386 = vmatpush1.msra.mxu0 %v216
    %2387 = vmatprep.subr.mxu0 0.0
    %2388 = vmatpush2.msra.mxu0 0.0
    %2389 = vmatprep.subr.mxu0 0.0
    %2390 = vmatpush2.msra.mxu0 0.0
    %2391 = vmatprep.subr.mxu0 0.0
    %2392 = vmatpush2.msra.mxu0 0.0
    %2393 = vmatprep.subr.mxu0 0.0
    %2394 = vmatpush2.msra.mxu0 0.0
    %2395 = vmatprep.subr.mxu0 0.0
    %2396 = vmatpush2.msra.mxu0 0.0
    %2397 = vmatprep.subr.mxu0 0.0
    %2398 = vmatpush2.msra.mxu0 0.0
    %2399 = vmatprep.subr.mxu0 0.0
    %2400 = vmatpush2.msra.mxu0 0.0
    %2401 = vmatprep.subr.mxu0 0.0
    %2402 = vmatpush2.msra.mxu0 0.0
    %2403 = vmatprep.subr.mxu0 0.0
    %2404 = vmatpush2.msra.mxu0 0.0
    %2405 = vmatprep.subr.mxu0 0.0
    %2406 = vmatpush2.msra.mxu0 0.0
    %2407 = vmatprep.subr.mxu0 0.0
    %2408 = vmatpush2.msra.mxu0 0.0
    %2409 = vmatprep.subr.mxu0 0.0
    %2410 = vmatpush2.msra.mxu0 0.0
    %2411 = vmatprep.subr.mxu0 0.0
    %2412 = vmatpush2.msra.mxu0 0.0
    %2413 = vmatprep.subr.mxu0 0.0
    %2414 = vmatpush2.msra.mxu0 0.0
    %2415 = vmatprep.subr.mxu0 0.0
    %2416 = vmatpush2.msra.mxu0 0.0
    %2417 = vmatprep.subr.mxu0 0.0
    %2418 = vmatpush2.msra.mxu0 0.0
    %2419 = vmatprep.mubr.f32.mxu0 0.0
    %2420 = vmatmul.mubr.f32.gmra.mxu0 %v2353
    %v2421 = vpop.f32.mrf.mxu0
    %v2422 = vadd.f32 %v2346, %v2421
    %v2423 = vpop.f32.mrf.mxu0
    %2424 = vdwg.mxu0
    %v2425 = vadd.f32 %v2422, %v229
    %v2426 = vxor.u32 %v2425, 2147483648
    %v2427 = vmul.f32 %v2426, 1.442695
    %v2428 = vpow.pop %v2427
    %v2429 = vadd.f32 %v2428, 1.0
    %v2430 = vrcp.pop %v2429
    %v2431 = vmul.f32 1.0, %v2430
    %v2432 = vtanh.pop %v2425
    %v2433 = vmul.f32 %v2431, %v2164
    %2435 = vrot.lane.b32.xlu0 %v2432, 64
    %v2436 = vpop.permute.xlu0 %2435
    %v2438 = vmul.f32 %v2431, %v2436
    %2440 = vrot.lane.b32.xlu0 %v2438, 32
    %v2441 = vpop.permute.xlu0 %2440
    %v2443 = vadd.f32 %v2433, %v2441
    %v2444 = vtanh.pop %v2443
    %2446 = vrot.lane.b32.xlu0 %v2444, 64
    %v2447 = vpop.permute.xlu0 %2446
    %v2449 = vmul.f32 %v2431, %v2447
    %2451 = vrot.lane.b32.xlu0 %v2449, 32
    %v2452 = vpop.permute.xlu0 %2451
    %2454 = vst.msk [vmem:[#allocation2 + $0xe] sm:$0x3] %vm504, %v2452
    %v2455 = vld [vmem:[#allocation2] sm:$0xff]
    %v2456 = vld [vmem:[#allocation2 + $0x8] sm:$0xff]
    %v2457 = vld [vmem:[#allocation12] sm:$0xff]
    %v2458 = vld [vmem:[#allocation12 + $0x8] sm:$0xff]
    %v2459 = vld [vmem:[#allocation12 + $0x10] sm:$0xff]
    %v2460 = vld [vmem:[#allocation12 + $0x18] sm:$0xff]
    %v2461 = vld [vmem:[%s8] sm:$0x1]
    %v2463 = vlaneseq
    %v2464 = vshrl.u32 %v2463, 7
    %v2465 = vsub.s32 0, %v2464
    %v2466 = vrot.slane %v2461, %v2465
    %v2469 = vsel %vm231, %v2455, 0
    %v2472 = vsel %vm231, %v2456, 0
    %2474 = vmatprep.subr.mxu0 0.0
    %2475 = vmatpush1.msra.mxu0 0.0
    %2476 = vmatprep.subr.mxu0 0.0
    %2477 = vmatpush1.msra.mxu0 0.0
    %2478 = vmatprep.subr.mxu0 0.0
    %2479 = vmatpush1.msra.mxu0 0.0
    %2480 = vmatprep.subr.mxu0 0.0
    %2481 = vmatpush1.msra.mxu0 0.0
    %2482 = vmatprep.subr.mxu0 0.0
    %2483 = vmatpush1.msra.mxu0 0.0
    %2484 = vmatprep.subr.mxu0 0.0
    %2485 = vmatpush1.msra.mxu0 0.0
    %2486 = vmatprep.subr.mxu0 0.0
    %2487 = vmatpush1.msra.mxu0 0.0
    %2488 = vmatprep.subr.mxu0 0.0
    %2489 = vmatpush1.msra.mxu0 0.0
    %2490 = vmatprep.subr.mxu0 0.0
    %2491 = vmatpush1.msra.mxu0 0.0
    %2492 = vmatprep.subr.mxu0 0.0
    %2493 = vmatpush1.msra.mxu0 0.0
    %2494 = vmatprep.subr.mxu0 0.0
    %2495 = vmatpush1.msra.mxu0 0.0
    %2496 = vmatprep.subr.mxu0 0.0
    %2497 = vmatpush1.msra.mxu0 0.0
    %2498 = vmatprep.subr.mxu0 0.0
    %2499 = vmatpush1.msra.mxu0 %v2460
    %2500 = vmatprep.subr.mxu0 0.0
    %2501 = vmatpush1.msra.mxu0 %v2459
    %2502 = vmatprep.subr.mxu0 0.0
    %2503 = vmatpush1.msra.mxu0 %v2458
    %2504 = vmatprep.subr.mxu0 0.0
    %2505 = vmatpush1.msra.mxu0 %v2457
    %2506 = vmatprep.subr.mxu0 0.0
    %2507 = vmatpush2.msra.mxu0 0.0
    %2508 = vmatprep.subr.mxu0 0.0
    %2509 = vmatpush2.msra.mxu0 0.0
    %2510 = vmatprep.subr.mxu0 0.0
    %2511 = vmatpush2.msra.mxu0 0.0
    %2512 = vmatprep.subr.mxu0 0.0
    %2513 = vmatpush2.msra.mxu0 0.0
    %2514 = vmatprep.subr.mxu0 0.0
    %2515 = vmatpush2.msra.mxu0 0.0
    %2516 = vmatprep.subr.mxu0 0.0
    %2517 = vmatpush2.msra.mxu0 0.0
    %2518 = vmatprep.subr.mxu0 0.0
    %2519 = vmatpush2.msra.mxu0 0.0
    %2520 = vmatprep.subr.mxu0 0.0
    %2521 = vmatpush2.msra.mxu0 0.0
    %2522 = vmatprep.subr.mxu0 0.0
    %2523 = vmatpush2.msra.mxu0 0.0
    %2524 = vmatprep.subr.mxu0 0.0
    %2525 = vmatpush2.msra.mxu0 0.0
    %2526 = vmatprep.subr.mxu0 0.0
    %2527 = vmatpush2.msra.mxu0 0.0
    %2528 = vmatprep.subr.mxu0 0.0
    %2529 = vmatpush2.msra.mxu0 0.0
    %2530 = vmatprep.subr.mxu0 0.0
    %2531 = vmatpush2.msra.mxu0 0.0
    %2532 = vmatprep.subr.mxu0 0.0
    %2533 = vmatpush2.msra.mxu0 0.0
    %2534 = vmatprep.subr.mxu0 0.0
    %2535 = vmatpush2.msra.mxu0 0.0
    %2536 = vmatprep.subr.mxu0 0.0
    %2537 = vmatpush2.msra.mxu0 0.0
    %2538 = vmatprep.mubr.f32.mxu0 0.0
    %2539 = vmatmul.mubr.f32.gmra.mxu0 %v2469
    %v2540 = vpop.f32.mrf.mxu0
    %v2541 = vadd.f32 %v2466, %v2540
    %v2542 = vpop.f32.mrf.mxu0
    %2543 = vmatprep.mubr.f32.mxu0 0.0
    %2544 = vmatmul.mubr.f32.gmra.mxu0 %v2472
    %v2545 = vpop.f32.mrf.mxu0
    %v2546 = vadd.f32 %v2466, %v2545
    %v2547 = vpop.f32.mrf.mxu0
    %2548 = vdwg.mxu0
    %2549 = vst [vmem:[#allocation14] sm:$0xff] %v2541
    %2550 = vst [vmem:[#allocation14 + $0x8] sm:$0xff] %v2546
    // Predicated region
    $region62: #{tpu_custom_call.1} parent=1 // pred_check
      _
    $region63: #{tpu_custom_call.1} parent=1 // pred_check_branch
      %2552 = sbr.rel (0) target = $region65
    $region64: #{tpu_custom_call.1} parent=1 // pred_region
      %s2554 = ssub.s32 256, 256
      %2555 = vsyncadd [#allocation5], %s2554
      %s2556 = sshll.u32 [#allocation14], 4
      %s2557 = int_to_ptr.vmem [resolvable:$true] %s2556
      %2562 = dma.vmem_to_hbm [thread:$0]  %s2557, 256, %s9, [#allocation5], 128, 128, 8
    $region65: #{tpu_custom_call.1} parent=1 // pred_fallthru
      _
    // Predicated region
    $region66: #{tpu_custom_call.1} parent=1 // pred_check
      _
    $region67: #{tpu_custom_call.1} parent=1 // pred_check_branch
      %2564 = sbr.rel (0) target = $region69
    $region68: #{tpu_custom_call.1} parent=1 // pred_region
      %2565 = dma.done [#allocation5], 256
    $region69: #{tpu_custom_call.1} parent=1 // pred_fallthru
      _
    %2566 = vsyncpa [#allocation4], 1
    %2567 = vsyncpa [#allocation7], 1
    %2568 = vsyncpa [#allocation10], 1
    %2569 = vsyncpa [#allocation13], 1
    %2570 = vsyncpa [#allocation5], 1

</llo_original>
